<compile_context>
chip_gen: v6e
topology: v6e:2x2x1
jax: 0.10.0
libtpu: 0.0.40
codegen_flags: <defaults>
</compile_context>

<pallas_src>
import functools

import jax
import jax.numpy as jnp
from jax.experimental import pallas as pl
from jax.experimental.pallas import tpu as pltpu

KSIZE = 4                     # all convs in the Discriminator are 4x4
VMEM_LIMIT = 32 * 1024 * 1024  # scoped-VMEM cap, safe on v5e/v6e/v7x


def _round_up(x, m):
    return (x + m - 1) // m * m


# ----------------------------------------------------------------------------
# Pallas kernels
# ----------------------------------------------------------------------------
def _matmul_bias_act_kernel(x_ref, w_ref, b_ref, o_ref, acc_ref, *,
                            negative_slope):
    """Tiled o = act(x @ w + b) with K-axis accumulation in VMEM scratch."""
    k = pl.program_id(2)

    @pl.when(k == 0)
    def _():
        acc_ref[...] = jnp.zeros_like(acc_ref)

    acc_ref[...] += jnp.dot(x_ref[...], w_ref[...],
                            preferred_element_type=jnp.float32)

    @pl.when(k == pl.num_programs(2) - 1)
    def _():
        acc = acc_ref[...] + b_ref[...]          # (1, TN) broadcasts over TM
        if negative_slope is not None:
            acc = jnp.where(acc >= 0, acc, negative_slope * acc)
        o_ref[...] = acc.astype(o_ref.dtype)


def _inorm_lrelu_kernel(x_ref, o_ref, *, eps, negative_slope):
    """Per-(image, channel) instance norm over spatial axis + LeakyReLU.

    Block layout: (1, HW, TC) — reduction over the (sublane) spatial axis,
    channels on lanes (lane-dense since TC is a multiple of 128).
    """
    x = x_ref[...].astype(jnp.float32)                       # (1, HW, TC)
    mean = jnp.mean(x, axis=1, keepdims=True)
    var = jnp.mean(jnp.square(x - mean), axis=1, keepdims=True)
    y = (x - mean) * jax.lax.rsqrt(var + eps)
    y = jnp.where(y >= 0, y, negative_slope * y)
    o_ref[...] = y.astype(o_ref.dtype)


# ----------------------------------------------------------------------------
# Pallas wrappers
# ----------------------------------------------------------------------------
def _matmul_bias_act(x2d, w2d, b, negative_slope):
    """x2d (M, K) @ w2d (K, Nc) + b, optional LeakyReLU.  Tiled for the MXU."""
    M, K = x2d.shape
    Kw, Nc = w2d.shape
    assert K == Kw

    TM = min(512, _round_up(M, 8))       # sublane-aligned M tile
    TK = min(512, _round_up(K, 128))     # lane-aligned K tile
    TN = min(256, _round_up(Nc, 128))    # lane-dense output tile
    Mp, Kp, Np = _round_up(M, TM), _round_up(K, TK), _round_up(Nc, TN)

    if (Mp, Kp) != (M, K):
        x2d = jnp.pad(x2d, ((0, Mp - M), (0, Kp - K)))
    if (Kp, Np) != (K, Nc):
        w2d = jnp.pad(w2d, ((0, Kp - K), (0, Np - Nc)))
    b2d = (jnp.pad(b, (0, Np - Nc)) if Np != Nc else b).reshape(1, Np)

    grid = (Mp // TM, Np // TN, Kp // TK)
    kern = functools.partial(_matmul_bias_act_kernel,
                             negative_slope=negative_slope)
    out = pl.pallas_call(
        kern,
        out_shape=jax.ShapeDtypeStruct((Mp, Np), jnp.float32),
        grid=grid,
        in_specs=[
            pl.BlockSpec((TM, TK), lambda i, j, k: (i, k)),
            pl.BlockSpec((TK, TN), lambda i, j, k: (k, j)),
            pl.BlockSpec((1, TN), lambda i, j, k: (0, j)),
        ],
        out_specs=pl.BlockSpec((TM, TN), lambda i, j, k: (i, j)),
        scratch_shapes=[pltpu.VMEM((TM, TN), jnp.float32)],
        compiler_params=pltpu.CompilerParams(
            dimension_semantics=("parallel", "parallel", "arbitrary"),
            vmem_limit_bytes=VMEM_LIMIT),
        cost_estimate=pl.CostEstimate(
            flops=2 * Mp * Kp * Np,
            transcendentals=0,
            bytes_accessed=4 * (Mp * Kp + Kp * Np + Mp * Np + Np)),
    )(x2d, w2d, b2d)

    if (Mp, Np) != (M, Nc):
        out = out[:M, :Nc]
    return out


def _instance_norm_lrelu_nhwc(x_nhwc, eps=1e-5, negative_slope=0.2):
    """InstanceNorm2d(affine=False) + LeakyReLU(0.2) on NHWC activations."""
    N, H, W, C = x_nhwc.shape
    HW = H * W
    Cp = _round_up(C, 128)
    TC = 128
    x = x_nhwc.reshape(N, HW, C)
    if Cp != C:
        x = jnp.pad(x, ((0, 0), (0, 0), (0, Cp - C)))

    kern = functools.partial(_inorm_lrelu_kernel, eps=eps,
                             negative_slope=negative_slope)
    y = pl.pallas_call(
        kern,
        out_shape=jax.ShapeDtypeStruct((N, HW, Cp), jnp.float32),
        grid=(N, Cp // TC),
        in_specs=[pl.BlockSpec((1, HW, TC), lambda n, c: (n, 0, c))],
        out_specs=pl.BlockSpec((1, HW, TC), lambda n, c: (n, 0, c)),
        compiler_params=pltpu.CompilerParams(
            dimension_semantics=("parallel", "parallel"),
            vmem_limit_bytes=VMEM_LIMIT),
        cost_estimate=pl.CostEstimate(
            flops=10 * N * HW * Cp,
            transcendentals=N * Cp,
            bytes_accessed=8 * N * HW * Cp),
    )(x)
    if Cp != C:
        y = y[:, :, :C]
    return y.reshape(N, H, W, C)


# ----------------------------------------------------------------------------
# Conv2d via im2col (NHWC) + Pallas GEMM
# ----------------------------------------------------------------------------
def _im2col_nhwc(x_nhwc, k, stride, pad):
    """Returns (patches (N*Ho*Wo, k*k*Cin), Ho, Wo); K order = (kh, kw, cin)."""
    N, H, W, C = x_nhwc.shape
    xp = jnp.pad(x_nhwc, ((0, 0), (pad, pad), (pad, pad), (0, 0)))
    Ho = (H + 2 * pad - k) // stride + 1
    Wo = (W + 2 * pad - k) // stride + 1
    cols = []
    for i in range(k):
        for j in range(k):
            cols.append(xp[:, i:i + stride * Ho:stride,
                           j:j + stride * Wo:stride, :])       # (N, Ho, Wo, C)
    p = jnp.concatenate(cols, axis=-1)                         # (N, Ho, Wo, k*k*C)
    return p.reshape(N * Ho * Wo, k * k * C), Ho, Wo


def _conv2d_nhwc(x_nhwc, w2d, b, stride, pad, negative_slope=None):
    """w2d: pre-packed (kh*kw*Cin, Cout); NHWC in, NHWC out."""
    N = x_nhwc.shape[0]
    Cout = w2d.shape[1]
    patches, Ho, Wo = _im2col_nhwc(x_nhwc, KSIZE, stride, pad)
    y2d = _matmul_bias_act(patches, w2d, b, negative_slope)    # (N*Ho*Wo, Cout)
    return y2d.reshape(N, Ho, Wo, Cout)


# ----------------------------------------------------------------------------
# Discriminator: parameters + forward
# ----------------------------------------------------------------------------
def init_discriminator_params(key, input_nc, output_nc, ndf):
    """Deterministic synthetic init. Conv weights in PyTorch (Cout,Cin,4,4)."""
    chans = [
        (input_nc, ndf),
        (ndf, ndf * 2),
        (ndf * 2, ndf * 4),
        (ndf * 4, ndf * 8),
        (ndf * 8, output_nc),
    ]
    params = []
    for cin, cout in chans:
        key, kw, kb = jax.random.split(key, 3)
        fan_in = cin * KSIZE * KSIZE
        scale = 1.0 / jnp.sqrt(jnp.float32(fan_in))
        w = jax.random.uniform(kw, (cout, cin, KSIZE, KSIZE), jnp.float32,
                               -scale, scale)
        b = jax.random.uniform(kb, (cout,), jnp.float32, -scale, scale)
        params.append((w, b))
    return params


def pack_params(params):
    """One-time weight packing: (Cout,Cin,kh,kw) -> (kh*kw*Cin, Cout)."""
    packed = []
    for w, b in params:
        cout, cin, kh, kw = w.shape
        w2d = jnp.transpose(w, (2, 3, 1, 0)).reshape(kh * kw * cin, cout)
        packed.append((w2d, b))
    return packed


def discriminator_forward(x_nchw, packed_params):
    (w1, b1), (w2, b2), (w3, b3), (w4, b4), (w5, b5) = packed_params
    h = jnp.transpose(x_nchw, (0, 2, 3, 1))            # NCHW -> NHWC (entry only)
    # Conv(4,2,1) + LeakyReLU(0.2)  (fused in GEMM epilogue)
    h = _conv2d_nhwc(h, w1, b1, stride=2, pad=1, negative_slope=0.2)
    # Conv(4,2,1) + InstanceNorm + LeakyReLU(0.2)
    h = _conv2d_nhwc(h, w2, b2, stride=2, pad=1)
    h = _instance_norm_lrelu_nhwc(h)
    # Conv(4,2,1) + InstanceNorm + LeakyReLU(0.2)
    h = _conv2d_nhwc(h, w3, b3, stride=2, pad=1)
    h = _instance_norm_lrelu_nhwc(h)
    # Conv(4,1,1) + InstanceNorm + LeakyReLU(0.2)
    h = _conv2d_nhwc(h, w4, b4, stride=1, pad=1)
    h = _instance_norm_lrelu_nhwc(h)
    # Conv(4,1,1)  (no activation)
    out = _conv2d_nhwc(h, w5, b5, stride=1, pad=1)
    return jnp.transpose(out, (0, 3, 1, 2))            # NHWC -> NCHW (exit only)


# ----------------------------------------------------------------------------
# Pure-JAX reference (for correctness check)
# ----------------------------------------------------------------------------
def _reference_forward(x_nchw, params):
    def conv(x, w, b, stride, pad):
        y = jax.lax.conv_general_dilated(
            x, w, (stride, stride), ((pad, pad), (pad, pad)),
            dimension_numbers=("NCHW", "OIHW", "NCHW"),
            precision=jax.lax.Precision.HIGHEST)
        return y + b[None, :, None, None]

    def lrelu(x):
        return jnp.where(x >= 0, x, 0.2 * x)

    def inorm(x):
        m = jnp.mean(x, axis=(2, 3), keepdims=True)
        v = jnp.mean(jnp.square(x - m), axis=(2, 3), keepdims=True)
        return (x - m) * jax.lax.rsqrt(v + 1e-5)

    (w1, b1), (w2, b2), (w3, b3), (w4, b4), (w5, b5) = params
    h = lrelu(conv(x_nchw, w1, b1, 2, 1))
    h = lrelu(inorm(conv(h, w2, b2, 2, 1)))
    h = lrelu(inorm(conv(h, w3, b3, 2, 1)))
    h = lrelu(inorm(conv(h, w4, b4, 1, 1)))
    return conv(h, w5, b5, 1, 1)


if __name__ == "__main__":
    # Small shapes consistent with the module: batch=2, input_nc=3, ndf=8,
    # output_nc=1, spatial=32 (so every 4x4 conv has a valid output).
    batch, input_nc, output_nc, ndf, spatial = 2, 3, 1, 8, 32

    key = jax.random.PRNGKey(0)
    kx, kp = jax.random.split(key)
    x = jax.random.normal(kx, (batch, input_nc, spatial, spatial), jnp.float32)
    params = init_discriminator_params(kp, input_nc, output_nc, ndf)
    packed = pack_params(params)     # one-time weight pack (not per-forward)

    fwd = jax.jit(discriminator_forward)
    y = fwd(x, packed)
    jax.block_until_ready(y)

    # Expected output: (2, 1, 2, 2) — PatchGAN logits.
    assert y.shape == (batch, output_nc, 2, 2), y.shape
    assert bool(jnp.all(jnp.isfinite(y)))

    y_ref = jax.jit(_reference_forward)(x, params)
    jax.block_until_ready(y_ref)
    assert bool(jnp.allclose(y, y_ref, rtol=5e-2, atol=5e-2)), float(
        jnp.max(jnp.abs(y - y_ref)))

    print("KERNEL_OK")
</pallas_src>

<mosaic_0001>
module attributes {stable_mosaic.version = 11 : i64} {
  func.func @_matmul_bias_act_kernel(%arg0: i32, %arg1: i32, %arg2: i32, %arg3: memref<512x128xf32, #tpu.memory_space<vmem>>, %arg4: memref<128x128xf32, #tpu.memory_space<vmem>>, %arg5: memref<1x128xf32, #tpu.memory_space<vmem>>, %arg6: memref<512x128xf32, #tpu.memory_space<vmem>>, %arg7: memref<512x128xf32, #tpu.memory_space<vmem>>) attributes {dimension_semantics = [#tpu.dimension_semantics<parallel>, #tpu.dimension_semantics<parallel>, #tpu.dimension_semantics<arbitrary>], iteration_bounds = array<i64: 1, 1, 1>, scalar_prefetch = 0 : i64, scratch_operands = 1 : i64, tpu.core_type = #tpu.core_type<tc>, window_params = [{transform_indices = @transform_0, window_bounds = array<i64: 512, 128>}, {transform_indices = @transform_1, window_bounds = array<i64: 128, 128>}, {transform_indices = @transform_2, window_bounds = array<i64: 1, 128>}, {transform_indices = @transform_3, window_bounds = array<i64: 512, 128>}]} {
    %c0_i32 = arith.constant 0 : i32
    %0 = arith.cmpi eq, %arg2, %c0_i32 : i32
    %1 = arith.extui %0 : i1 to i32
    %c0_i32_0 = arith.constant 0 : i32
    %2 = arith.cmpi ne, %1, %c0_i32_0 : i32
    scf.if %2 {
      %cst_10 = arith.constant 0.000000e+00 : f32
      %12 = vector.broadcast %cst_10 : f32 to vector<512x128xf32>
      %c0_11 = arith.constant 0 : index
      %c0_12 = arith.constant 0 : index
      %13 = vector.load %arg7[%c0_11, %c0_12] : memref<512x128xf32, #tpu.memory_space<vmem>>, vector<512x128xf32>
      tpu.vector_store %arg7[%c0_11, %c0_12], %12 {strides = array<i32>} : memref<512x128xf32, #tpu.memory_space<vmem>>, vector<512x128xf32>,
    } else {
    }
    %c0 = arith.constant 0 : index
    %c0_1 = arith.constant 0 : index
    %3 = vector.load %arg7[%c0, %c0_1] : memref<512x128xf32, #tpu.memory_space<vmem>>, vector<512x128xf32>
    %c0_2 = arith.constant 0 : index
    %c0_3 = arith.constant 0 : index
    %4 = vector.load %arg3[%c0_2, %c0_3] : memref<512x128xf32, #tpu.memory_space<vmem>>, vector<512x128xf32>
    %c0_4 = arith.constant 0 : index
    %c0_5 = arith.constant 0 : index
    %5 = vector.load %arg4[%c0_4, %c0_5] : memref<128x128xf32, #tpu.memory_space<vmem>>, vector<128x128xf32>
    %cst = arith.constant dense<0.000000e+00> : vector<512x128xf32>
    %6 = tpu.matmul %4, %5, %cst {dimension_numbers = #tpu.dot_dimension_numbers<[1], [0], [0], [1], [0, 0, 1, 1], [], []>} : vector<512x128xf32>, vector<128x128xf32>, vector<512x128xf32> -> vector<512x128xf32>
    %7 = arith.addf %3, %6 : vector<512x128xf32>
    %c0_6 = arith.constant 0 : index
    %c0_7 = arith.constant 0 : index
    %8 = vector.load %arg7[%c0_6, %c0_7] : memref<512x128xf32, #tpu.memory_space<vmem>>, vector<512x128xf32>
    tpu.vector_store %arg7[%c0_6, %c0_7], %7 {strides = array<i32>} : memref<512x128xf32, #tpu.memory_space<vmem>>, vector<512x128xf32>,
    %c0_i32_8 = arith.constant 0 : i32
    %9 = arith.cmpi eq, %arg2, %c0_i32_8 : i32
    %10 = arith.extui %9 : i1 to i32
    %c0_i32_9 = arith.constant 0 : i32
    %11 = arith.cmpi ne, %10, %c0_i32_9 : i32
    scf.if %11 {
      %c0_10 = arith.constant 0 : index
      %c0_11 = arith.constant 0 : index
      %12 = vector.load %arg7[%c0_10, %c0_11] : memref<512x128xf32, #tpu.memory_space<vmem>>, vector<512x128xf32>
      %c0_12 = arith.constant 0 : index
      %c0_13 = arith.constant 0 : index
      %13 = vector.load %arg5[%c0_12, %c0_13] : memref<1x128xf32, #tpu.memory_space<vmem>>, vector<1x128xf32>
      %14 = vector.broadcast %13 : vector<1x128xf32> to vector<512x128xf32>
      %15 = arith.addf %12, %14 : vector<512x128xf32>
      %cst_14 = arith.constant 0.000000e+00 : f32
      %16 = vector.broadcast %cst_14 : f32 to vector<512x128xf32>
      %17 = arith.cmpf oge, %15, %16 : vector<512x128xf32>
      %cst_15 = arith.constant 2.000000e-01 : f32
      %18 = vector.broadcast %cst_15 : f32 to vector<512x128xf32>
      %19 = arith.mulf %18, %15 : vector<512x128xf32>
      %20 = arith.select %17, %15, %19 : vector<512x128xi1>, vector<512x128xf32>
      %c0_16 = arith.constant 0 : index
      %c0_17 = arith.constant 0 : index
      %21 = vector.load %arg6[%c0_16, %c0_17] : memref<512x128xf32, #tpu.memory_space<vmem>>, vector<512x128xf32>
      tpu.vector_store %arg6[%c0_16, %c0_17], %20 {strides = array<i32>} : memref<512x128xf32, #tpu.memory_space<vmem>>, vector<512x128xf32>,
    } else {
    }
    return
  }
  func.func @transform_0(%arg0: i32, %arg1: i32, %arg2: i32) -> (i32, i32) {
    %c0_i32 = arith.constant 0 : i32
    return %arg0, %arg2 : i32, i32
  }
  func.func @transform_1(%arg0: i32, %arg1: i32, %arg2: i32) -> (i32, i32) {
    %c0_i32 = arith.constant 0 : i32
    return %arg2, %arg1 : i32, i32
  }
  func.func @transform_2(%arg0: i32, %arg1: i32, %arg2: i32) -> (i32, i32) {
    %c0_i32 = arith.constant 0 : i32
    %c0_i32_0 = arith.constant 0 : i32
    return %c0_i32, %arg1 : i32, i32
  }
  func.func @transform_3(%arg0: i32, %arg1: i32, %arg2: i32) -> (i32, i32) {
    %c0_i32 = arith.constant 0 : i32
    return %arg0, %arg1 : i32, i32
  }
}

module attributes {stable_mosaic.version = 11 : i64} {
  func.func @_matmul_bias_act_kernel(%arg0: i32, %arg1: i32, %arg2: i32, %arg3: memref<128x128xf32, #tpu.memory_space<vmem>>, %arg4: memref<128x128xf32, #tpu.memory_space<vmem>>, %arg5: memref<1x128xf32, #tpu.memory_space<vmem>>, %arg6: memref<128x128xf32, #tpu.memory_space<vmem>>, %arg7: memref<128x128xf32, #tpu.memory_space<vmem>>) attributes {dimension_semantics = [#tpu.dimension_semantics<parallel>, #tpu.dimension_semantics<parallel>, #tpu.dimension_semantics<arbitrary>], iteration_bounds = array<i64: 1, 1, 1>, scalar_prefetch = 0 : i64, scratch_operands = 1 : i64, tpu.core_type = #tpu.core_type<tc>, window_params = [{transform_indices = @transform_0, window_bounds = array<i64: 128, 128>}, {transform_indices = @transform_1, window_bounds = array<i64: 128, 128>}, {transform_indices = @transform_2, window_bounds = array<i64: 1, 128>}, {transform_indices = @transform_3, window_bounds = array<i64: 128, 128>}]} {
    %c0_i32 = arith.constant 0 : i32
    %0 = arith.cmpi eq, %arg2, %c0_i32 : i32
    %1 = arith.extui %0 : i1 to i32
    %c0_i32_0 = arith.constant 0 : i32
    %2 = arith.cmpi ne, %1, %c0_i32_0 : i32
    scf.if %2 {
      %cst_10 = arith.constant 0.000000e+00 : f32
      %12 = vector.broadcast %cst_10 : f32 to vector<128x128xf32>
      %c0_11 = arith.constant 0 : index
      %c0_12 = arith.constant 0 : index
      %13 = vector.load %arg7[%c0_11, %c0_12] : memref<128x128xf32, #tpu.memory_space<vmem>>, vector<128x128xf32>
      tpu.vector_store %arg7[%c0_11, %c0_12], %12 {strides = array<i32>} : memref<128x128xf32, #tpu.memory_space<vmem>>, vector<128x128xf32>,
    } else {
    }
    %c0 = arith.constant 0 : index
    %c0_1 = arith.constant 0 : index
    %3 = vector.load %arg7[%c0, %c0_1] : memref<128x128xf32, #tpu.memory_space<vmem>>, vector<128x128xf32>
    %c0_2 = arith.constant 0 : index
    %c0_3 = arith.constant 0 : index
    %4 = vector.load %arg3[%c0_2, %c0_3] : memref<128x128xf32, #tpu.memory_space<vmem>>, vector<128x128xf32>
    %c0_4 = arith.constant 0 : index
    %c0_5 = arith.constant 0 : index
    %5 = vector.load %arg4[%c0_4, %c0_5] : memref<128x128xf32, #tpu.memory_space<vmem>>, vector<128x128xf32>
    %cst = arith.constant dense<0.000000e+00> : vector<128x128xf32>
    %6 = tpu.matmul %4, %5, %cst {dimension_numbers = #tpu.dot_dimension_numbers<[1], [0], [0], [1], [0, 0, 1, 1], [], []>} : vector<128x128xf32>, vector<128x128xf32>, vector<128x128xf32> -> vector<128x128xf32>
    %7 = arith.addf %3, %6 : vector<128x128xf32>
    %c0_6 = arith.constant 0 : index
    %c0_7 = arith.constant 0 : index
    %8 = vector.load %arg7[%c0_6, %c0_7] : memref<128x128xf32, #tpu.memory_space<vmem>>, vector<128x128xf32>
    tpu.vector_store %arg7[%c0_6, %c0_7], %7 {strides = array<i32>} : memref<128x128xf32, #tpu.memory_space<vmem>>, vector<128x128xf32>,
    %c0_i32_8 = arith.constant 0 : i32
    %9 = arith.cmpi eq, %arg2, %c0_i32_8 : i32
    %10 = arith.extui %9 : i1 to i32
    %c0_i32_9 = arith.constant 0 : i32
    %11 = arith.cmpi ne, %10, %c0_i32_9 : i32
    scf.if %11 {
      %c0_10 = arith.constant 0 : index
      %c0_11 = arith.constant 0 : index
      %12 = vector.load %arg7[%c0_10, %c0_11] : memref<128x128xf32, #tpu.memory_space<vmem>>, vector<128x128xf32>
      %c0_12 = arith.constant 0 : index
      %c0_13 = arith.constant 0 : index
      %13 = vector.load %arg5[%c0_12, %c0_13] : memref<1x128xf32, #tpu.memory_space<vmem>>, vector<1x128xf32>
      %14 = vector.broadcast %13 : vector<1x128xf32> to vector<128x128xf32>
      %15 = arith.addf %12, %14 : vector<128x128xf32>
      %c0_14 = arith.constant 0 : index
      %c0_15 = arith.constant 0 : index
      %16 = vector.load %arg6[%c0_14, %c0_15] : memref<128x128xf32, #tpu.memory_space<vmem>>, vector<128x128xf32>
      tpu.vector_store %arg6[%c0_14, %c0_15], %15 {strides = array<i32>} : memref<128x128xf32, #tpu.memory_space<vmem>>, vector<128x128xf32>,
    } else {
    }
    return
  }
  func.func @transform_0(%arg0: i32, %arg1: i32, %arg2: i32) -> (i32, i32) {
    %c0_i32 = arith.constant 0 : i32
    return %arg0, %arg2 : i32, i32
  }
  func.func @transform_1(%arg0: i32, %arg1: i32, %arg2: i32) -> (i32, i32) {
    %c0_i32 = arith.constant 0 : i32
    return %arg2, %arg1 : i32, i32
  }
  func.func @transform_2(%arg0: i32, %arg1: i32, %arg2: i32) -> (i32, i32) {
    %c0_i32 = arith.constant 0 : i32
    %c0_i32_0 = arith.constant 0 : i32
    return %c0_i32, %arg1 : i32, i32
  }
  func.func @transform_3(%arg0: i32, %arg1: i32, %arg2: i32) -> (i32, i32) {
    %c0_i32 = arith.constant 0 : i32
    return %arg0, %arg1 : i32, i32
  }
}

module attributes {stable_mosaic.version = 11 : i64} {
  func.func @_inorm_lrelu_kernel(%arg0: i32, %arg1: i32, %arg2: memref<1x64x128xf32, #tpu.memory_space<vmem>>, %arg3: memref<1x64x128xf32, #tpu.memory_space<vmem>>) attributes {dimension_semantics = [#tpu.dimension_semantics<parallel>, #tpu.dimension_semantics<parallel>], iteration_bounds = array<i64: 2, 1>, scalar_prefetch = 0 : i64, scratch_operands = 0 : i64, tpu.core_type = #tpu.core_type<tc>, window_params = [{transform_indices = @transform_0, window_bounds = array<i64: 1, 64, 128>}, {transform_indices = @transform_1, window_bounds = array<i64: 1, 64, 128>}]} {
    %c0 = arith.constant 0 : index
    %c0_0 = arith.constant 0 : index
    %c0_1 = arith.constant 0 : index
    %0 = vector.load %arg2[%c0, %c0_0, %c0_1] : memref<1x64x128xf32, #tpu.memory_space<vmem>>, vector<1x64x128xf32>
    %cst = arith.constant dense<0.000000e+00> : vector<1x128xf32>
    %1 = vector.multi_reduction <add>, %0, %cst [1] : vector<1x64x128xf32> to vector<1x128xf32>
    %2 = vector.shape_cast %1 : vector<1x128xf32> to vector<1x1x128xf32>
    %cst_2 = arith.constant 6.400000e+01 : f32
    %3 = vector.broadcast %cst_2 : f32 to vector<1x1x128xf32>
    %4 = arith.divf %2, %3 : vector<1x1x128xf32>
    %5 = vector.broadcast %4 : vector<1x1x128xf32> to vector<1x64x128xf32>
    %6 = arith.subf %0, %5 : vector<1x64x128xf32>
    %7 = arith.mulf %6, %6 : vector<1x64x128xf32>
    %cst_3 = arith.constant dense<0.000000e+00> : vector<1x128xf32>
    %8 = vector.multi_reduction <add>, %7, %cst_3 [1] : vector<1x64x128xf32> to vector<1x128xf32>
    %9 = vector.shape_cast %8 : vector<1x128xf32> to vector<1x1x128xf32>
    %cst_4 = arith.constant 6.400000e+01 : f32
    %10 = vector.broadcast %cst_4 : f32 to vector<1x1x128xf32>
    %11 = arith.divf %9, %10 : vector<1x1x128xf32>
    %12 = vector.broadcast %4 : vector<1x1x128xf32> to vector<1x64x128xf32>
    %13 = arith.subf %0, %12 : vector<1x64x128xf32>
    %cst_5 = arith.constant 9.99999974E-6 : f32
    %14 = vector.broadcast %cst_5 : f32 to vector<1x1x128xf32>
    %15 = arith.addf %11, %14 : vector<1x1x128xf32>
    %16 = math.rsqrt %15 : vector<1x1x128xf32>
    %17 = vector.broadcast %16 : vector<1x1x128xf32> to vector<1x64x128xf32>
    %18 = arith.mulf %13, %17 : vector<1x64x128xf32>
    %cst_6 = arith.constant 0.000000e+00 : f32
    %19 = vector.broadcast %cst_6 : f32 to vector<1x64x128xf32>
    %20 = arith.cmpf oge, %18, %19 : vector<1x64x128xf32>
    %cst_7 = arith.constant 2.000000e-01 : f32
    %21 = vector.broadcast %cst_7 : f32 to vector<1x64x128xf32>
    %22 = arith.mulf %21, %18 : vector<1x64x128xf32>
    %23 = arith.select %20, %18, %22 : vector<1x64x128xi1>, vector<1x64x128xf32>
    %c0_8 = arith.constant 0 : index
    %c0_9 = arith.constant 0 : index
    %c0_10 = arith.constant 0 : index
    %24 = vector.load %arg3[%c0_8, %c0_9, %c0_10] : memref<1x64x128xf32, #tpu.memory_space<vmem>>, vector<1x64x128xf32>
    tpu.vector_store %arg3[%c0_8, %c0_9, %c0_10], %23 {strides = array<i32>} : memref<1x64x128xf32, #tpu.memory_space<vmem>>, vector<1x64x128xf32>,
    return
  }
  func.func @transform_0(%arg0: i32, %arg1: i32) -> (i32, i32, i32) {
    %c0_i32 = arith.constant 0 : i32
    %c0_i32_0 = arith.constant 0 : i32
    return %arg0, %c0_i32, %arg1 : i32, i32, i32
  }
  func.func @transform_1(%arg0: i32, %arg1: i32) -> (i32, i32, i32) {
    %c0_i32 = arith.constant 0 : i32
    %c0_i32_0 = arith.constant 0 : i32
    return %arg0, %c0_i32, %arg1 : i32, i32, i32
  }
}

module attributes {stable_mosaic.version = 11 : i64} {
  func.func @_matmul_bias_act_kernel(%arg0: i32, %arg1: i32, %arg2: i32, %arg3: memref<32x256xf32, #tpu.memory_space<vmem>>, %arg4: memref<256x128xf32, #tpu.memory_space<vmem>>, %arg5: memref<1x128xf32, #tpu.memory_space<vmem>>, %arg6: memref<32x128xf32, #tpu.memory_space<vmem>>, %arg7: memref<32x128xf32, #tpu.memory_space<vmem>>) attributes {dimension_semantics = [#tpu.dimension_semantics<parallel>, #tpu.dimension_semantics<parallel>, #tpu.dimension_semantics<arbitrary>], iteration_bounds = array<i64: 1, 1, 1>, scalar_prefetch = 0 : i64, scratch_operands = 1 : i64, tpu.core_type = #tpu.core_type<tc>, window_params = [{transform_indices = @transform_0, window_bounds = array<i64: 32, 256>}, {transform_indices = @transform_1, window_bounds = array<i64: 256, 128>}, {transform_indices = @transform_2, window_bounds = array<i64: 1, 128>}, {transform_indices = @transform_3, window_bounds = array<i64: 32, 128>}]} {
    %c0_i32 = arith.constant 0 : i32
    %0 = arith.cmpi eq, %arg2, %c0_i32 : i32
    %1 = arith.extui %0 : i1 to i32
    %c0_i32_0 = arith.constant 0 : i32
    %2 = arith.cmpi ne, %1, %c0_i32_0 : i32
    scf.if %2 {
      %cst_10 = arith.constant 0.000000e+00 : f32
      %12 = vector.broadcast %cst_10 : f32 to vector<32x128xf32>
      %c0_11 = arith.constant 0 : index
      %c0_12 = arith.constant 0 : index
      %13 = vector.load %arg7[%c0_11, %c0_12] : memref<32x128xf32, #tpu.memory_space<vmem>>, vector<32x128xf32>
      tpu.vector_store %arg7[%c0_11, %c0_12], %12 {strides = array<i32>} : memref<32x128xf32, #tpu.memory_space<vmem>>, vector<32x128xf32>,
    } else {
    }
    %c0 = arith.constant 0 : index
    %c0_1 = arith.constant 0 : index
    %3 = vector.load %arg7[%c0, %c0_1] : memref<32x128xf32, #tpu.memory_space<vmem>>, vector<32x128xf32>
    %c0_2 = arith.constant 0 : index
    %c0_3 = arith.constant 0 : index
    %4 = vector.load %arg3[%c0_2, %c0_3] : memref<32x256xf32, #tpu.memory_space<vmem>>, vector<32x256xf32>
    %c0_4 = arith.constant 0 : index
    %c0_5 = arith.constant 0 : index
    %5 = vector.load %arg4[%c0_4, %c0_5] : memref<256x128xf32, #tpu.memory_space<vmem>>, vector<256x128xf32>
    %cst = arith.constant dense<0.000000e+00> : vector<32x128xf32>
    %6 = tpu.matmul %4, %5, %cst {dimension_numbers = #tpu.dot_dimension_numbers<[1], [0], [0], [1], [0, 0, 1, 1], [], []>} : vector<32x256xf32>, vector<256x128xf32>, vector<32x128xf32> -> vector<32x128xf32>
    %7 = arith.addf %3, %6 : vector<32x128xf32>
    %c0_6 = arith.constant 0 : index
    %c0_7 = arith.constant 0 : index
    %8 = vector.load %arg7[%c0_6, %c0_7] : memref<32x128xf32, #tpu.memory_space<vmem>>, vector<32x128xf32>
    tpu.vector_store %arg7[%c0_6, %c0_7], %7 {strides = array<i32>} : memref<32x128xf32, #tpu.memory_space<vmem>>, vector<32x128xf32>,
    %c0_i32_8 = arith.constant 0 : i32
    %9 = arith.cmpi eq, %arg2, %c0_i32_8 : i32
    %10 = arith.extui %9 : i1 to i32
    %c0_i32_9 = arith.constant 0 : i32
    %11 = arith.cmpi ne, %10, %c0_i32_9 : i32
    scf.if %11 {
      %c0_10 = arith.constant 0 : index
      %c0_11 = arith.constant 0 : index
      %12 = vector.load %arg7[%c0_10, %c0_11] : memref<32x128xf32, #tpu.memory_space<vmem>>, vector<32x128xf32>
      %c0_12 = arith.constant 0 : index
      %c0_13 = arith.constant 0 : index
      %13 = vector.load %arg5[%c0_12, %c0_13] : memref<1x128xf32, #tpu.memory_space<vmem>>, vector<1x128xf32>
      %14 = vector.broadcast %13 : vector<1x128xf32> to vector<32x128xf32>
      %15 = arith.addf %12, %14 : vector<32x128xf32>
      %c0_14 = arith.constant 0 : index
      %c0_15 = arith.constant 0 : index
      %16 = vector.load %arg6[%c0_14, %c0_15] : memref<32x128xf32, #tpu.memory_space<vmem>>, vector<32x128xf32>
      tpu.vector_store %arg6[%c0_14, %c0_15], %15 {strides = array<i32>} : memref<32x128xf32, #tpu.memory_space<vmem>>, vector<32x128xf32>,
    } else {
    }
    return
  }
  func.func @transform_0(%arg0: i32, %arg1: i32, %arg2: i32) -> (i32, i32) {
    %c0_i32 = arith.constant 0 : i32
    return %arg0, %arg2 : i32, i32
  }
  func.func @transform_1(%arg0: i32, %arg1: i32, %arg2: i32) -> (i32, i32) {
    %c0_i32 = arith.constant 0 : i32
    return %arg2, %arg1 : i32, i32
  }
  func.func @transform_2(%arg0: i32, %arg1: i32, %arg2: i32) -> (i32, i32) {
    %c0_i32 = arith.constant 0 : i32
    %c0_i32_0 = arith.constant 0 : i32
    return %c0_i32, %arg1 : i32, i32
  }
  func.func @transform_3(%arg0: i32, %arg1: i32, %arg2: i32) -> (i32, i32) {
    %c0_i32 = arith.constant 0 : i32
    return %arg0, %arg1 : i32, i32
  }
}

module attributes {stable_mosaic.version = 11 : i64} {
  func.func @_inorm_lrelu_kernel(%arg0: i32, %arg1: i32, %arg2: memref<1x16x128xf32, #tpu.memory_space<vmem>>, %arg3: memref<1x16x128xf32, #tpu.memory_space<vmem>>) attributes {dimension_semantics = [#tpu.dimension_semantics<parallel>, #tpu.dimension_semantics<parallel>], iteration_bounds = array<i64: 2, 1>, scalar_prefetch = 0 : i64, scratch_operands = 0 : i64, tpu.core_type = #tpu.core_type<tc>, window_params = [{transform_indices = @transform_0, window_bounds = array<i64: 1, 16, 128>}, {transform_indices = @transform_1, window_bounds = array<i64: 1, 16, 128>}]} {
    %c0 = arith.constant 0 : index
    %c0_0 = arith.constant 0 : index
    %c0_1 = arith.constant 0 : index
    %0 = vector.load %arg2[%c0, %c0_0, %c0_1] : memref<1x16x128xf32, #tpu.memory_space<vmem>>, vector<1x16x128xf32>
    %cst = arith.constant dense<0.000000e+00> : vector<1x128xf32>
    %1 = vector.multi_reduction <add>, %0, %cst [1] : vector<1x16x128xf32> to vector<1x128xf32>
    %2 = vector.shape_cast %1 : vector<1x128xf32> to vector<1x1x128xf32>
    %cst_2 = arith.constant 1.600000e+01 : f32
    %3 = vector.broadcast %cst_2 : f32 to vector<1x1x128xf32>
    %4 = arith.divf %2, %3 : vector<1x1x128xf32>
    %5 = vector.broadcast %4 : vector<1x1x128xf32> to vector<1x16x128xf32>
    %6 = arith.subf %0, %5 : vector<1x16x128xf32>
    %7 = arith.mulf %6, %6 : vector<1x16x128xf32>
    %cst_3 = arith.constant dense<0.000000e+00> : vector<1x128xf32>
    %8 = vector.multi_reduction <add>, %7, %cst_3 [1] : vector<1x16x128xf32> to vector<1x128xf32>
    %9 = vector.shape_cast %8 : vector<1x128xf32> to vector<1x1x128xf32>
    %cst_4 = arith.constant 1.600000e+01 : f32
    %10 = vector.broadcast %cst_4 : f32 to vector<1x1x128xf32>
    %11 = arith.divf %9, %10 : vector<1x1x128xf32>
    %12 = vector.broadcast %4 : vector<1x1x128xf32> to vector<1x16x128xf32>
    %13 = arith.subf %0, %12 : vector<1x16x128xf32>
    %cst_5 = arith.constant 9.99999974E-6 : f32
    %14 = vector.broadcast %cst_5 : f32 to vector<1x1x128xf32>
    %15 = arith.addf %11, %14 : vector<1x1x128xf32>
    %16 = math.rsqrt %15 : vector<1x1x128xf32>
    %17 = vector.broadcast %16 : vector<1x1x128xf32> to vector<1x16x128xf32>
    %18 = arith.mulf %13, %17 : vector<1x16x128xf32>
    %cst_6 = arith.constant 0.000000e+00 : f32
    %19 = vector.broadcast %cst_6 : f32 to vector<1x16x128xf32>
    %20 = arith.cmpf oge, %18, %19 : vector<1x16x128xf32>
    %cst_7 = arith.constant 2.000000e-01 : f32
    %21 = vector.broadcast %cst_7 : f32 to vector<1x16x128xf32>
    %22 = arith.mulf %21, %18 : vector<1x16x128xf32>
    %23 = arith.select %20, %18, %22 : vector<1x16x128xi1>, vector<1x16x128xf32>
    %c0_8 = arith.constant 0 : index
    %c0_9 = arith.constant 0 : index
    %c0_10 = arith.constant 0 : index
    %24 = vector.load %arg3[%c0_8, %c0_9, %c0_10] : memref<1x16x128xf32, #tpu.memory_space<vmem>>, vector<1x16x128xf32>
    tpu.vector_store %arg3[%c0_8, %c0_9, %c0_10], %23 {strides = array<i32>} : memref<1x16x128xf32, #tpu.memory_space<vmem>>, vector<1x16x128xf32>,
    return
  }
  func.func @transform_0(%arg0: i32, %arg1: i32) -> (i32, i32, i32) {
    %c0_i32 = arith.constant 0 : i32
    %c0_i32_0 = arith.constant 0 : i32
    return %arg0, %c0_i32, %arg1 : i32, i32, i32
  }
  func.func @transform_1(%arg0: i32, %arg1: i32) -> (i32, i32, i32) {
    %c0_i32 = arith.constant 0 : i32
    %c0_i32_0 = arith.constant 0 : i32
    return %arg0, %c0_i32, %arg1 : i32, i32, i32
  }
}

module attributes {stable_mosaic.version = 11 : i64} {
  func.func @_matmul_bias_act_kernel(%arg0: i32, %arg1: i32, %arg2: i32, %arg3: memref<24x512xf32, #tpu.memory_space<vmem>>, %arg4: memref<512x128xf32, #tpu.memory_space<vmem>>, %arg5: memref<1x128xf32, #tpu.memory_space<vmem>>, %arg6: memref<24x128xf32, #tpu.memory_space<vmem>>, %arg7: memref<24x128xf32, #tpu.memory_space<vmem>>) attributes {dimension_semantics = [#tpu.dimension_semantics<parallel>, #tpu.dimension_semantics<parallel>, #tpu.dimension_semantics<arbitrary>], iteration_bounds = array<i64: 1, 1, 1>, scalar_prefetch = 0 : i64, scratch_operands = 1 : i64, tpu.core_type = #tpu.core_type<tc>, window_params = [{transform_indices = @transform_0, window_bounds = array<i64: 24, 512>}, {transform_indices = @transform_1, window_bounds = array<i64: 512, 128>}, {transform_indices = @transform_2, window_bounds = array<i64: 1, 128>}, {transform_indices = @transform_3, window_bounds = array<i64: 24, 128>}]} {
    %c0_i32 = arith.constant 0 : i32
    %0 = arith.cmpi eq, %arg2, %c0_i32 : i32
    %1 = arith.extui %0 : i1 to i32
    %c0_i32_0 = arith.constant 0 : i32
    %2 = arith.cmpi ne, %1, %c0_i32_0 : i32
    scf.if %2 {
      %cst_10 = arith.constant 0.000000e+00 : f32
      %12 = vector.broadcast %cst_10 : f32 to vector<24x128xf32>
      %c0_11 = arith.constant 0 : index
      %c0_12 = arith.constant 0 : index
      %13 = vector.load %arg7[%c0_11, %c0_12] : memref<24x128xf32, #tpu.memory_space<vmem>>, vector<24x128xf32>
      tpu.vector_store %arg7[%c0_11, %c0_12], %12 {strides = array<i32>} : memref<24x128xf32, #tpu.memory_space<vmem>>, vector<24x128xf32>,
    } else {
    }
    %c0 = arith.constant 0 : index
    %c0_1 = arith.constant 0 : index
    %3 = vector.load %arg7[%c0, %c0_1] : memref<24x128xf32, #tpu.memory_space<vmem>>, vector<24x128xf32>
    %c0_2 = arith.constant 0 : index
    %c0_3 = arith.constant 0 : index
    %4 = vector.load %arg3[%c0_2, %c0_3] : memref<24x512xf32, #tpu.memory_space<vmem>>, vector<24x512xf32>
    %c0_4 = arith.constant 0 : index
    %c0_5 = arith.constant 0 : index
    %5 = vector.load %arg4[%c0_4, %c0_5] : memref<512x128xf32, #tpu.memory_space<vmem>>, vector<512x128xf32>
    %cst = arith.constant dense<0.000000e+00> : vector<24x128xf32>
    %6 = tpu.matmul %4, %5, %cst {dimension_numbers = #tpu.dot_dimension_numbers<[1], [0], [0], [1], [0, 0, 1, 1], [], []>} : vector<24x512xf32>, vector<512x128xf32>, vector<24x128xf32> -> vector<24x128xf32>
    %7 = arith.addf %3, %6 : vector<24x128xf32>
    %c0_6 = arith.constant 0 : index
    %c0_7 = arith.constant 0 : index
    %8 = vector.load %arg7[%c0_6, %c0_7] : memref<24x128xf32, #tpu.memory_space<vmem>>, vector<24x128xf32>
    tpu.vector_store %arg7[%c0_6, %c0_7], %7 {strides = array<i32>} : memref<24x128xf32, #tpu.memory_space<vmem>>, vector<24x128xf32>,
    %c0_i32_8 = arith.constant 0 : i32
    %9 = arith.cmpi eq, %arg2, %c0_i32_8 : i32
    %10 = arith.extui %9 : i1 to i32
    %c0_i32_9 = arith.constant 0 : i32
    %11 = arith.cmpi ne, %10, %c0_i32_9 : i32
    scf.if %11 {
      %c0_10 = arith.constant 0 : index
      %c0_11 = arith.constant 0 : index
      %12 = vector.load %arg7[%c0_10, %c0_11] : memref<24x128xf32, #tpu.memory_space<vmem>>, vector<24x128xf32>
      %c0_12 = arith.constant 0 : index
      %c0_13 = arith.constant 0 : index
      %13 = vector.load %arg5[%c0_12, %c0_13] : memref<1x128xf32, #tpu.memory_space<vmem>>, vector<1x128xf32>
      %14 = vector.broadcast %13 : vector<1x128xf32> to vector<24x128xf32>
      %15 = arith.addf %12, %14 : vector<24x128xf32>
      %c0_14 = arith.constant 0 : index
      %c0_15 = arith.constant 0 : index
      %16 = vector.load %arg6[%c0_14, %c0_15] : memref<24x128xf32, #tpu.memory_space<vmem>>, vector<24x128xf32>
      tpu.vector_store %arg6[%c0_14, %c0_15], %15 {strides = array<i32>} : memref<24x128xf32, #tpu.memory_space<vmem>>, vector<24x128xf32>,
    } else {
    }
    return
  }
  func.func @transform_0(%arg0: i32, %arg1: i32, %arg2: i32) -> (i32, i32) {
    %c0_i32 = arith.constant 0 : i32
    return %arg0, %arg2 : i32, i32
  }
  func.func @transform_1(%arg0: i32, %arg1: i32, %arg2: i32) -> (i32, i32) {
    %c0_i32 = arith.constant 0 : i32
    return %arg2, %arg1 : i32, i32
  }
  func.func @transform_2(%arg0: i32, %arg1: i32, %arg2: i32) -> (i32, i32) {
    %c0_i32 = arith.constant 0 : i32
    %c0_i32_0 = arith.constant 0 : i32
    return %c0_i32, %arg1 : i32, i32
  }
  func.func @transform_3(%arg0: i32, %arg1: i32, %arg2: i32) -> (i32, i32) {
    %c0_i32 = arith.constant 0 : i32
    return %arg0, %arg1 : i32, i32
  }
}

module attributes {stable_mosaic.version = 11 : i64} {
  func.func @_inorm_lrelu_kernel(%arg0: i32, %arg1: i32, %arg2: memref<1x9x128xf32, #tpu.memory_space<vmem>>, %arg3: memref<1x9x128xf32, #tpu.memory_space<vmem>>) attributes {dimension_semantics = [#tpu.dimension_semantics<parallel>, #tpu.dimension_semantics<parallel>], iteration_bounds = array<i64: 2, 1>, scalar_prefetch = 0 : i64, scratch_operands = 0 : i64, tpu.core_type = #tpu.core_type<tc>, window_params = [{transform_indices = @transform_0, window_bounds = array<i64: 1, 9, 128>}, {transform_indices = @transform_1, window_bounds = array<i64: 1, 9, 128>}]} {
    %c0 = arith.constant 0 : index
    %c0_0 = arith.constant 0 : index
    %c0_1 = arith.constant 0 : index
    %0 = vector.load %arg2[%c0, %c0_0, %c0_1] : memref<1x9x128xf32, #tpu.memory_space<vmem>>, vector<1x9x128xf32>
    %cst = arith.constant dense<0.000000e+00> : vector<1x128xf32>
    %1 = vector.multi_reduction <add>, %0, %cst [1] : vector<1x9x128xf32> to vector<1x128xf32>
    %2 = vector.shape_cast %1 : vector<1x128xf32> to vector<1x1x128xf32>
    %cst_2 = arith.constant 9.000000e+00 : f32
    %3 = vector.broadcast %cst_2 : f32 to vector<1x1x128xf32>
    %4 = arith.divf %2, %3 : vector<1x1x128xf32>
    %5 = vector.broadcast %4 : vector<1x1x128xf32> to vector<1x9x128xf32>
    %6 = arith.subf %0, %5 : vector<1x9x128xf32>
    %7 = arith.mulf %6, %6 : vector<1x9x128xf32>
    %cst_3 = arith.constant dense<0.000000e+00> : vector<1x128xf32>
    %8 = vector.multi_reduction <add>, %7, %cst_3 [1] : vector<1x9x128xf32> to vector<1x128xf32>
    %9 = vector.shape_cast %8 : vector<1x128xf32> to vector<1x1x128xf32>
    %cst_4 = arith.constant 9.000000e+00 : f32
    %10 = vector.broadcast %cst_4 : f32 to vector<1x1x128xf32>
    %11 = arith.divf %9, %10 : vector<1x1x128xf32>
    %12 = vector.broadcast %4 : vector<1x1x128xf32> to vector<1x9x128xf32>
    %13 = arith.subf %0, %12 : vector<1x9x128xf32>
    %cst_5 = arith.constant 9.99999974E-6 : f32
    %14 = vector.broadcast %cst_5 : f32 to vector<1x1x128xf32>
    %15 = arith.addf %11, %14 : vector<1x1x128xf32>
    %16 = math.rsqrt %15 : vector<1x1x128xf32>
    %17 = vector.broadcast %16 : vector<1x1x128xf32> to vector<1x9x128xf32>
    %18 = arith.mulf %13, %17 : vector<1x9x128xf32>
    %cst_6 = arith.constant 0.000000e+00 : f32
    %19 = vector.broadcast %cst_6 : f32 to vector<1x9x128xf32>
    %20 = arith.cmpf oge, %18, %19 : vector<1x9x128xf32>
    %cst_7 = arith.constant 2.000000e-01 : f32
    %21 = vector.broadcast %cst_7 : f32 to vector<1x9x128xf32>
    %22 = arith.mulf %21, %18 : vector<1x9x128xf32>
    %23 = arith.select %20, %18, %22 : vector<1x9x128xi1>, vector<1x9x128xf32>
    %c0_8 = arith.constant 0 : index
    %c0_9 = arith.constant 0 : index
    %c0_10 = arith.constant 0 : index
    %24 = vector.load %arg3[%c0_8, %c0_9, %c0_10] : memref<1x9x128xf32, #tpu.memory_space<vmem>>, vector<1x9x128xf32>
    tpu.vector_store %arg3[%c0_8, %c0_9, %c0_10], %23 {strides = array<i32>} : memref<1x9x128xf32, #tpu.memory_space<vmem>>, vector<1x9x128xf32>,
    return
  }
  func.func @transform_0(%arg0: i32, %arg1: i32) -> (i32, i32, i32) {
    %c0_i32 = arith.constant 0 : i32
    %c0_i32_0 = arith.constant 0 : i32
    return %arg0, %c0_i32, %arg1 : i32, i32, i32
  }
  func.func @transform_1(%arg0: i32, %arg1: i32) -> (i32, i32, i32) {
    %c0_i32 = arith.constant 0 : i32
    %c0_i32_0 = arith.constant 0 : i32
    return %arg0, %c0_i32, %arg1 : i32, i32, i32
  }
}

module attributes {stable_mosaic.version = 11 : i64} {
  func.func @_matmul_bias_act_kernel(%arg0: i32, %arg1: i32, %arg2: i32, %arg3: memref<8x512xf32, #tpu.memory_space<vmem>>, %arg4: memref<512x128xf32, #tpu.memory_space<vmem>>, %arg5: memref<1x128xf32, #tpu.memory_space<vmem>>, %arg6: memref<8x128xf32, #tpu.memory_space<vmem>>, %arg7: memref<8x128xf32, #tpu.memory_space<vmem>>) attributes {dimension_semantics = [#tpu.dimension_semantics<parallel>, #tpu.dimension_semantics<parallel>, #tpu.dimension_semantics<arbitrary>], iteration_bounds = array<i64: 1, 1, 2>, scalar_prefetch = 0 : i64, scratch_operands = 1 : i64, tpu.core_type = #tpu.core_type<tc>, window_params = [{transform_indices = @transform_0, window_bounds = array<i64: 8, 512>}, {transform_indices = @transform_1, window_bounds = array<i64: 512, 128>}, {transform_indices = @transform_2, window_bounds = array<i64: 1, 128>}, {transform_indices = @transform_3, window_bounds = array<i64: 8, 128>}]} {
    %c0_i32 = arith.constant 0 : i32
    %0 = arith.cmpi eq, %arg2, %c0_i32 : i32
    %1 = arith.extui %0 : i1 to i32
    %c0_i32_0 = arith.constant 0 : i32
    %2 = arith.cmpi ne, %1, %c0_i32_0 : i32
    scf.if %2 {
      %cst_9 = arith.constant 0.000000e+00 : f32
      %12 = vector.broadcast %cst_9 : f32 to vector<8x128xf32>
      %c0_10 = arith.constant 0 : index
      %c0_11 = arith.constant 0 : index
      %13 = vector.load %arg7[%c0_10, %c0_11] : memref<8x128xf32, #tpu.memory_space<vmem>>, vector<8x128xf32>
      tpu.vector_store %arg7[%c0_10, %c0_11], %12 {strides = array<i32>} : memref<8x128xf32, #tpu.memory_space<vmem>>, vector<8x128xf32>,
    } else {
    }
    %c0 = arith.constant 0 : index
    %c0_1 = arith.constant 0 : index
    %3 = vector.load %arg7[%c0, %c0_1] : memref<8x128xf32, #tpu.memory_space<vmem>>, vector<8x128xf32>
    %c0_2 = arith.constant 0 : index
    %c0_3 = arith.constant 0 : index
    %4 = vector.load %arg3[%c0_2, %c0_3] : memref<8x512xf32, #tpu.memory_space<vmem>>, vector<8x512xf32>
    %c0_4 = arith.constant 0 : index
    %c0_5 = arith.constant 0 : index
    %5 = vector.load %arg4[%c0_4, %c0_5] : memref<512x128xf32, #tpu.memory_space<vmem>>, vector<512x128xf32>
    %cst = arith.constant dense<0.000000e+00> : vector<8x128xf32>
    %6 = tpu.matmul %4, %5, %cst {dimension_numbers = #tpu.dot_dimension_numbers<[1], [0], [0], [1], [0, 0, 1, 1], [], []>} : vector<8x512xf32>, vector<512x128xf32>, vector<8x128xf32> -> vector<8x128xf32>
    %7 = arith.addf %3, %6 : vector<8x128xf32>
    %c0_6 = arith.constant 0 : index
    %c0_7 = arith.constant 0 : index
    %8 = vector.load %arg7[%c0_6, %c0_7] : memref<8x128xf32, #tpu.memory_space<vmem>>, vector<8x128xf32>
    tpu.vector_store %arg7[%c0_6, %c0_7], %7 {strides = array<i32>} : memref<8x128xf32, #tpu.memory_space<vmem>>, vector<8x128xf32>,
    %c1_i32 = arith.constant 1 : i32
    %9 = arith.cmpi eq, %arg2, %c1_i32 : i32
    %10 = arith.extui %9 : i1 to i32
    %c0_i32_8 = arith.constant 0 : i32
    %11 = arith.cmpi ne, %10, %c0_i32_8 : i32
    scf.if %11 {
      %c0_9 = arith.constant 0 : index
      %c0_10 = arith.constant 0 : index
      %12 = vector.load %arg7[%c0_9, %c0_10] : memref<8x128xf32, #tpu.memory_space<vmem>>, vector<8x128xf32>
      %c0_11 = arith.constant 0 : index
      %c0_12 = arith.constant 0 : index
      %13 = vector.load %arg5[%c0_11, %c0_12] : memref<1x128xf32, #tpu.memory_space<vmem>>, vector<1x128xf32>
      %14 = vector.broadcast %13 : vector<1x128xf32> to vector<8x128xf32>
      %15 = arith.addf %12, %14 : vector<8x128xf32>
      %c0_13 = arith.constant 0 : index
      %c0_14 = arith.constant 0 : index
      %16 = vector.load %arg6[%c0_13, %c0_14] : memref<8x128xf32, #tpu.memory_space<vmem>>, vector<8x128xf32>
      tpu.vector_store %arg6[%c0_13, %c0_14], %15 {strides = array<i32>} : memref<8x128xf32, #tpu.memory_space<vmem>>, vector<8x128xf32>,
    } else {
    }
    return
  }
  func.func @transform_0(%arg0: i32, %arg1: i32, %arg2: i32) -> (i32, i32) {
    %c0_i32 = arith.constant 0 : i32
    return %arg0, %arg2 : i32, i32
  }
  func.func @transform_1(%arg0: i32, %arg1: i32, %arg2: i32) -> (i32, i32) {
    %c0_i32 = arith.constant 0 : i32
    return %arg2, %arg1 : i32, i32
  }
  func.func @transform_2(%arg0: i32, %arg1: i32, %arg2: i32) -> (i32, i32) {
    %c0_i32 = arith.constant 0 : i32
    %c0_i32_0 = arith.constant 0 : i32
    return %c0_i32, %arg1 : i32, i32
  }
  func.func @transform_3(%arg0: i32, %arg1: i32, %arg2: i32) -> (i32, i32) {
    %c0_i32 = arith.constant 0 : i32
    return %arg0, %arg1 : i32, i32
  }
}

</mosaic_0001>

<llo_original>
// kernel: discriminator_forward.8
$region0: #{discriminator_forward.8}
  #allocation0 [shape = 'u32[]', space=smem, size = 0x4, offset = 0x4, fixed_abs, tag = 'smem constant byte address 0x4 - core index']
  #allocation1 [shape = 'u32[144,128]{1,0:T(1,128)}', space=vmem, size = 0x12000, scoped, tag = 'internal scratch']
  #allocation2 [shape = 'f32[512,128]{1,0:T(8,128)}', space=vmem, size = 0x40000, scoped, tag = 'scratch operand']
  %s0 = inlined_call_operand.vmem [shape: f32[512,128], index: 0, kind: input, shape index: {}]
  %s1 = inlined_call_operand.vmem [shape: f32[128,128], index: 1, kind: input, shape index: {}]
  %s2 = inlined_call_operand.vmem [shape: f32[1,128], index: 2, kind: input, shape index: {}]
  %s3 = inlined_call_operand.vmem [shape: f32[512,128], index: 3, kind: output, shape index: {}]
  %s4 = sld [smem:[#allocation0]]
  $region30: #{discriminator_forward.8} parent=0
    _
  %s6 = ssub.s32 1, %s4
  %s7 = scalar_select 0, %s6, %s4
  // Predicated region
  $region2: #{discriminator_forward.8} parent=0 // pred_check
    _
  $region3: #{discriminator_forward.8} parent=0 // pred_check_branch
    %9 = sbr.rel (0) target = $region5
  $region4: #{discriminator_forward.8} parent=0 // pred_region
    _
  $region5: #{discriminator_forward.8} parent=0 // pred_fallthru
    _
  // Predicated region
  $region6: #{discriminator_forward.8} parent=0 // pred_check
    _
  $region7: #{discriminator_forward.8} parent=0 // pred_check_branch
    %11 = sbr.rel (0) target = $region9
  $region8: #{discriminator_forward.8} parent=0 // pred_region
    _
  $region9: #{discriminator_forward.8} parent=0 // pred_fallthru
    _
  // Predicated region
  $region10: #{discriminator_forward.8} parent=0 // pred_check
    _
  $region11: #{discriminator_forward.8} parent=0 // pred_check_branch
    %13 = sbr.rel (0) target = $region13
  $region12: #{discriminator_forward.8} parent=0 // pred_region
    _
  $region13: #{discriminator_forward.8} parent=0 // pred_fallthru
    _
  %p14 = scmp.eq.s32.totalorder 0, 0
  // Predicated region
  $region14: #{discriminator_forward.8} parent=0 // pred_check
    %p15 = pneg %p14
  $region15: #{discriminator_forward.8} parent=0 // pred_check_branch
    %17 = sbr.rel (%p15) target = $region17
  $region16: #{discriminator_forward.8} parent=0 // pred_region
    %18 = vst [vmem:[#allocation2] sm:$0xff] 0.0
    %19 = vst [vmem:[#allocation2 + $0x8] sm:$0xff] 0.0
    %20 = vst [vmem:[#allocation2 + $0x10] sm:$0xff] 0.0
    %21 = vst [vmem:[#allocation2 + $0x18] sm:$0xff] 0.0
    %22 = vst [vmem:[#allocation2 + $0x20] sm:$0xff] 0.0
    %23 = vst [vmem:[#allocation2 + $0x28] sm:$0xff] 0.0
    %24 = vst [vmem:[#allocation2 + $0x30] sm:$0xff] 0.0
    %25 = vst [vmem:[#allocation2 + $0x38] sm:$0xff] 0.0
    %26 = vst [vmem:[#allocation2 + $0x40] sm:$0xff] 0.0
    %27 = vst [vmem:[#allocation2 + $0x48] sm:$0xff] 0.0
    %28 = vst [vmem:[#allocation2 + $0x50] sm:$0xff] 0.0
    %29 = vst [vmem:[#allocation2 + $0x58] sm:$0xff] 0.0
    %30 = vst [vmem:[#allocation2 + $0x60] sm:$0xff] 0.0
    %31 = vst [vmem:[#allocation2 + $0x68] sm:$0xff] 0.0
    %32 = vst [vmem:[#allocation2 + $0x70] sm:$0xff] 0.0
    %33 = vst [vmem:[#allocation2 + $0x78] sm:$0xff] 0.0
    %34 = vst [vmem:[#allocation2 + $0x80] sm:$0xff] 0.0
    %35 = vst [vmem:[#allocation2 + $0x88] sm:$0xff] 0.0
    %36 = vst [vmem:[#allocation2 + $0x90] sm:$0xff] 0.0
    %37 = vst [vmem:[#allocation2 + $0x98] sm:$0xff] 0.0
    %38 = vst [vmem:[#allocation2 + $0xa0] sm:$0xff] 0.0
    %39 = vst [vmem:[#allocation2 + $0xa8] sm:$0xff] 0.0
    %40 = vst [vmem:[#allocation2 + $0xb0] sm:$0xff] 0.0
    %41 = vst [vmem:[#allocation2 + $0xb8] sm:$0xff] 0.0
    %42 = vst [vmem:[#allocation2 + $0xc0] sm:$0xff] 0.0
    %43 = vst [vmem:[#allocation2 + $0xc8] sm:$0xff] 0.0
    %44 = vst [vmem:[#allocation2 + $0xd0] sm:$0xff] 0.0
    %45 = vst [vmem:[#allocation2 + $0xd8] sm:$0xff] 0.0
    %46 = vst [vmem:[#allocation2 + $0xe0] sm:$0xff] 0.0
    %47 = vst [vmem:[#allocation2 + $0xe8] sm:$0xff] 0.0
    %48 = vst [vmem:[#allocation2 + $0xf0] sm:$0xff] 0.0
    %49 = vst [vmem:[#allocation2 + $0xf8] sm:$0xff] 0.0
    %50 = vst [vmem:[#allocation2 + $0x100] sm:$0xff] 0.0
    %51 = vst [vmem:[#allocation2 + $0x108] sm:$0xff] 0.0
    %52 = vst [vmem:[#allocation2 + $0x110] sm:$0xff] 0.0
    %53 = vst [vmem:[#allocation2 + $0x118] sm:$0xff] 0.0
    %54 = vst [vmem:[#allocation2 + $0x120] sm:$0xff] 0.0
    %55 = vst [vmem:[#allocation2 + $0x128] sm:$0xff] 0.0
    %56 = vst [vmem:[#allocation2 + $0x130] sm:$0xff] 0.0
    %57 = vst [vmem:[#allocation2 + $0x138] sm:$0xff] 0.0
    %58 = vst [vmem:[#allocation2 + $0x140] sm:$0xff] 0.0
    %59 = vst [vmem:[#allocation2 + $0x148] sm:$0xff] 0.0
    %60 = vst [vmem:[#allocation2 + $0x150] sm:$0xff] 0.0
    %61 = vst [vmem:[#allocation2 + $0x158] sm:$0xff] 0.0
    %62 = vst [vmem:[#allocation2 + $0x160] sm:$0xff] 0.0
    %63 = vst [vmem:[#allocation2 + $0x168] sm:$0xff] 0.0
    %64 = vst [vmem:[#allocation2 + $0x170] sm:$0xff] 0.0
    %65 = vst [vmem:[#allocation2 + $0x178] sm:$0xff] 0.0
    %66 = vst [vmem:[#allocation2 + $0x180] sm:$0xff] 0.0
    %67 = vst [vmem:[#allocation2 + $0x188] sm:$0xff] 0.0
    %68 = vst [vmem:[#allocation2 + $0x190] sm:$0xff] 0.0
    %69 = vst [vmem:[#allocation2 + $0x198] sm:$0xff] 0.0
    %70 = vst [vmem:[#allocation2 + $0x1a0] sm:$0xff] 0.0
    %71 = vst [vmem:[#allocation2 + $0x1a8] sm:$0xff] 0.0
    %72 = vst [vmem:[#allocation2 + $0x1b0] sm:$0xff] 0.0
    %73 = vst [vmem:[#allocation2 + $0x1b8] sm:$0xff] 0.0
    %74 = vst [vmem:[#allocation2 + $0x1c0] sm:$0xff] 0.0
    %75 = vst [vmem:[#allocation2 + $0x1c8] sm:$0xff] 0.0
    %76 = vst [vmem:[#allocation2 + $0x1d0] sm:$0xff] 0.0
    %77 = vst [vmem:[#allocation2 + $0x1d8] sm:$0xff] 0.0
    %78 = vst [vmem:[#allocation2 + $0x1e0] sm:$0xff] 0.0
    %79 = vst [vmem:[#allocation2 + $0x1e8] sm:$0xff] 0.0
    %80 = vst [vmem:[#allocation2 + $0x1f0] sm:$0xff] 0.0
    %81 = vst [vmem:[#allocation2 + $0x1f8] sm:$0xff] 0.0
  $region17: #{discriminator_forward.8} parent=0 // pred_fallthru
    _
  %v82 = vld [vmem:[#allocation2] sm:$0xff]
  %v83 = vld [vmem:[#allocation2 + $0x8] sm:$0xff]
  %v84 = vld [vmem:[#allocation2 + $0x10] sm:$0xff]
  %v85 = vld [vmem:[#allocation2 + $0x18] sm:$0xff]
  %v86 = vld [vmem:[#allocation2 + $0x20] sm:$0xff]
  %v87 = vld [vmem:[#allocation2 + $0x28] sm:$0xff]
  %v88 = vld [vmem:[#allocation2 + $0x30] sm:$0xff]
  %v89 = vld [vmem:[#allocation2 + $0x38] sm:$0xff]
  %v90 = vld [vmem:[#allocation2 + $0x40] sm:$0xff]
  %v91 = vld [vmem:[#allocation2 + $0x48] sm:$0xff]
  %v92 = vld [vmem:[#allocation2 + $0x50] sm:$0xff]
  %v93 = vld [vmem:[#allocation2 + $0x58] sm:$0xff]
  %v94 = vld [vmem:[#allocation2 + $0x60] sm:$0xff]
  %v95 = vld [vmem:[#allocation2 + $0x68] sm:$0xff]
  %v96 = vld [vmem:[#allocation2 + $0x70] sm:$0xff]
  %v97 = vld [vmem:[#allocation2 + $0x78] sm:$0xff]
  %v98 = vld [vmem:[#allocation2 + $0x80] sm:$0xff]
  %v99 = vld [vmem:[#allocation2 + $0x88] sm:$0xff]
  %v100 = vld [vmem:[#allocation2 + $0x90] sm:$0xff]
  %v101 = vld [vmem:[#allocation2 + $0x98] sm:$0xff]
  %v102 = vld [vmem:[#allocation2 + $0xa0] sm:$0xff]
  %v103 = vld [vmem:[#allocation2 + $0xa8] sm:$0xff]
  %v104 = vld [vmem:[#allocation2 + $0xb0] sm:$0xff]
  %v105 = vld [vmem:[#allocation2 + $0xb8] sm:$0xff]
  %v106 = vld [vmem:[#allocation2 + $0xc0] sm:$0xff]
  %v107 = vld [vmem:[#allocation2 + $0xc8] sm:$0xff]
  %v108 = vld [vmem:[#allocation2 + $0xd0] sm:$0xff]
  %v109 = vld [vmem:[#allocation2 + $0xd8] sm:$0xff]
  %v110 = vld [vmem:[#allocation2 + $0xe0] sm:$0xff]
  %v111 = vld [vmem:[#allocation2 + $0xe8] sm:$0xff]
  %v112 = vld [vmem:[#allocation2 + $0xf0] sm:$0xff]
  %v113 = vld [vmem:[#allocation2 + $0xf8] sm:$0xff]
  %v114 = vld [vmem:[#allocation2 + $0x100] sm:$0xff]
  %v115 = vld [vmem:[#allocation2 + $0x108] sm:$0xff]
  %v116 = vld [vmem:[#allocation2 + $0x110] sm:$0xff]
  %v117 = vld [vmem:[#allocation2 + $0x118] sm:$0xff]
  %v118 = vld [vmem:[#allocation2 + $0x120] sm:$0xff]
  %v119 = vld [vmem:[#allocation2 + $0x128] sm:$0xff]
  %v120 = vld [vmem:[#allocation2 + $0x130] sm:$0xff]
  %v121 = vld [vmem:[#allocation2 + $0x138] sm:$0xff]
  %v122 = vld [vmem:[#allocation2 + $0x140] sm:$0xff]
  %v123 = vld [vmem:[#allocation2 + $0x148] sm:$0xff]
  %v124 = vld [vmem:[#allocation2 + $0x150] sm:$0xff]
  %v125 = vld [vmem:[#allocation2 + $0x158] sm:$0xff]
  %v126 = vld [vmem:[#allocation2 + $0x160] sm:$0xff]
  %v127 = vld [vmem:[#allocation2 + $0x168] sm:$0xff]
  %v128 = vld [vmem:[#allocation2 + $0x170] sm:$0xff]
  %v129 = vld [vmem:[#allocation2 + $0x178] sm:$0xff]
  %v130 = vld [vmem:[#allocation2 + $0x180] sm:$0xff]
  %v131 = vld [vmem:[#allocation2 + $0x188] sm:$0xff]
  %v132 = vld [vmem:[#allocation2 + $0x190] sm:$0xff]
  %v133 = vld [vmem:[#allocation2 + $0x198] sm:$0xff]
  %v134 = vld [vmem:[#allocation2 + $0x1a0] sm:$0xff]
  %v135 = vld [vmem:[#allocation2 + $0x1a8] sm:$0xff]
  %v136 = vld [vmem:[#allocation2 + $0x1b0] sm:$0xff]
  %v137 = vld [vmem:[#allocation2 + $0x1b8] sm:$0xff]
  %v138 = vld [vmem:[#allocation2 + $0x1c0] sm:$0xff]
  %v139 = vld [vmem:[#allocation2 + $0x1c8] sm:$0xff]
  %v140 = vld [vmem:[#allocation2 + $0x1d0] sm:$0xff]
  %v141 = vld [vmem:[#allocation2 + $0x1d8] sm:$0xff]
  %v142 = vld [vmem:[#allocation2 + $0x1e0] sm:$0xff]
  %v143 = vld [vmem:[#allocation2 + $0x1e8] sm:$0xff]
  %v144 = vld [vmem:[#allocation2 + $0x1f0] sm:$0xff]
  %v145 = vld [vmem:[#allocation2 + $0x1f8] sm:$0xff]
  %v146 = vld [vmem:[%s0] sm:$0xff]
  %v147 = vld [vmem:[%s0 + $0x8] sm:$0xff]
  %v148 = vld [vmem:[%s0 + $0x10] sm:$0xff]
  %v149 = vld [vmem:[%s0 + $0x18] sm:$0xff]
  %v150 = vld [vmem:[%s0 + $0x20] sm:$0xff]
  %v151 = vld [vmem:[%s0 + $0x28] sm:$0xff]
  %v152 = vld [vmem:[%s0 + $0x30] sm:$0xff]
  %v153 = vld [vmem:[%s0 + $0x38] sm:$0xff]
  %v154 = vld [vmem:[%s0 + $0x40] sm:$0xff]
  %v155 = vld [vmem:[%s0 + $0x48] sm:$0xff]
  %v156 = vld [vmem:[%s0 + $0x50] sm:$0xff]
  %v157 = vld [vmem:[%s0 + $0x58] sm:$0xff]
  %v158 = vld [vmem:[%s0 + $0x60] sm:$0xff]
  %v159 = vld [vmem:[%s0 + $0x68] sm:$0xff]
  %v160 = vld [vmem:[%s0 + $0x70] sm:$0xff]
  %v161 = vld [vmem:[%s0 + $0x78] sm:$0xff]
  %v162 = vld [vmem:[%s0 + $0x80] sm:$0xff]
  %v163 = vld [vmem:[%s0 + $0x88] sm:$0xff]
  %v164 = vld [vmem:[%s0 + $0x90] sm:$0xff]
  %v165 = vld [vmem:[%s0 + $0x98] sm:$0xff]
  %v166 = vld [vmem:[%s0 + $0xa0] sm:$0xff]
  %v167 = vld [vmem:[%s0 + $0xa8] sm:$0xff]
  %v168 = vld [vmem:[%s0 + $0xb0] sm:$0xff]
  %v169 = vld [vmem:[%s0 + $0xb8] sm:$0xff]
  %v170 = vld [vmem:[%s0 + $0xc0] sm:$0xff]
  %v171 = vld [vmem:[%s0 + $0xc8] sm:$0xff]
  %v172 = vld [vmem:[%s0 + $0xd0] sm:$0xff]
  %v173 = vld [vmem:[%s0 + $0xd8] sm:$0xff]
  %v174 = vld [vmem:[%s0 + $0xe0] sm:$0xff]
  %v175 = vld [vmem:[%s0 + $0xe8] sm:$0xff]
  %v176 = vld [vmem:[%s0 + $0xf0] sm:$0xff]
  %v177 = vld [vmem:[%s0 + $0xf8] sm:$0xff]
  %v178 = vld [vmem:[%s0 + $0x100] sm:$0xff]
  %v179 = vld [vmem:[%s0 + $0x108] sm:$0xff]
  %v180 = vld [vmem:[%s0 + $0x110] sm:$0xff]
  %v181 = vld [vmem:[%s0 + $0x118] sm:$0xff]
  %v182 = vld [vmem:[%s0 + $0x120] sm:$0xff]
  %v183 = vld [vmem:[%s0 + $0x128] sm:$0xff]
  %v184 = vld [vmem:[%s0 + $0x130] sm:$0xff]
  %v185 = vld [vmem:[%s0 + $0x138] sm:$0xff]
  %v186 = vld [vmem:[%s0 + $0x140] sm:$0xff]
  %v187 = vld [vmem:[%s0 + $0x148] sm:$0xff]
  %v188 = vld [vmem:[%s0 + $0x150] sm:$0xff]
  %v189 = vld [vmem:[%s0 + $0x158] sm:$0xff]
  %v190 = vld [vmem:[%s0 + $0x160] sm:$0xff]
  %v191 = vld [vmem:[%s0 + $0x168] sm:$0xff]
  %v192 = vld [vmem:[%s0 + $0x170] sm:$0xff]
  %v193 = vld [vmem:[%s0 + $0x178] sm:$0xff]
  %v194 = vld [vmem:[%s0 + $0x180] sm:$0xff]
  %v195 = vld [vmem:[%s0 + $0x188] sm:$0xff]
  %v196 = vld [vmem:[%s0 + $0x190] sm:$0xff]
  %v197 = vld [vmem:[%s0 + $0x198] sm:$0xff]
  %v198 = vld [vmem:[%s0 + $0x1a0] sm:$0xff]
  %v199 = vld [vmem:[%s0 + $0x1a8] sm:$0xff]
  %v200 = vld [vmem:[%s0 + $0x1b0] sm:$0xff]
  %v201 = vld [vmem:[%s0 + $0x1b8] sm:$0xff]
  %v202 = vld [vmem:[%s0 + $0x1c0] sm:$0xff]
  %v203 = vld [vmem:[%s0 + $0x1c8] sm:$0xff]
  %v204 = vld [vmem:[%s0 + $0x1d0] sm:$0xff]
  %v205 = vld [vmem:[%s0 + $0x1d8] sm:$0xff]
  %v206 = vld [vmem:[%s0 + $0x1e0] sm:$0xff]
  %v207 = vld [vmem:[%s0 + $0x1e8] sm:$0xff]
  %v208 = vld [vmem:[%s0 + $0x1f0] sm:$0xff]
  %v209 = vld [vmem:[%s0 + $0x1f8] sm:$0xff]
  %v210 = vld [vmem:[%s1] sm:$0xff]
  %v211 = vld [vmem:[%s1 + $0x8] sm:$0xff]
  %v212 = vld [vmem:[%s1 + $0x10] sm:$0xff]
  %v213 = vld [vmem:[%s1 + $0x18] sm:$0xff]
  %v214 = vld [vmem:[%s1 + $0x20] sm:$0xff]
  %v215 = vld [vmem:[%s1 + $0x28] sm:$0xff]
  %v216 = vld [vmem:[%s1 + $0x30] sm:$0xff]
  %v217 = vld [vmem:[%s1 + $0x38] sm:$0xff]
  %v218 = vld [vmem:[%s1 + $0x40] sm:$0xff]
  %v219 = vld [vmem:[%s1 + $0x48] sm:$0xff]
  %v220 = vld [vmem:[%s1 + $0x50] sm:$0xff]
  %v221 = vld [vmem:[%s1 + $0x58] sm:$0xff]
  %v222 = vld [vmem:[%s1 + $0x60] sm:$0xff]
  %v223 = vld [vmem:[%s1 + $0x68] sm:$0xff]
  %v224 = vld [vmem:[%s1 + $0x70] sm:$0xff]
  %v225 = vld [vmem:[%s1 + $0x78] sm:$0xff]
  %226 = vmatprep.subr.mxu0 0.0
  %227 = vmatpush1.msra.mxu0 %v225
  %228 = vmatprep.subr.mxu0 0.0
  %229 = vmatpush1.msra.mxu0 %v224
  %230 = vmatprep.subr.mxu0 0.0
  %231 = vmatpush1.msra.mxu0 %v223
  %232 = vmatprep.subr.mxu0 0.0
  %233 = vmatpush1.msra.mxu0 %v222
  %234 = vmatprep.subr.mxu0 0.0
  %235 = vmatpush1.msra.mxu0 %v221
  %236 = vmatprep.subr.mxu0 0.0
  %237 = vmatpush1.msra.mxu0 %v220
  %238 = vmatprep.subr.mxu0 0.0
  %239 = vmatpush1.msra.mxu0 %v219
  %240 = vmatprep.subr.mxu0 0.0
  %241 = vmatpush1.msra.mxu0 %v218
  %242 = vmatprep.subr.mxu0 0.0
  %243 = vmatpush1.msra.mxu0 %v217
  %244 = vmatprep.subr.mxu0 0.0
  %245 = vmatpush1.msra.mxu0 %v216
  %246 = vmatprep.subr.mxu0 0.0
  %247 = vmatpush1.msra.mxu0 %v215
  %248 = vmatprep.subr.mxu0 0.0
  %249 = vmatpush1.msra.mxu0 %v214
  %250 = vmatprep.subr.mxu0 0.0
  %251 = vmatpush1.msra.mxu0 %v213
  %252 = vmatprep.subr.mxu0 0.0
  %253 = vmatpush1.msra.mxu0 %v212
  %254 = vmatprep.subr.mxu0 0.0
  %255 = vmatpush1.msra.mxu0 %v211
  %256 = vmatprep.subr.mxu0 0.0
  %257 = vmatpush1.msra.mxu0 %v210
  %258 = vmatprep.subr.mxu0 0.0
  %259 = vmatpush2.msra.mxu0 0.0
  %260 = vmatprep.subr.mxu0 0.0
  %261 = vmatpush2.msra.mxu0 0.0
  %262 = vmatprep.subr.mxu0 0.0
  %263 = vmatpush2.msra.mxu0 0.0
  %264 = vmatprep.subr.mxu0 0.0
  %265 = vmatpush2.msra.mxu0 0.0
  %266 = vmatprep.subr.mxu0 0.0
  %267 = vmatpush2.msra.mxu0 0.0
  %268 = vmatprep.subr.mxu0 0.0
  %269 = vmatpush2.msra.mxu0 0.0
  %270 = vmatprep.subr.mxu0 0.0
  %271 = vmatpush2.msra.mxu0 0.0
  %272 = vmatprep.subr.mxu0 0.0
  %273 = vmatpush2.msra.mxu0 0.0
  %274 = vmatprep.subr.mxu0 0.0
  %275 = vmatpush2.msra.mxu0 0.0
  %276 = vmatprep.subr.mxu0 0.0
  %277 = vmatpush2.msra.mxu0 0.0
  %278 = vmatprep.subr.mxu0 0.0
  %279 = vmatpush2.msra.mxu0 0.0
  %280 = vmatprep.subr.mxu0 0.0
  %281 = vmatpush2.msra.mxu0 0.0
  %282 = vmatprep.subr.mxu0 0.0
  %283 = vmatpush2.msra.mxu0 0.0
  %284 = vmatprep.subr.mxu0 0.0
  %285 = vmatpush2.msra.mxu0 0.0
  %286 = vmatprep.subr.mxu0 0.0
  %287 = vmatpush2.msra.mxu0 0.0
  %288 = vmatprep.subr.mxu0 0.0
  %289 = vmatpush2.msra.mxu0 0.0
  %290 = vmatprep.mubr.f32.mxu0 0.0
  %291 = vmatmul.mubr.f32.gmra.mxu0 %v146
  %v292 = vpop.f32.mrf.mxu0
  %v293 = vadd.f32 0.0, %v292
  %v294 = vpop.f32.mrf.mxu0
  %295 = vmatprep.mubr.f32.mxu0 0.0
  %296 = vmatmul.mubr.f32.gmra.mxu0 %v147
  %v297 = vpop.f32.mrf.mxu0
  %v298 = vadd.f32 0.0, %v297
  %v299 = vpop.f32.mrf.mxu0
  %300 = vmatprep.mubr.f32.mxu0 0.0
  %301 = vmatmul.mubr.f32.gmra.mxu0 %v148
  %v302 = vpop.f32.mrf.mxu0
  %v303 = vadd.f32 0.0, %v302
  %v304 = vpop.f32.mrf.mxu0
  %305 = vmatprep.mubr.f32.mxu0 0.0
  %306 = vmatmul.mubr.f32.gmra.mxu0 %v149
  %v307 = vpop.f32.mrf.mxu0
  %v308 = vadd.f32 0.0, %v307
  %v309 = vpop.f32.mrf.mxu0
  %310 = vmatprep.mubr.f32.mxu0 0.0
  %311 = vmatmul.mubr.f32.gmra.mxu0 %v150
  %v312 = vpop.f32.mrf.mxu0
  %v313 = vadd.f32 0.0, %v312
  %v314 = vpop.f32.mrf.mxu0
  %315 = vmatprep.mubr.f32.mxu0 0.0
  %316 = vmatmul.mubr.f32.gmra.mxu0 %v151
  %v317 = vpop.f32.mrf.mxu0
  %v318 = vadd.f32 0.0, %v317
  %v319 = vpop.f32.mrf.mxu0
  %320 = vmatprep.mubr.f32.mxu0 0.0
  %321 = vmatmul.mubr.f32.gmra.mxu0 %v152
  %v322 = vpop.f32.mrf.mxu0
  %v323 = vadd.f32 0.0, %v322
  %v324 = vpop.f32.mrf.mxu0
  %325 = vmatprep.mubr.f32.mxu0 0.0
  %326 = vmatmul.mubr.f32.gmra.mxu0 %v153
  %v327 = vpop.f32.mrf.mxu0
  %v328 = vadd.f32 0.0, %v327
  %v329 = vpop.f32.mrf.mxu0
  %330 = vmatprep.mubr.f32.mxu0 0.0
  %331 = vmatmul.mubr.f32.gmra.mxu0 %v154
  %v332 = vpop.f32.mrf.mxu0
  %v333 = vadd.f32 0.0, %v332
  %v334 = vpop.f32.mrf.mxu0
  %335 = vmatprep.mubr.f32.mxu0 0.0
  %336 = vmatmul.mubr.f32.gmra.mxu0 %v155
  %v337 = vpop.f32.mrf.mxu0
  %v338 = vadd.f32 0.0, %v337
  %v339 = vpop.f32.mrf.mxu0
  %340 = vmatprep.mubr.f32.mxu0 0.0
  %341 = vmatmul.mubr.f32.gmra.mxu0 %v156
  %v342 = vpop.f32.mrf.mxu0
  %v343 = vadd.f32 0.0, %v342
  %v344 = vpop.f32.mrf.mxu0
  %345 = vmatprep.mubr.f32.mxu0 0.0
  %346 = vmatmul.mubr.f32.gmra.mxu0 %v157
  %v347 = vpop.f32.mrf.mxu0
  %v348 = vadd.f32 0.0, %v347
  %v349 = vpop.f32.mrf.mxu0
  %350 = vmatprep.mubr.f32.mxu0 0.0
  %351 = vmatmul.mubr.f32.gmra.mxu0 %v158
  %v352 = vpop.f32.mrf.mxu0
  %v353 = vadd.f32 0.0, %v352
  %v354 = vpop.f32.mrf.mxu0
  %355 = vmatprep.mubr.f32.mxu0 0.0
  %356 = vmatmul.mubr.f32.gmra.mxu0 %v159
  %v357 = vpop.f32.mrf.mxu0
  %v358 = vadd.f32 0.0, %v357
  %v359 = vpop.f32.mrf.mxu0
  %360 = vmatprep.mubr.f32.mxu0 0.0
  %361 = vmatmul.mubr.f32.gmra.mxu0 %v160
  %v362 = vpop.f32.mrf.mxu0
  %v363 = vadd.f32 0.0, %v362
  %v364 = vpop.f32.mrf.mxu0
  %365 = vmatprep.mubr.f32.mxu0 0.0
  %366 = vmatmul.mubr.f32.gmra.mxu0 %v161
  %v367 = vpop.f32.mrf.mxu0
  %v368 = vadd.f32 0.0, %v367
  %v369 = vpop.f32.mrf.mxu0
  %370 = vmatprep.mubr.f32.mxu0 0.0
  %371 = vmatmul.mubr.f32.gmra.mxu0 %v162
  %v372 = vpop.f32.mrf.mxu0
  %v373 = vadd.f32 0.0, %v372
  %v374 = vpop.f32.mrf.mxu0
  %375 = vmatprep.mubr.f32.mxu0 0.0
  %376 = vmatmul.mubr.f32.gmra.mxu0 %v163
  %v377 = vpop.f32.mrf.mxu0
  %v378 = vadd.f32 0.0, %v377
  %v379 = vpop.f32.mrf.mxu0
  %380 = vmatprep.mubr.f32.mxu0 0.0
  %381 = vmatmul.mubr.f32.gmra.mxu0 %v164
  %v382 = vpop.f32.mrf.mxu0
  %v383 = vadd.f32 0.0, %v382
  %v384 = vpop.f32.mrf.mxu0
  %385 = vmatprep.mubr.f32.mxu0 0.0
  %386 = vmatmul.mubr.f32.gmra.mxu0 %v165
  %v387 = vpop.f32.mrf.mxu0
  %v388 = vadd.f32 0.0, %v387
  %v389 = vpop.f32.mrf.mxu0
  %390 = vmatprep.mubr.f32.mxu0 0.0
  %391 = vmatmul.mubr.f32.gmra.mxu0 %v166
  %v392 = vpop.f32.mrf.mxu0
  %v393 = vadd.f32 0.0, %v392
  %v394 = vpop.f32.mrf.mxu0
  %395 = vmatprep.mubr.f32.mxu0 0.0
  %396 = vmatmul.mubr.f32.gmra.mxu0 %v167
  %v397 = vpop.f32.mrf.mxu0
  %v398 = vadd.f32 0.0, %v397
  %v399 = vpop.f32.mrf.mxu0
  %400 = vmatprep.mubr.f32.mxu0 0.0
  %401 = vmatmul.mubr.f32.gmra.mxu0 %v168
  %v402 = vpop.f32.mrf.mxu0
  %v403 = vadd.f32 0.0, %v402
  %v404 = vpop.f32.mrf.mxu0
  %405 = vmatprep.mubr.f32.mxu0 0.0
  %406 = vmatmul.mubr.f32.gmra.mxu0 %v169
  %v407 = vpop.f32.mrf.mxu0
  %v408 = vadd.f32 0.0, %v407
  %v409 = vpop.f32.mrf.mxu0
  %410 = vmatprep.mubr.f32.mxu0 0.0
  %411 = vmatmul.mubr.f32.gmra.mxu0 %v170
  %v412 = vpop.f32.mrf.mxu0
  %v413 = vadd.f32 0.0, %v412
  %v414 = vpop.f32.mrf.mxu0
  %415 = vmatprep.mubr.f32.mxu0 0.0
  %416 = vmatmul.mubr.f32.gmra.mxu0 %v171
  %v417 = vpop.f32.mrf.mxu0
  %v418 = vadd.f32 0.0, %v417
  %v419 = vpop.f32.mrf.mxu0
  %420 = vmatprep.mubr.f32.mxu0 0.0
  %421 = vmatmul.mubr.f32.gmra.mxu0 %v172
  %v422 = vpop.f32.mrf.mxu0
  %v423 = vadd.f32 0.0, %v422
  %v424 = vpop.f32.mrf.mxu0
  %425 = vmatprep.mubr.f32.mxu0 0.0
  %426 = vmatmul.mubr.f32.gmra.mxu0 %v173
  %v427 = vpop.f32.mrf.mxu0
  %v428 = vadd.f32 0.0, %v427
  %v429 = vpop.f32.mrf.mxu0
  %430 = vmatprep.mubr.f32.mxu0 0.0
  %431 = vmatmul.mubr.f32.gmra.mxu0 %v174
  %v432 = vpop.f32.mrf.mxu0
  %v433 = vadd.f32 0.0, %v432
  %v434 = vpop.f32.mrf.mxu0
  %435 = vmatprep.mubr.f32.mxu0 0.0
  %436 = vmatmul.mubr.f32.gmra.mxu0 %v175
  %v437 = vpop.f32.mrf.mxu0
  %v438 = vadd.f32 0.0, %v437
  %v439 = vpop.f32.mrf.mxu0
  %440 = vmatprep.mubr.f32.mxu0 0.0
  %441 = vmatmul.mubr.f32.gmra.mxu0 %v176
  %v442 = vpop.f32.mrf.mxu0
  %v443 = vadd.f32 0.0, %v442
  %v444 = vpop.f32.mrf.mxu0
  %445 = vmatprep.mubr.f32.mxu0 0.0
  %446 = vmatmul.mubr.f32.gmra.mxu0 %v177
  %v447 = vpop.f32.mrf.mxu0
  %v448 = vadd.f32 0.0, %v447
  %v449 = vpop.f32.mrf.mxu0
  %450 = vmatprep.mubr.f32.mxu0 0.0
  %451 = vmatmul.mubr.f32.gmra.mxu0 %v178
  %v452 = vpop.f32.mrf.mxu0
  %v453 = vadd.f32 0.0, %v452
  %v454 = vpop.f32.mrf.mxu0
  %455 = vmatprep.mubr.f32.mxu0 0.0
  %456 = vmatmul.mubr.f32.gmra.mxu0 %v179
  %v457 = vpop.f32.mrf.mxu0
  %v458 = vadd.f32 0.0, %v457
  %v459 = vpop.f32.mrf.mxu0
  %460 = vmatprep.mubr.f32.mxu0 0.0
  %461 = vmatmul.mubr.f32.gmra.mxu0 %v180
  %v462 = vpop.f32.mrf.mxu0
  %v463 = vadd.f32 0.0, %v462
  %v464 = vpop.f32.mrf.mxu0
  %465 = vmatprep.mubr.f32.mxu0 0.0
  %466 = vmatmul.mubr.f32.gmra.mxu0 %v181
  %v467 = vpop.f32.mrf.mxu0
  %v468 = vadd.f32 0.0, %v467
  %v469 = vpop.f32.mrf.mxu0
  %470 = vmatprep.mubr.f32.mxu0 0.0
  %471 = vmatmul.mubr.f32.gmra.mxu0 %v182
  %v472 = vpop.f32.mrf.mxu0
  %v473 = vadd.f32 0.0, %v472
  %v474 = vpop.f32.mrf.mxu0
  %475 = vmatprep.mubr.f32.mxu0 0.0
  %476 = vmatmul.mubr.f32.gmra.mxu0 %v183
  %v477 = vpop.f32.mrf.mxu0
  %v478 = vadd.f32 0.0, %v477
  %v479 = vpop.f32.mrf.mxu0
  %480 = vmatprep.mubr.f32.mxu0 0.0
  %481 = vmatmul.mubr.f32.gmra.mxu0 %v184
  %v482 = vpop.f32.mrf.mxu0
  %v483 = vadd.f32 0.0, %v482
  %v484 = vpop.f32.mrf.mxu0
  %485 = vmatprep.mubr.f32.mxu0 0.0
  %486 = vmatmul.mubr.f32.gmra.mxu0 %v185
  %v487 = vpop.f32.mrf.mxu0
  %v488 = vadd.f32 0.0, %v487
  %v489 = vpop.f32.mrf.mxu0
  %490 = vmatprep.mubr.f32.mxu0 0.0
  %491 = vmatmul.mubr.f32.gmra.mxu0 %v186
  %v492 = vpop.f32.mrf.mxu0
  %v493 = vadd.f32 0.0, %v492
  %v494 = vpop.f32.mrf.mxu0
  %495 = vmatprep.mubr.f32.mxu0 0.0
  %496 = vmatmul.mubr.f32.gmra.mxu0 %v187
  %v497 = vpop.f32.mrf.mxu0
  %v498 = vadd.f32 0.0, %v497
  %v499 = vpop.f32.mrf.mxu0
  %500 = vmatprep.mubr.f32.mxu0 0.0
  %501 = vmatmul.mubr.f32.gmra.mxu0 %v188
  %v502 = vpop.f32.mrf.mxu0
  %v503 = vadd.f32 0.0, %v502
  %v504 = vpop.f32.mrf.mxu0
  %505 = vmatprep.mubr.f32.mxu0 0.0
  %506 = vmatmul.mubr.f32.gmra.mxu0 %v189
  %v507 = vpop.f32.mrf.mxu0
  %v508 = vadd.f32 0.0, %v507
  %v509 = vpop.f32.mrf.mxu0
  %510 = vmatprep.mubr.f32.mxu0 0.0
  %511 = vmatmul.mubr.f32.gmra.mxu0 %v190
  %v512 = vpop.f32.mrf.mxu0
  %v513 = vadd.f32 0.0, %v512
  %v514 = vpop.f32.mrf.mxu0
  %515 = vmatprep.mubr.f32.mxu0 0.0
  %516 = vmatmul.mubr.f32.gmra.mxu0 %v191
  %v517 = vpop.f32.mrf.mxu0
  %v518 = vadd.f32 0.0, %v517
  %v519 = vpop.f32.mrf.mxu0
  %520 = vmatprep.mubr.f32.mxu0 0.0
  %521 = vmatmul.mubr.f32.gmra.mxu0 %v192
  %v522 = vpop.f32.mrf.mxu0
  %v523 = vadd.f32 0.0, %v522
  %v524 = vpop.f32.mrf.mxu0
  %525 = vmatprep.mubr.f32.mxu0 0.0
  %526 = vmatmul.mubr.f32.gmra.mxu0 %v193
  %v527 = vpop.f32.mrf.mxu0
  %v528 = vadd.f32 0.0, %v527
  %v529 = vpop.f32.mrf.mxu0
  %530 = vmatprep.mubr.f32.mxu0 0.0
  %531 = vmatmul.mubr.f32.gmra.mxu0 %v194
  %v532 = vpop.f32.mrf.mxu0
  %v533 = vadd.f32 0.0, %v532
  %v534 = vpop.f32.mrf.mxu0
  %535 = vmatprep.mubr.f32.mxu0 0.0
  %536 = vmatmul.mubr.f32.gmra.mxu0 %v195
  %v537 = vpop.f32.mrf.mxu0
  %v538 = vadd.f32 0.0, %v537
  %v539 = vpop.f32.mrf.mxu0
  %540 = vmatprep.mubr.f32.mxu0 0.0
  %541 = vmatmul.mubr.f32.gmra.mxu0 %v196
  %v542 = vpop.f32.mrf.mxu0
  %v543 = vadd.f32 0.0, %v542
  %v544 = vpop.f32.mrf.mxu0
  %545 = vmatprep.mubr.f32.mxu0 0.0
  %546 = vmatmul.mubr.f32.gmra.mxu0 %v197
  %v547 = vpop.f32.mrf.mxu0
  %v548 = vadd.f32 0.0, %v547
  %v549 = vpop.f32.mrf.mxu0
  %550 = vmatprep.mubr.f32.mxu0 0.0
  %551 = vmatmul.mubr.f32.gmra.mxu0 %v198
  %v552 = vpop.f32.mrf.mxu0
  %v553 = vadd.f32 0.0, %v552
  %v554 = vpop.f32.mrf.mxu0
  %555 = vmatprep.mubr.f32.mxu0 0.0
  %556 = vmatmul.mubr.f32.gmra.mxu0 %v199
  %v557 = vpop.f32.mrf.mxu0
  %v558 = vadd.f32 0.0, %v557
  %v559 = vpop.f32.mrf.mxu0
  %560 = vmatprep.mubr.f32.mxu0 0.0
  %561 = vmatmul.mubr.f32.gmra.mxu0 %v200
  %v562 = vpop.f32.mrf.mxu0
  %v563 = vadd.f32 0.0, %v562
  %v564 = vpop.f32.mrf.mxu0
  %565 = vmatprep.mubr.f32.mxu0 0.0
  %566 = vmatmul.mubr.f32.gmra.mxu0 %v201
  %v567 = vpop.f32.mrf.mxu0
  %v568 = vadd.f32 0.0, %v567
  %v569 = vpop.f32.mrf.mxu0
  %570 = vmatprep.mubr.f32.mxu0 0.0
  %571 = vmatmul.mubr.f32.gmra.mxu0 %v202
  %v572 = vpop.f32.mrf.mxu0
  %v573 = vadd.f32 0.0, %v572
  %v574 = vpop.f32.mrf.mxu0
  %575 = vmatprep.mubr.f32.mxu0 0.0
  %576 = vmatmul.mubr.f32.gmra.mxu0 %v203
  %v577 = vpop.f32.mrf.mxu0
  %v578 = vadd.f32 0.0, %v577
  %v579 = vpop.f32.mrf.mxu0
  %580 = vmatprep.mubr.f32.mxu0 0.0
  %581 = vmatmul.mubr.f32.gmra.mxu0 %v204
  %v582 = vpop.f32.mrf.mxu0
  %v583 = vadd.f32 0.0, %v582
  %v584 = vpop.f32.mrf.mxu0
  %585 = vmatprep.mubr.f32.mxu0 0.0
  %586 = vmatmul.mubr.f32.gmra.mxu0 %v205
  %v587 = vpop.f32.mrf.mxu0
  %v588 = vadd.f32 0.0, %v587
  %v589 = vpop.f32.mrf.mxu0
  %590 = vmatprep.mubr.f32.mxu0 0.0
  %591 = vmatmul.mubr.f32.gmra.mxu0 %v206
  %v592 = vpop.f32.mrf.mxu0
  %v593 = vadd.f32 0.0, %v592
  %v594 = vpop.f32.mrf.mxu0
  %595 = vmatprep.mubr.f32.mxu0 0.0
  %596 = vmatmul.mubr.f32.gmra.mxu0 %v207
  %v597 = vpop.f32.mrf.mxu0
  %v598 = vadd.f32 0.0, %v597
  %v599 = vpop.f32.mrf.mxu0
  %600 = vmatprep.mubr.f32.mxu0 0.0
  %601 = vmatmul.mubr.f32.gmra.mxu0 %v208
  %v602 = vpop.f32.mrf.mxu0
  %v603 = vadd.f32 0.0, %v602
  %v604 = vpop.f32.mrf.mxu0
  %605 = vmatprep.mubr.f32.mxu0 0.0
  %606 = vmatmul.mubr.f32.gmra.mxu0 %v209
  %v607 = vpop.f32.mrf.mxu0
  %v608 = vadd.f32 0.0, %v607
  %v609 = vpop.f32.mrf.mxu0
  %610 = vdwg.mxu0
  %v611 = vadd.f32 %v82, %v293
  %v612 = vadd.f32 %v83, %v298
  %v613 = vadd.f32 %v84, %v303
  %v614 = vadd.f32 %v85, %v308
  %v615 = vadd.f32 %v86, %v313
  %v616 = vadd.f32 %v87, %v318
  %v617 = vadd.f32 %v88, %v323
  %v618 = vadd.f32 %v89, %v328
  %v619 = vadd.f32 %v90, %v333
  %v620 = vadd.f32 %v91, %v338
  %v621 = vadd.f32 %v92, %v343
  %v622 = vadd.f32 %v93, %v348
  %v623 = vadd.f32 %v94, %v353
  %v624 = vadd.f32 %v95, %v358
  %v625 = vadd.f32 %v96, %v363
  %v626 = vadd.f32 %v97, %v368
  %v627 = vadd.f32 %v98, %v373
  %v628 = vadd.f32 %v99, %v378
  %v629 = vadd.f32 %v100, %v383
  %v630 = vadd.f32 %v101, %v388
  %v631 = vadd.f32 %v102, %v393
  %v632 = vadd.f32 %v103, %v398
  %v633 = vadd.f32 %v104, %v403
  %v634 = vadd.f32 %v105, %v408
  %v635 = vadd.f32 %v106, %v413
  %v636 = vadd.f32 %v107, %v418
  %v637 = vadd.f32 %v108, %v423
  %v638 = vadd.f32 %v109, %v428
  %v639 = vadd.f32 %v110, %v433
  %v640 = vadd.f32 %v111, %v438
  %v641 = vadd.f32 %v112, %v443
  %v642 = vadd.f32 %v113, %v448
  %v643 = vadd.f32 %v114, %v453
  %v644 = vadd.f32 %v115, %v458
  %v645 = vadd.f32 %v116, %v463
  %v646 = vadd.f32 %v117, %v468
  %v647 = vadd.f32 %v118, %v473
  %v648 = vadd.f32 %v119, %v478
  %v649 = vadd.f32 %v120, %v483
  %v650 = vadd.f32 %v121, %v488
  %v651 = vadd.f32 %v122, %v493
  %v652 = vadd.f32 %v123, %v498
  %v653 = vadd.f32 %v124, %v503
  %v654 = vadd.f32 %v125, %v508
  %v655 = vadd.f32 %v126, %v513
  %v656 = vadd.f32 %v127, %v518
  %v657 = vadd.f32 %v128, %v523
  %v658 = vadd.f32 %v129, %v528
  %v659 = vadd.f32 %v130, %v533
  %v660 = vadd.f32 %v131, %v538
  %v661 = vadd.f32 %v132, %v543
  %v662 = vadd.f32 %v133, %v548
  %v663 = vadd.f32 %v134, %v553
  %v664 = vadd.f32 %v135, %v558
  %v665 = vadd.f32 %v136, %v563
  %v666 = vadd.f32 %v137, %v568
  %v667 = vadd.f32 %v138, %v573
  %v668 = vadd.f32 %v139, %v578
  %v669 = vadd.f32 %v140, %v583
  %v670 = vadd.f32 %v141, %v588
  %v671 = vadd.f32 %v142, %v593
  %v672 = vadd.f32 %v143, %v598
  %v673 = vadd.f32 %v144, %v603
  %v674 = vadd.f32 %v145, %v608
  %675 = vst [vmem:[#allocation2] sm:$0xff] %v611
  %676 = vst [vmem:[#allocation2 + $0x8] sm:$0xff] %v612
  %677 = vst [vmem:[#allocation2 + $0x10] sm:$0xff] %v613
  %678 = vst [vmem:[#allocation2 + $0x18] sm:$0xff] %v614
  %679 = vst [vmem:[#allocation2 + $0x20] sm:$0xff] %v615
  %680 = vst [vmem:[#allocation2 + $0x28] sm:$0xff] %v616
  %681 = vst [vmem:[#allocation2 + $0x30] sm:$0xff] %v617
  %682 = vst [vmem:[#allocation2 + $0x38] sm:$0xff] %v618
  %683 = vst [vmem:[#allocation2 + $0x40] sm:$0xff] %v619
  %684 = vst [vmem:[#allocation2 + $0x48] sm:$0xff] %v620
  %685 = vst [vmem:[#allocation2 + $0x50] sm:$0xff] %v621
  %686 = vst [vmem:[#allocation2 + $0x58] sm:$0xff] %v622
  %687 = vst [vmem:[#allocation2 + $0x60] sm:$0xff] %v623
  %688 = vst [vmem:[#allocation2 + $0x68] sm:$0xff] %v624
  %689 = vst [vmem:[#allocation2 + $0x70] sm:$0xff] %v625
  %690 = vst [vmem:[#allocation2 + $0x78] sm:$0xff] %v626
  %691 = vst [vmem:[#allocation2 + $0x80] sm:$0xff] %v627
  %692 = vst [vmem:[#allocation2 + $0x88] sm:$0xff] %v628
  %693 = vst [vmem:[#allocation2 + $0x90] sm:$0xff] %v629
  %694 = vst [vmem:[#allocation2 + $0x98] sm:$0xff] %v630
  %695 = vst [vmem:[#allocation2 + $0xa0] sm:$0xff] %v631
  %696 = vst [vmem:[#allocation2 + $0xa8] sm:$0xff] %v632
  %697 = vst [vmem:[#allocation2 + $0xb0] sm:$0xff] %v633
  %698 = vst [vmem:[#allocation2 + $0xb8] sm:$0xff] %v634
  %699 = vst [vmem:[#allocation2 + $0xc0] sm:$0xff] %v635
  %700 = vst [vmem:[#allocation2 + $0xc8] sm:$0xff] %v636
  %701 = vst [vmem:[#allocation2 + $0xd0] sm:$0xff] %v637
  %702 = vst [vmem:[#allocation2 + $0xd8] sm:$0xff] %v638
  %703 = vst [vmem:[#allocation2 + $0xe0] sm:$0xff] %v639
  %704 = vst [vmem:[#allocation2 + $0xe8] sm:$0xff] %v640
  %705 = vst [vmem:[#allocation2 + $0xf0] sm:$0xff] %v641
  %706 = vst [vmem:[#allocation2 + $0xf8] sm:$0xff] %v642
  %707 = vst [vmem:[#allocation2 + $0x100] sm:$0xff] %v643
  %708 = vst [vmem:[#allocation2 + $0x108] sm:$0xff] %v644
  %709 = vst [vmem:[#allocation2 + $0x110] sm:$0xff] %v645
  %710 = vst [vmem:[#allocation2 + $0x118] sm:$0xff] %v646
  %711 = vst [vmem:[#allocation2 + $0x120] sm:$0xff] %v647
  %712 = vst [vmem:[#allocation2 + $0x128] sm:$0xff] %v648
  %713 = vst [vmem:[#allocation2 + $0x130] sm:$0xff] %v649
  %714 = vst [vmem:[#allocation2 + $0x138] sm:$0xff] %v650
  %715 = vst [vmem:[#allocation2 + $0x140] sm:$0xff] %v651
  %716 = vst [vmem:[#allocation2 + $0x148] sm:$0xff] %v652
  %717 = vst [vmem:[#allocation2 + $0x150] sm:$0xff] %v653
  %718 = vst [vmem:[#allocation2 + $0x158] sm:$0xff] %v654
  %719 = vst [vmem:[#allocation2 + $0x160] sm:$0xff] %v655
  %720 = vst [vmem:[#allocation2 + $0x168] sm:$0xff] %v656
  %721 = vst [vmem:[#allocation2 + $0x170] sm:$0xff] %v657
  %722 = vst [vmem:[#allocation2 + $0x178] sm:$0xff] %v658
  %723 = vst [vmem:[#allocation2 + $0x180] sm:$0xff] %v659
  %724 = vst [vmem:[#allocation2 + $0x188] sm:$0xff] %v660
  %725 = vst [vmem:[#allocation2 + $0x190] sm:$0xff] %v661
  %726 = vst [vmem:[#allocation2 + $0x198] sm:$0xff] %v662
  %727 = vst [vmem:[#allocation2 + $0x1a0] sm:$0xff] %v663
  %728 = vst [vmem:[#allocation2 + $0x1a8] sm:$0xff] %v664
  %729 = vst [vmem:[#allocation2 + $0x1b0] sm:$0xff] %v665
  %730 = vst [vmem:[#allocation2 + $0x1b8] sm:$0xff] %v666
  %731 = vst [vmem:[#allocation2 + $0x1c0] sm:$0xff] %v667
  %732 = vst [vmem:[#allocation2 + $0x1c8] sm:$0xff] %v668
  %733 = vst [vmem:[#allocation2 + $0x1d0] sm:$0xff] %v669
  %734 = vst [vmem:[#allocation2 + $0x1d8] sm:$0xff] %v670
  %735 = vst [vmem:[#allocation2 + $0x1e0] sm:$0xff] %v671
  %736 = vst [vmem:[#allocation2 + $0x1e8] sm:$0xff] %v672
  %737 = vst [vmem:[#allocation2 + $0x1f0] sm:$0xff] %v673
  %738 = vst [vmem:[#allocation2 + $0x1f8] sm:$0xff] %v674
  // Predicated region
  $region18: #{discriminator_forward.8} parent=0 // pred_check
    %p739 = pneg %p14
  $region19: #{discriminator_forward.8} parent=0 // pred_check_branch
    %741 = sbr.rel (%p739) target = $region21
  $region20: #{discriminator_forward.8} parent=0 // pred_region
    %v742 = vld [vmem:[#allocation2] sm:$0xff]
    %v743 = vld [vmem:[#allocation2 + $0x8] sm:$0xff]
    %v744 = vld [vmem:[#allocation2 + $0x10] sm:$0xff]
    %v745 = vld [vmem:[#allocation2 + $0x18] sm:$0xff]
    %v746 = vld [vmem:[#allocation2 + $0x20] sm:$0xff]
    %v747 = vld [vmem:[#allocation2 + $0x28] sm:$0xff]
    %v748 = vld [vmem:[#allocation2 + $0x30] sm:$0xff]
    %v749 = vld [vmem:[#allocation2 + $0x38] sm:$0xff]
    %v750 = vld [vmem:[#allocation2 + $0x40] sm:$0xff]
    %v751 = vld [vmem:[#allocation2 + $0x48] sm:$0xff]
    %v752 = vld [vmem:[#allocation2 + $0x50] sm:$0xff]
    %v753 = vld [vmem:[#allocation2 + $0x58] sm:$0xff]
    %v754 = vld [vmem:[#allocation2 + $0x60] sm:$0xff]
    %v755 = vld [vmem:[#allocation2 + $0x68] sm:$0xff]
    %v756 = vld [vmem:[#allocation2 + $0x70] sm:$0xff]
    %v757 = vld [vmem:[#allocation2 + $0x78] sm:$0xff]
    %v758 = vld [vmem:[#allocation2 + $0x80] sm:$0xff]
    %v759 = vld [vmem:[#allocation2 + $0x88] sm:$0xff]
    %v760 = vld [vmem:[#allocation2 + $0x90] sm:$0xff]
    %v761 = vld [vmem:[#allocation2 + $0x98] sm:$0xff]
    %v762 = vld [vmem:[#allocation2 + $0xa0] sm:$0xff]
    %v763 = vld [vmem:[#allocation2 + $0xa8] sm:$0xff]
    %v764 = vld [vmem:[#allocation2 + $0xb0] sm:$0xff]
    %v765 = vld [vmem:[#allocation2 + $0xb8] sm:$0xff]
    %v766 = vld [vmem:[#allocation2 + $0xc0] sm:$0xff]
    %v767 = vld [vmem:[#allocation2 + $0xc8] sm:$0xff]
    %v768 = vld [vmem:[#allocation2 + $0xd0] sm:$0xff]
    %v769 = vld [vmem:[#allocation2 + $0xd8] sm:$0xff]
    %v770 = vld [vmem:[#allocation2 + $0xe0] sm:$0xff]
    %v771 = vld [vmem:[#allocation2 + $0xe8] sm:$0xff]
    %v772 = vld [vmem:[#allocation2 + $0xf0] sm:$0xff]
    %v773 = vld [vmem:[#allocation2 + $0xf8] sm:$0xff]
    %v774 = vld [vmem:[#allocation2 + $0x100] sm:$0xff]
    %v775 = vld [vmem:[#allocation2 + $0x108] sm:$0xff]
    %v776 = vld [vmem:[#allocation2 + $0x110] sm:$0xff]
    %v777 = vld [vmem:[#allocation2 + $0x118] sm:$0xff]
    %v778 = vld [vmem:[#allocation2 + $0x120] sm:$0xff]
    %v779 = vld [vmem:[#allocation2 + $0x128] sm:$0xff]
    %v780 = vld [vmem:[#allocation2 + $0x130] sm:$0xff]
    %v781 = vld [vmem:[#allocation2 + $0x138] sm:$0xff]
    %v782 = vld [vmem:[#allocation2 + $0x140] sm:$0xff]
    %v783 = vld [vmem:[#allocation2 + $0x148] sm:$0xff]
    %v784 = vld [vmem:[#allocation2 + $0x150] sm:$0xff]
    %v785 = vld [vmem:[#allocation2 + $0x158] sm:$0xff]
    %v786 = vld [vmem:[#allocation2 + $0x160] sm:$0xff]
    %v787 = vld [vmem:[#allocation2 + $0x168] sm:$0xff]
    %v788 = vld [vmem:[#allocation2 + $0x170] sm:$0xff]
    %v789 = vld [vmem:[#allocation2 + $0x178] sm:$0xff]
    %v790 = vld [vmem:[#allocation2 + $0x180] sm:$0xff]
    %v791 = vld [vmem:[#allocation2 + $0x188] sm:$0xff]
    %v792 = vld [vmem:[#allocation2 + $0x190] sm:$0xff]
    %v793 = vld [vmem:[#allocation2 + $0x198] sm:$0xff]
    %v794 = vld [vmem:[#allocation2 + $0x1a0] sm:$0xff]
    %v795 = vld [vmem:[#allocation2 + $0x1a8] sm:$0xff]
    %v796 = vld [vmem:[#allocation2 + $0x1b0] sm:$0xff]
    %v797 = vld [vmem:[#allocation2 + $0x1b8] sm:$0xff]
    %v798 = vld [vmem:[#allocation2 + $0x1c0] sm:$0xff]
    %v799 = vld [vmem:[#allocation2 + $0x1c8] sm:$0xff]
    %v800 = vld [vmem:[#allocation2 + $0x1d0] sm:$0xff]
    %v801 = vld [vmem:[#allocation2 + $0x1d8] sm:$0xff]
    %v802 = vld [vmem:[#allocation2 + $0x1e0] sm:$0xff]
    %v803 = vld [vmem:[#allocation2 + $0x1e8] sm:$0xff]
    %v804 = vld [vmem:[#allocation2 + $0x1f0] sm:$0xff]
    %v805 = vld [vmem:[#allocation2 + $0x1f8] sm:$0xff]
    %v806 = vld [vmem:[%s2] sm:$0x1]
    %v808 = vlaneseq
    %v809 = vshrl.u32 %v808, 7
    %v810 = vsub.s32 0, %v809
    %v811 = vrot.slane %v806, %v810
    %v813 = vadd.f32 %v742, %v811
    %v814 = vadd.f32 %v743, %v811
    %v815 = vadd.f32 %v744, %v811
    %v816 = vadd.f32 %v745, %v811
    %v817 = vadd.f32 %v746, %v811
    %v818 = vadd.f32 %v747, %v811
    %v819 = vadd.f32 %v748, %v811
    %v820 = vadd.f32 %v749, %v811
    %v821 = vadd.f32 %v750, %v811
    %v822 = vadd.f32 %v751, %v811
    %v823 = vadd.f32 %v752, %v811
    %v824 = vadd.f32 %v753, %v811
    %v825 = vadd.f32 %v754, %v811
    %v826 = vadd.f32 %v755, %v811
    %v827 = vadd.f32 %v756, %v811
    %v828 = vadd.f32 %v757, %v811
    %v829 = vadd.f32 %v758, %v811
    %v830 = vadd.f32 %v759, %v811
    %v831 = vadd.f32 %v760, %v811
    %v832 = vadd.f32 %v761, %v811
    %v833 = vadd.f32 %v762, %v811
    %v834 = vadd.f32 %v763, %v811
    %v835 = vadd.f32 %v764, %v811
    %v836 = vadd.f32 %v765, %v811
    %v837 = vadd.f32 %v766, %v811
    %v838 = vadd.f32 %v767, %v811
    %v839 = vadd.f32 %v768, %v811
    %v840 = vadd.f32 %v769, %v811
    %v841 = vadd.f32 %v770, %v811
    %v842 = vadd.f32 %v771, %v811
    %v843 = vadd.f32 %v772, %v811
    %v844 = vadd.f32 %v773, %v811
    %v845 = vadd.f32 %v774, %v811
    %v846 = vadd.f32 %v775, %v811
    %v847 = vadd.f32 %v776, %v811
    %v848 = vadd.f32 %v777, %v811
    %v849 = vadd.f32 %v778, %v811
    %v850 = vadd.f32 %v779, %v811
    %v851 = vadd.f32 %v780, %v811
    %v852 = vadd.f32 %v781, %v811
    %v853 = vadd.f32 %v782, %v811
    %v854 = vadd.f32 %v783, %v811
    %v855 = vadd.f32 %v784, %v811
    %v856 = vadd.f32 %v785, %v811
    %v857 = vadd.f32 %v786, %v811
    %v858 = vadd.f32 %v787, %v811
    %v859 = vadd.f32 %v788, %v811
    %v860 = vadd.f32 %v789, %v811
    %v861 = vadd.f32 %v790, %v811
    %v862 = vadd.f32 %v791, %v811
    %v863 = vadd.f32 %v792, %v811
    %v864 = vadd.f32 %v793, %v811
    %v865 = vadd.f32 %v794, %v811
    %v866 = vadd.f32 %v795, %v811
    %v867 = vadd.f32 %v796, %v811
    %v868 = vadd.f32 %v797, %v811
    %v869 = vadd.f32 %v798, %v811
    %v870 = vadd.f32 %v799, %v811
    %v871 = vadd.f32 %v800, %v811
    %v872 = vadd.f32 %v801, %v811
    %v873 = vadd.f32 %v802, %v811
    %v874 = vadd.f32 %v803, %v811
    %v875 = vadd.f32 %v804, %v811
    %v876 = vadd.f32 %v805, %v811
    %vm877 = vcmp.ge.f32.partialorder %v813, 0.0
    %vm878 = vcmp.ge.f32.partialorder %v814, 0.0
    %vm879 = vcmp.ge.f32.partialorder %v815, 0.0
    %vm880 = vcmp.ge.f32.partialorder %v816, 0.0
    %vm881 = vcmp.ge.f32.partialorder %v817, 0.0
    %vm882 = vcmp.ge.f32.partialorder %v818, 0.0
    %vm883 = vcmp.ge.f32.partialorder %v819, 0.0
    %vm884 = vcmp.ge.f32.partialorder %v820, 0.0
    %vm885 = vcmp.ge.f32.partialorder %v821, 0.0
    %vm886 = vcmp.ge.f32.partialorder %v822, 0.0
    %vm887 = vcmp.ge.f32.partialorder %v823, 0.0
    %vm888 = vcmp.ge.f32.partialorder %v824, 0.0
    %vm889 = vcmp.ge.f32.partialorder %v825, 0.0
    %vm890 = vcmp.ge.f32.partialorder %v826, 0.0
    %vm891 = vcmp.ge.f32.partialorder %v827, 0.0
    %vm892 = vcmp.ge.f32.partialorder %v828, 0.0
    %vm893 = vcmp.ge.f32.partialorder %v829, 0.0
    %vm894 = vcmp.ge.f32.partialorder %v830, 0.0
    %vm895 = vcmp.ge.f32.partialorder %v831, 0.0
    %vm896 = vcmp.ge.f32.partialorder %v832, 0.0
    %vm897 = vcmp.ge.f32.partialorder %v833, 0.0
    %vm898 = vcmp.ge.f32.partialorder %v834, 0.0
    %vm899 = vcmp.ge.f32.partialorder %v835, 0.0
    %vm900 = vcmp.ge.f32.partialorder %v836, 0.0
    %vm901 = vcmp.ge.f32.partialorder %v837, 0.0
    %vm902 = vcmp.ge.f32.partialorder %v838, 0.0
    %vm903 = vcmp.ge.f32.partialorder %v839, 0.0
    %vm904 = vcmp.ge.f32.partialorder %v840, 0.0
    %vm905 = vcmp.ge.f32.partialorder %v841, 0.0
    %vm906 = vcmp.ge.f32.partialorder %v842, 0.0
    %vm907 = vcmp.ge.f32.partialorder %v843, 0.0
    %vm908 = vcmp.ge.f32.partialorder %v844, 0.0
    %vm909 = vcmp.ge.f32.partialorder %v845, 0.0
    %vm910 = vcmp.ge.f32.partialorder %v846, 0.0
    %vm911 = vcmp.ge.f32.partialorder %v847, 0.0
    %vm912 = vcmp.ge.f32.partialorder %v848, 0.0
    %vm913 = vcmp.ge.f32.partialorder %v849, 0.0
    %vm914 = vcmp.ge.f32.partialorder %v850, 0.0
    %vm915 = vcmp.ge.f32.partialorder %v851, 0.0
    %vm916 = vcmp.ge.f32.partialorder %v852, 0.0
    %vm917 = vcmp.ge.f32.partialorder %v853, 0.0
    %vm918 = vcmp.ge.f32.partialorder %v854, 0.0
    %vm919 = vcmp.ge.f32.partialorder %v855, 0.0
    %vm920 = vcmp.ge.f32.partialorder %v856, 0.0
    %vm921 = vcmp.ge.f32.partialorder %v857, 0.0
    %vm922 = vcmp.ge.f32.partialorder %v858, 0.0
    %vm923 = vcmp.ge.f32.partialorder %v859, 0.0
    %vm924 = vcmp.ge.f32.partialorder %v860, 0.0
    %vm925 = vcmp.ge.f32.partialorder %v861, 0.0
    %vm926 = vcmp.ge.f32.partialorder %v862, 0.0
    %vm927 = vcmp.ge.f32.partialorder %v863, 0.0
    %vm928 = vcmp.ge.f32.partialorder %v864, 0.0
    %vm929 = vcmp.ge.f32.partialorder %v865, 0.0
    %vm930 = vcmp.ge.f32.partialorder %v866, 0.0
    %vm931 = vcmp.ge.f32.partialorder %v867, 0.0
    %vm932 = vcmp.ge.f32.partialorder %v868, 0.0
    %vm933 = vcmp.ge.f32.partialorder %v869, 0.0
    %vm934 = vcmp.ge.f32.partialorder %v870, 0.0
    %vm935 = vcmp.ge.f32.partialorder %v871, 0.0
    %vm936 = vcmp.ge.f32.partialorder %v872, 0.0
    %vm937 = vcmp.ge.f32.partialorder %v873, 0.0
    %vm938 = vcmp.ge.f32.partialorder %v874, 0.0
    %vm939 = vcmp.ge.f32.partialorder %v875, 0.0
    %vm940 = vcmp.ge.f32.partialorder %v876, 0.0
    %v941 = vmul.f32 %v813, 0.2
    %v942 = vmul.f32 %v814, 0.2
    %v943 = vmul.f32 %v815, 0.2
    %v944 = vmul.f32 %v816, 0.2
    %v945 = vmul.f32 %v817, 0.2
    %v946 = vmul.f32 %v818, 0.2
    %v947 = vmul.f32 %v819, 0.2
    %v948 = vmul.f32 %v820, 0.2
    %v949 = vmul.f32 %v821, 0.2
    %v950 = vmul.f32 %v822, 0.2
    %v951 = vmul.f32 %v823, 0.2
    %v952 = vmul.f32 %v824, 0.2
    %v953 = vmul.f32 %v825, 0.2
    %v954 = vmul.f32 %v826, 0.2
    %v955 = vmul.f32 %v827, 0.2
    %v956 = vmul.f32 %v828, 0.2
    %v957 = vmul.f32 %v829, 0.2
    %v958 = vmul.f32 %v830, 0.2
    %v959 = vmul.f32 %v831, 0.2
    %v960 = vmul.f32 %v832, 0.2
    %v961 = vmul.f32 %v833, 0.2
    %v962 = vmul.f32 %v834, 0.2
    %v963 = vmul.f32 %v835, 0.2
    %v964 = vmul.f32 %v836, 0.2
    %v965 = vmul.f32 %v837, 0.2
    %v966 = vmul.f32 %v838, 0.2
    %v967 = vmul.f32 %v839, 0.2
    %v968 = vmul.f32 %v840, 0.2
    %v969 = vmul.f32 %v841, 0.2
    %v970 = vmul.f32 %v842, 0.2
    %v971 = vmul.f32 %v843, 0.2
    %v972 = vmul.f32 %v844, 0.2
    %v973 = vmul.f32 %v845, 0.2
    %v974 = vmul.f32 %v846, 0.2
    %v975 = vmul.f32 %v847, 0.2
    %v976 = vmul.f32 %v848, 0.2
    %v977 = vmul.f32 %v849, 0.2
    %v978 = vmul.f32 %v850, 0.2
    %v979 = vmul.f32 %v851, 0.2
    %v980 = vmul.f32 %v852, 0.2
    %v981 = vmul.f32 %v853, 0.2
    %v982 = vmul.f32 %v854, 0.2
    %v983 = vmul.f32 %v855, 0.2
    %v984 = vmul.f32 %v856, 0.2
    %v985 = vmul.f32 %v857, 0.2
    %v986 = vmul.f32 %v858, 0.2
    %v987 = vmul.f32 %v859, 0.2
    %v988 = vmul.f32 %v860, 0.2
    %v989 = vmul.f32 %v861, 0.2
    %v990 = vmul.f32 %v862, 0.2
    %v991 = vmul.f32 %v863, 0.2
    %v992 = vmul.f32 %v864, 0.2
    %v993 = vmul.f32 %v865, 0.2
    %v994 = vmul.f32 %v866, 0.2
    %v995 = vmul.f32 %v867, 0.2
    %v996 = vmul.f32 %v868, 0.2
    %v997 = vmul.f32 %v869, 0.2
    %v998 = vmul.f32 %v870, 0.2
    %v999 = vmul.f32 %v871, 0.2
    %v1000 = vmul.f32 %v872, 0.2
    %v1001 = vmul.f32 %v873, 0.2
    %v1002 = vmul.f32 %v874, 0.2
    %v1003 = vmul.f32 %v875, 0.2
    %v1004 = vmul.f32 %v876, 0.2
    %v1005 = vsel %vm877, %v813, %v941
    %v1006 = vsel %vm878, %v814, %v942
    %v1007 = vsel %vm879, %v815, %v943
    %v1008 = vsel %vm880, %v816, %v944
    %v1009 = vsel %vm881, %v817, %v945
    %v1010 = vsel %vm882, %v818, %v946
    %v1011 = vsel %vm883, %v819, %v947
    %v1012 = vsel %vm884, %v820, %v948
    %v1013 = vsel %vm885, %v821, %v949
    %v1014 = vsel %vm886, %v822, %v950
    %v1015 = vsel %vm887, %v823, %v951
    %v1016 = vsel %vm888, %v824, %v952
    %v1017 = vsel %vm889, %v825, %v953
    %v1018 = vsel %vm890, %v826, %v954
    %v1019 = vsel %vm891, %v827, %v955
    %v1020 = vsel %vm892, %v828, %v956
    %v1021 = vsel %vm893, %v829, %v957
    %v1022 = vsel %vm894, %v830, %v958
    %v1023 = vsel %vm895, %v831, %v959
    %v1024 = vsel %vm896, %v832, %v960
    %v1025 = vsel %vm897, %v833, %v961
    %v1026 = vsel %vm898, %v834, %v962
    %v1027 = vsel %vm899, %v835, %v963
    %v1028 = vsel %vm900, %v836, %v964
    %v1029 = vsel %vm901, %v837, %v965
    %v1030 = vsel %vm902, %v838, %v966
    %v1031 = vsel %vm903, %v839, %v967
    %v1032 = vsel %vm904, %v840, %v968
    %v1033 = vsel %vm905, %v841, %v969
    %v1034 = vsel %vm906, %v842, %v970
    %v1035 = vsel %vm907, %v843, %v971
    %v1036 = vsel %vm908, %v844, %v972
    %v1037 = vsel %vm909, %v845, %v973
    %v1038 = vsel %vm910, %v846, %v974
    %v1039 = vsel %vm911, %v847, %v975
    %v1040 = vsel %vm912, %v848, %v976
    %v1041 = vsel %vm913, %v849, %v977
    %v1042 = vsel %vm914, %v850, %v978
    %v1043 = vsel %vm915, %v851, %v979
    %v1044 = vsel %vm916, %v852, %v980
    %v1045 = vsel %vm917, %v853, %v981
    %v1046 = vsel %vm918, %v854, %v982
    %v1047 = vsel %vm919, %v855, %v983
    %v1048 = vsel %vm920, %v856, %v984
    %v1049 = vsel %vm921, %v857, %v985
    %v1050 = vsel %vm922, %v858, %v986
    %v1051 = vsel %vm923, %v859, %v987
    %v1052 = vsel %vm924, %v860, %v988
    %v1053 = vsel %vm925, %v861, %v989
    %v1054 = vsel %vm926, %v862, %v990
    %v1055 = vsel %vm927, %v863, %v991
    %v1056 = vsel %vm928, %v864, %v992
    %v1057 = vsel %vm929, %v865, %v993
    %v1058 = vsel %vm930, %v866, %v994
    %v1059 = vsel %vm931, %v867, %v995
    %v1060 = vsel %vm932, %v868, %v996
    %v1061 = vsel %vm933, %v869, %v997
    %v1062 = vsel %vm934, %v870, %v998
    %v1063 = vsel %vm935, %v871, %v999
    %v1064 = vsel %vm936, %v872, %v1000
    %v1065 = vsel %vm937, %v873, %v1001
    %v1066 = vsel %vm938, %v874, %v1002
    %v1067 = vsel %vm939, %v875, %v1003
    %v1068 = vsel %vm940, %v876, %v1004
    %1069 = vst [vmem:[%s3] sm:$0xff] %v1005
    %1070 = vst [vmem:[%s3 + $0x8] sm:$0xff] %v1006
    %1071 = vst [vmem:[%s3 + $0x10] sm:$0xff] %v1007
    %1072 = vst [vmem:[%s3 + $0x18] sm:$0xff] %v1008
    %1073 = vst [vmem:[%s3 + $0x20] sm:$0xff] %v1009
    %1074 = vst [vmem:[%s3 + $0x28] sm:$0xff] %v1010
    %1075 = vst [vmem:[%s3 + $0x30] sm:$0xff] %v1011
    %1076 = vst [vmem:[%s3 + $0x38] sm:$0xff] %v1012
    %1077 = vst [vmem:[%s3 + $0x40] sm:$0xff] %v1013
    %1078 = vst [vmem:[%s3 + $0x48] sm:$0xff] %v1014
    %1079 = vst [vmem:[%s3 + $0x50] sm:$0xff] %v1015
    %1080 = vst [vmem:[%s3 + $0x58] sm:$0xff] %v1016
    %1081 = vst [vmem:[%s3 + $0x60] sm:$0xff] %v1017
    %1082 = vst [vmem:[%s3 + $0x68] sm:$0xff] %v1018
    %1083 = vst [vmem:[%s3 + $0x70] sm:$0xff] %v1019
    %1084 = vst [vmem:[%s3 + $0x78] sm:$0xff] %v1020
    %1085 = vst [vmem:[%s3 + $0x80] sm:$0xff] %v1021
    %1086 = vst [vmem:[%s3 + $0x88] sm:$0xff] %v1022
    %1087 = vst [vmem:[%s3 + $0x90] sm:$0xff] %v1023
    %1088 = vst [vmem:[%s3 + $0x98] sm:$0xff] %v1024
    %1089 = vst [vmem:[%s3 + $0xa0] sm:$0xff] %v1025
    %1090 = vst [vmem:[%s3 + $0xa8] sm:$0xff] %v1026
    %1091 = vst [vmem:[%s3 + $0xb0] sm:$0xff] %v1027
    %1092 = vst [vmem:[%s3 + $0xb8] sm:$0xff] %v1028
    %1093 = vst [vmem:[%s3 + $0xc0] sm:$0xff] %v1029
    %1094 = vst [vmem:[%s3 + $0xc8] sm:$0xff] %v1030
    %1095 = vst [vmem:[%s3 + $0xd0] sm:$0xff] %v1031
    %1096 = vst [vmem:[%s3 + $0xd8] sm:$0xff] %v1032
    %1097 = vst [vmem:[%s3 + $0xe0] sm:$0xff] %v1033
    %1098 = vst [vmem:[%s3 + $0xe8] sm:$0xff] %v1034
    %1099 = vst [vmem:[%s3 + $0xf0] sm:$0xff] %v1035
    %1100 = vst [vmem:[%s3 + $0xf8] sm:$0xff] %v1036
    %1101 = vst [vmem:[%s3 + $0x100] sm:$0xff] %v1037
    %1102 = vst [vmem:[%s3 + $0x108] sm:$0xff] %v1038
    %1103 = vst [vmem:[%s3 + $0x110] sm:$0xff] %v1039
    %1104 = vst [vmem:[%s3 + $0x118] sm:$0xff] %v1040
    %1105 = vst [vmem:[%s3 + $0x120] sm:$0xff] %v1041
    %1106 = vst [vmem:[%s3 + $0x128] sm:$0xff] %v1042
    %1107 = vst [vmem:[%s3 + $0x130] sm:$0xff] %v1043
    %1108 = vst [vmem:[%s3 + $0x138] sm:$0xff] %v1044
    %1109 = vst [vmem:[%s3 + $0x140] sm:$0xff] %v1045
    %1110 = vst [vmem:[%s3 + $0x148] sm:$0xff] %v1046
    %1111 = vst [vmem:[%s3 + $0x150] sm:$0xff] %v1047
    %1112 = vst [vmem:[%s3 + $0x158] sm:$0xff] %v1048
    %1113 = vst [vmem:[%s3 + $0x160] sm:$0xff] %v1049
    %1114 = vst [vmem:[%s3 + $0x168] sm:$0xff] %v1050
    %1115 = vst [vmem:[%s3 + $0x170] sm:$0xff] %v1051
    %1116 = vst [vmem:[%s3 + $0x178] sm:$0xff] %v1052
    %1117 = vst [vmem:[%s3 + $0x180] sm:$0xff] %v1053
    %1118 = vst [vmem:[%s3 + $0x188] sm:$0xff] %v1054
    %1119 = vst [vmem:[%s3 + $0x190] sm:$0xff] %v1055
    %1120 = vst [vmem:[%s3 + $0x198] sm:$0xff] %v1056
    %1121 = vst [vmem:[%s3 + $0x1a0] sm:$0xff] %v1057
    %1122 = vst [vmem:[%s3 + $0x1a8] sm:$0xff] %v1058
    %1123 = vst [vmem:[%s3 + $0x1b0] sm:$0xff] %v1059
    %1124 = vst [vmem:[%s3 + $0x1b8] sm:$0xff] %v1060
    %1125 = vst [vmem:[%s3 + $0x1c0] sm:$0xff] %v1061
    %1126 = vst [vmem:[%s3 + $0x1c8] sm:$0xff] %v1062
    %1127 = vst [vmem:[%s3 + $0x1d0] sm:$0xff] %v1063
    %1128 = vst [vmem:[%s3 + $0x1d8] sm:$0xff] %v1064
    %1129 = vst [vmem:[%s3 + $0x1e0] sm:$0xff] %v1065
    %1130 = vst [vmem:[%s3 + $0x1e8] sm:$0xff] %v1066
    %1131 = vst [vmem:[%s3 + $0x1f0] sm:$0xff] %v1067
    %1132 = vst [vmem:[%s3 + $0x1f8] sm:$0xff] %v1068
  $region21: #{discriminator_forward.8} parent=0 // pred_fallthru
    _
  // Predicated region
  $region22: #{discriminator_forward.8} parent=0 // pred_check
    _
  $region23: #{discriminator_forward.8} parent=0 // pred_check_branch
    %1134 = sbr.rel (0) target = $region25
  $region24: #{discriminator_forward.8} parent=0 // pred_region
    _
  $region25: #{discriminator_forward.8} parent=0 // pred_fallthru
    _
  // Predicated region
  $region26: #{discriminator_forward.8} parent=0 // pred_check
    _
  $region27: #{discriminator_forward.8} parent=0 // pred_check_branch
    %1136 = sbr.rel (0) target = $region29
  $region28: #{discriminator_forward.8} parent=0 // pred_region
    _
  $region29: #{discriminator_forward.8} parent=0 // pred_fallthru
    _

// kernel: discriminator_forward.9
$region0: #{discriminator_forward.9}
  #allocation0 [shape = 'u32[]', space=smem, size = 0x4, offset = 0x4, fixed_abs, tag = 'smem constant byte address 0x4 - core index']
  #allocation1 [shape = 'u32[144,128]{1,0:T(1,128)}', space=vmem, size = 0x12000, scoped, tag = 'internal scratch']
  #allocation2 [shape = 'f32[128,128]{1,0:T(8,128)}', space=vmem, size = 0x10000, scoped, tag = 'scratch operand']
  %s0 = inlined_call_operand.vmem [shape: f32[128,128], index: 0, kind: input, shape index: {}]
  %s1 = inlined_call_operand.vmem [shape: f32[128,128], index: 1, kind: input, shape index: {}]
  %s2 = inlined_call_operand.vmem [shape: f32[1,128], index: 2, kind: input, shape index: {}]
  %s3 = inlined_call_operand.vmem [shape: f32[128,128], index: 3, kind: output, shape index: {}]
  %s4 = sld [smem:[#allocation0]]
  $region30: #{discriminator_forward.9} parent=0
    _
  %s6 = ssub.s32 1, %s4
  %s7 = scalar_select 0, %s6, %s4
  // Predicated region
  $region2: #{discriminator_forward.9} parent=0 // pred_check
    _
  $region3: #{discriminator_forward.9} parent=0 // pred_check_branch
    %9 = sbr.rel (0) target = $region5
  $region4: #{discriminator_forward.9} parent=0 // pred_region
    _
  $region5: #{discriminator_forward.9} parent=0 // pred_fallthru
    _
  // Predicated region
  $region6: #{discriminator_forward.9} parent=0 // pred_check
    _
  $region7: #{discriminator_forward.9} parent=0 // pred_check_branch
    %11 = sbr.rel (0) target = $region9
  $region8: #{discriminator_forward.9} parent=0 // pred_region
    _
  $region9: #{discriminator_forward.9} parent=0 // pred_fallthru
    _
  // Predicated region
  $region10: #{discriminator_forward.9} parent=0 // pred_check
    _
  $region11: #{discriminator_forward.9} parent=0 // pred_check_branch
    %13 = sbr.rel (0) target = $region13
  $region12: #{discriminator_forward.9} parent=0 // pred_region
    _
  $region13: #{discriminator_forward.9} parent=0 // pred_fallthru
    _
  %p14 = scmp.eq.s32.totalorder 0, 0
  // Predicated region
  $region14: #{discriminator_forward.9} parent=0 // pred_check
    %p15 = pneg %p14
  $region15: #{discriminator_forward.9} parent=0 // pred_check_branch
    %17 = sbr.rel (%p15) target = $region17
  $region16: #{discriminator_forward.9} parent=0 // pred_region
    %18 = vst [vmem:[#allocation2] sm:$0xff] 0.0
    %19 = vst [vmem:[#allocation2 + $0x8] sm:$0xff] 0.0
    %20 = vst [vmem:[#allocation2 + $0x10] sm:$0xff] 0.0
    %21 = vst [vmem:[#allocation2 + $0x18] sm:$0xff] 0.0
    %22 = vst [vmem:[#allocation2 + $0x20] sm:$0xff] 0.0
    %23 = vst [vmem:[#allocation2 + $0x28] sm:$0xff] 0.0
    %24 = vst [vmem:[#allocation2 + $0x30] sm:$0xff] 0.0
    %25 = vst [vmem:[#allocation2 + $0x38] sm:$0xff] 0.0
    %26 = vst [vmem:[#allocation2 + $0x40] sm:$0xff] 0.0
    %27 = vst [vmem:[#allocation2 + $0x48] sm:$0xff] 0.0
    %28 = vst [vmem:[#allocation2 + $0x50] sm:$0xff] 0.0
    %29 = vst [vmem:[#allocation2 + $0x58] sm:$0xff] 0.0
    %30 = vst [vmem:[#allocation2 + $0x60] sm:$0xff] 0.0
    %31 = vst [vmem:[#allocation2 + $0x68] sm:$0xff] 0.0
    %32 = vst [vmem:[#allocation2 + $0x70] sm:$0xff] 0.0
    %33 = vst [vmem:[#allocation2 + $0x78] sm:$0xff] 0.0
  $region17: #{discriminator_forward.9} parent=0 // pred_fallthru
    _
  %v34 = vld [vmem:[#allocation2] sm:$0xff]
  %v35 = vld [vmem:[#allocation2 + $0x8] sm:$0xff]
  %v36 = vld [vmem:[#allocation2 + $0x10] sm:$0xff]
  %v37 = vld [vmem:[#allocation2 + $0x18] sm:$0xff]
  %v38 = vld [vmem:[#allocation2 + $0x20] sm:$0xff]
  %v39 = vld [vmem:[#allocation2 + $0x28] sm:$0xff]
  %v40 = vld [vmem:[#allocation2 + $0x30] sm:$0xff]
  %v41 = vld [vmem:[#allocation2 + $0x38] sm:$0xff]
  %v42 = vld [vmem:[#allocation2 + $0x40] sm:$0xff]
  %v43 = vld [vmem:[#allocation2 + $0x48] sm:$0xff]
  %v44 = vld [vmem:[#allocation2 + $0x50] sm:$0xff]
  %v45 = vld [vmem:[#allocation2 + $0x58] sm:$0xff]
  %v46 = vld [vmem:[#allocation2 + $0x60] sm:$0xff]
  %v47 = vld [vmem:[#allocation2 + $0x68] sm:$0xff]
  %v48 = vld [vmem:[#allocation2 + $0x70] sm:$0xff]
  %v49 = vld [vmem:[#allocation2 + $0x78] sm:$0xff]
  %v50 = vld [vmem:[%s0] sm:$0xff]
  %v51 = vld [vmem:[%s0 + $0x8] sm:$0xff]
  %v52 = vld [vmem:[%s0 + $0x10] sm:$0xff]
  %v53 = vld [vmem:[%s0 + $0x18] sm:$0xff]
  %v54 = vld [vmem:[%s0 + $0x20] sm:$0xff]
  %v55 = vld [vmem:[%s0 + $0x28] sm:$0xff]
  %v56 = vld [vmem:[%s0 + $0x30] sm:$0xff]
  %v57 = vld [vmem:[%s0 + $0x38] sm:$0xff]
  %v58 = vld [vmem:[%s0 + $0x40] sm:$0xff]
  %v59 = vld [vmem:[%s0 + $0x48] sm:$0xff]
  %v60 = vld [vmem:[%s0 + $0x50] sm:$0xff]
  %v61 = vld [vmem:[%s0 + $0x58] sm:$0xff]
  %v62 = vld [vmem:[%s0 + $0x60] sm:$0xff]
  %v63 = vld [vmem:[%s0 + $0x68] sm:$0xff]
  %v64 = vld [vmem:[%s0 + $0x70] sm:$0xff]
  %v65 = vld [vmem:[%s0 + $0x78] sm:$0xff]
  %v66 = vld [vmem:[%s1] sm:$0xff]
  %v67 = vld [vmem:[%s1 + $0x8] sm:$0xff]
  %v68 = vld [vmem:[%s1 + $0x10] sm:$0xff]
  %v69 = vld [vmem:[%s1 + $0x18] sm:$0xff]
  %v70 = vld [vmem:[%s1 + $0x20] sm:$0xff]
  %v71 = vld [vmem:[%s1 + $0x28] sm:$0xff]
  %v72 = vld [vmem:[%s1 + $0x30] sm:$0xff]
  %v73 = vld [vmem:[%s1 + $0x38] sm:$0xff]
  %v74 = vld [vmem:[%s1 + $0x40] sm:$0xff]
  %v75 = vld [vmem:[%s1 + $0x48] sm:$0xff]
  %v76 = vld [vmem:[%s1 + $0x50] sm:$0xff]
  %v77 = vld [vmem:[%s1 + $0x58] sm:$0xff]
  %v78 = vld [vmem:[%s1 + $0x60] sm:$0xff]
  %v79 = vld [vmem:[%s1 + $0x68] sm:$0xff]
  %v80 = vld [vmem:[%s1 + $0x70] sm:$0xff]
  %v81 = vld [vmem:[%s1 + $0x78] sm:$0xff]
  %82 = vmatprep.subr.mxu0 0.0
  %83 = vmatpush1.msra.mxu0 %v81
  %84 = vmatprep.subr.mxu0 0.0
  %85 = vmatpush1.msra.mxu0 %v80
  %86 = vmatprep.subr.mxu0 0.0
  %87 = vmatpush1.msra.mxu0 %v79
  %88 = vmatprep.subr.mxu0 0.0
  %89 = vmatpush1.msra.mxu0 %v78
  %90 = vmatprep.subr.mxu0 0.0
  %91 = vmatpush1.msra.mxu0 %v77
  %92 = vmatprep.subr.mxu0 0.0
  %93 = vmatpush1.msra.mxu0 %v76
  %94 = vmatprep.subr.mxu0 0.0
  %95 = vmatpush1.msra.mxu0 %v75
  %96 = vmatprep.subr.mxu0 0.0
  %97 = vmatpush1.msra.mxu0 %v74
  %98 = vmatprep.subr.mxu0 0.0
  %99 = vmatpush1.msra.mxu0 %v73
  %100 = vmatprep.subr.mxu0 0.0
  %101 = vmatpush1.msra.mxu0 %v72
  %102 = vmatprep.subr.mxu0 0.0
  %103 = vmatpush1.msra.mxu0 %v71
  %104 = vmatprep.subr.mxu0 0.0
  %105 = vmatpush1.msra.mxu0 %v70
  %106 = vmatprep.subr.mxu0 0.0
  %107 = vmatpush1.msra.mxu0 %v69
  %108 = vmatprep.subr.mxu0 0.0
  %109 = vmatpush1.msra.mxu0 %v68
  %110 = vmatprep.subr.mxu0 0.0
  %111 = vmatpush1.msra.mxu0 %v67
  %112 = vmatprep.subr.mxu0 0.0
  %113 = vmatpush1.msra.mxu0 %v66
  %114 = vmatprep.subr.mxu0 0.0
  %115 = vmatpush2.msra.mxu0 0.0
  %116 = vmatprep.subr.mxu0 0.0
  %117 = vmatpush2.msra.mxu0 0.0
  %118 = vmatprep.subr.mxu0 0.0
  %119 = vmatpush2.msra.mxu0 0.0
  %120 = vmatprep.subr.mxu0 0.0
  %121 = vmatpush2.msra.mxu0 0.0
  %122 = vmatprep.subr.mxu0 0.0
  %123 = vmatpush2.msra.mxu0 0.0
  %124 = vmatprep.subr.mxu0 0.0
  %125 = vmatpush2.msra.mxu0 0.0
  %126 = vmatprep.subr.mxu0 0.0
  %127 = vmatpush2.msra.mxu0 0.0
  %128 = vmatprep.subr.mxu0 0.0
  %129 = vmatpush2.msra.mxu0 0.0
  %130 = vmatprep.subr.mxu0 0.0
  %131 = vmatpush2.msra.mxu0 0.0
  %132 = vmatprep.subr.mxu0 0.0
  %133 = vmatpush2.msra.mxu0 0.0
  %134 = vmatprep.subr.mxu0 0.0
  %135 = vmatpush2.msra.mxu0 0.0
  %136 = vmatprep.subr.mxu0 0.0
  %137 = vmatpush2.msra.mxu0 0.0
  %138 = vmatprep.subr.mxu0 0.0
  %139 = vmatpush2.msra.mxu0 0.0
  %140 = vmatprep.subr.mxu0 0.0
  %141 = vmatpush2.msra.mxu0 0.0
  %142 = vmatprep.subr.mxu0 0.0
  %143 = vmatpush2.msra.mxu0 0.0
  %144 = vmatprep.subr.mxu0 0.0
  %145 = vmatpush2.msra.mxu0 0.0
  %146 = vmatprep.mubr.f32.mxu0 0.0
  %147 = vmatmul.mubr.f32.gmra.mxu0 %v50
  %v148 = vpop.f32.mrf.mxu0
  %v149 = vadd.f32 0.0, %v148
  %v150 = vpop.f32.mrf.mxu0
  %151 = vmatprep.mubr.f32.mxu0 0.0
  %152 = vmatmul.mubr.f32.gmra.mxu0 %v51
  %v153 = vpop.f32.mrf.mxu0
  %v154 = vadd.f32 0.0, %v153
  %v155 = vpop.f32.mrf.mxu0
  %156 = vmatprep.mubr.f32.mxu0 0.0
  %157 = vmatmul.mubr.f32.gmra.mxu0 %v52
  %v158 = vpop.f32.mrf.mxu0
  %v159 = vadd.f32 0.0, %v158
  %v160 = vpop.f32.mrf.mxu0
  %161 = vmatprep.mubr.f32.mxu0 0.0
  %162 = vmatmul.mubr.f32.gmra.mxu0 %v53
  %v163 = vpop.f32.mrf.mxu0
  %v164 = vadd.f32 0.0, %v163
  %v165 = vpop.f32.mrf.mxu0
  %166 = vmatprep.mubr.f32.mxu0 0.0
  %167 = vmatmul.mubr.f32.gmra.mxu0 %v54
  %v168 = vpop.f32.mrf.mxu0
  %v169 = vadd.f32 0.0, %v168
  %v170 = vpop.f32.mrf.mxu0
  %171 = vmatprep.mubr.f32.mxu0 0.0
  %172 = vmatmul.mubr.f32.gmra.mxu0 %v55
  %v173 = vpop.f32.mrf.mxu0
  %v174 = vadd.f32 0.0, %v173
  %v175 = vpop.f32.mrf.mxu0
  %176 = vmatprep.mubr.f32.mxu0 0.0
  %177 = vmatmul.mubr.f32.gmra.mxu0 %v56
  %v178 = vpop.f32.mrf.mxu0
  %v179 = vadd.f32 0.0, %v178
  %v180 = vpop.f32.mrf.mxu0
  %181 = vmatprep.mubr.f32.mxu0 0.0
  %182 = vmatmul.mubr.f32.gmra.mxu0 %v57
  %v183 = vpop.f32.mrf.mxu0
  %v184 = vadd.f32 0.0, %v183
  %v185 = vpop.f32.mrf.mxu0
  %186 = vmatprep.mubr.f32.mxu0 0.0
  %187 = vmatmul.mubr.f32.gmra.mxu0 %v58
  %v188 = vpop.f32.mrf.mxu0
  %v189 = vadd.f32 0.0, %v188
  %v190 = vpop.f32.mrf.mxu0
  %191 = vmatprep.mubr.f32.mxu0 0.0
  %192 = vmatmul.mubr.f32.gmra.mxu0 %v59
  %v193 = vpop.f32.mrf.mxu0
  %v194 = vadd.f32 0.0, %v193
  %v195 = vpop.f32.mrf.mxu0
  %196 = vmatprep.mubr.f32.mxu0 0.0
  %197 = vmatmul.mubr.f32.gmra.mxu0 %v60
  %v198 = vpop.f32.mrf.mxu0
  %v199 = vadd.f32 0.0, %v198
  %v200 = vpop.f32.mrf.mxu0
  %201 = vmatprep.mubr.f32.mxu0 0.0
  %202 = vmatmul.mubr.f32.gmra.mxu0 %v61
  %v203 = vpop.f32.mrf.mxu0
  %v204 = vadd.f32 0.0, %v203
  %v205 = vpop.f32.mrf.mxu0
  %206 = vmatprep.mubr.f32.mxu0 0.0
  %207 = vmatmul.mubr.f32.gmra.mxu0 %v62
  %v208 = vpop.f32.mrf.mxu0
  %v209 = vadd.f32 0.0, %v208
  %v210 = vpop.f32.mrf.mxu0
  %211 = vmatprep.mubr.f32.mxu0 0.0
  %212 = vmatmul.mubr.f32.gmra.mxu0 %v63
  %v213 = vpop.f32.mrf.mxu0
  %v214 = vadd.f32 0.0, %v213
  %v215 = vpop.f32.mrf.mxu0
  %216 = vmatprep.mubr.f32.mxu0 0.0
  %217 = vmatmul.mubr.f32.gmra.mxu0 %v64
  %v218 = vpop.f32.mrf.mxu0
  %v219 = vadd.f32 0.0, %v218
  %v220 = vpop.f32.mrf.mxu0
  %221 = vmatprep.mubr.f32.mxu0 0.0
  %222 = vmatmul.mubr.f32.gmra.mxu0 %v65
  %v223 = vpop.f32.mrf.mxu0
  %v224 = vadd.f32 0.0, %v223
  %v225 = vpop.f32.mrf.mxu0
  %226 = vdwg.mxu0
  %v227 = vadd.f32 %v34, %v149
  %v228 = vadd.f32 %v35, %v154
  %v229 = vadd.f32 %v36, %v159
  %v230 = vadd.f32 %v37, %v164
  %v231 = vadd.f32 %v38, %v169
  %v232 = vadd.f32 %v39, %v174
  %v233 = vadd.f32 %v40, %v179
  %v234 = vadd.f32 %v41, %v184
  %v235 = vadd.f32 %v42, %v189
  %v236 = vadd.f32 %v43, %v194
  %v237 = vadd.f32 %v44, %v199
  %v238 = vadd.f32 %v45, %v204
  %v239 = vadd.f32 %v46, %v209
  %v240 = vadd.f32 %v47, %v214
  %v241 = vadd.f32 %v48, %v219
  %v242 = vadd.f32 %v49, %v224
  %243 = vst [vmem:[#allocation2] sm:$0xff] %v227
  %244 = vst [vmem:[#allocation2 + $0x8] sm:$0xff] %v228
  %245 = vst [vmem:[#allocation2 + $0x10] sm:$0xff] %v229
  %246 = vst [vmem:[#allocation2 + $0x18] sm:$0xff] %v230
  %247 = vst [vmem:[#allocation2 + $0x20] sm:$0xff] %v231
  %248 = vst [vmem:[#allocation2 + $0x28] sm:$0xff] %v232
  %249 = vst [vmem:[#allocation2 + $0x30] sm:$0xff] %v233
  %250 = vst [vmem:[#allocation2 + $0x38] sm:$0xff] %v234
  %251 = vst [vmem:[#allocation2 + $0x40] sm:$0xff] %v235
  %252 = vst [vmem:[#allocation2 + $0x48] sm:$0xff] %v236
  %253 = vst [vmem:[#allocation2 + $0x50] sm:$0xff] %v237
  %254 = vst [vmem:[#allocation2 + $0x58] sm:$0xff] %v238
  %255 = vst [vmem:[#allocation2 + $0x60] sm:$0xff] %v239
  %256 = vst [vmem:[#allocation2 + $0x68] sm:$0xff] %v240
  %257 = vst [vmem:[#allocation2 + $0x70] sm:$0xff] %v241
  %258 = vst [vmem:[#allocation2 + $0x78] sm:$0xff] %v242
  // Predicated region
  $region18: #{discriminator_forward.9} parent=0 // pred_check
    %p259 = pneg %p14
  $region19: #{discriminator_forward.9} parent=0 // pred_check_branch
    %261 = sbr.rel (%p259) target = $region21
  $region20: #{discriminator_forward.9} parent=0 // pred_region
    %v262 = vld [vmem:[#allocation2] sm:$0xff]
    %v263 = vld [vmem:[#allocation2 + $0x8] sm:$0xff]
    %v264 = vld [vmem:[#allocation2 + $0x10] sm:$0xff]
    %v265 = vld [vmem:[#allocation2 + $0x18] sm:$0xff]
    %v266 = vld [vmem:[#allocation2 + $0x20] sm:$0xff]
    %v267 = vld [vmem:[#allocation2 + $0x28] sm:$0xff]
    %v268 = vld [vmem:[#allocation2 + $0x30] sm:$0xff]
    %v269 = vld [vmem:[#allocation2 + $0x38] sm:$0xff]
    %v270 = vld [vmem:[#allocation2 + $0x40] sm:$0xff]
    %v271 = vld [vmem:[#allocation2 + $0x48] sm:$0xff]
    %v272 = vld [vmem:[#allocation2 + $0x50] sm:$0xff]
    %v273 = vld [vmem:[#allocation2 + $0x58] sm:$0xff]
    %v274 = vld [vmem:[#allocation2 + $0x60] sm:$0xff]
    %v275 = vld [vmem:[#allocation2 + $0x68] sm:$0xff]
    %v276 = vld [vmem:[#allocation2 + $0x70] sm:$0xff]
    %v277 = vld [vmem:[#allocation2 + $0x78] sm:$0xff]
    %v278 = vld [vmem:[%s2] sm:$0x1]
    %v280 = vlaneseq
    %v281 = vshrl.u32 %v280, 7
    %v282 = vsub.s32 0, %v281
    %v283 = vrot.slane %v278, %v282
    %v285 = vadd.f32 %v262, %v283
    %v286 = vadd.f32 %v263, %v283
    %v287 = vadd.f32 %v264, %v283
    %v288 = vadd.f32 %v265, %v283
    %v289 = vadd.f32 %v266, %v283
    %v290 = vadd.f32 %v267, %v283
    %v291 = vadd.f32 %v268, %v283
    %v292 = vadd.f32 %v269, %v283
    %v293 = vadd.f32 %v270, %v283
    %v294 = vadd.f32 %v271, %v283
    %v295 = vadd.f32 %v272, %v283
    %v296 = vadd.f32 %v273, %v283
    %v297 = vadd.f32 %v274, %v283
    %v298 = vadd.f32 %v275, %v283
    %v299 = vadd.f32 %v276, %v283
    %v300 = vadd.f32 %v277, %v283
    %301 = vst [vmem:[%s3] sm:$0xff] %v285
    %302 = vst [vmem:[%s3 + $0x8] sm:$0xff] %v286
    %303 = vst [vmem:[%s3 + $0x10] sm:$0xff] %v287
    %304 = vst [vmem:[%s3 + $0x18] sm:$0xff] %v288
    %305 = vst [vmem:[%s3 + $0x20] sm:$0xff] %v289
    %306 = vst [vmem:[%s3 + $0x28] sm:$0xff] %v290
    %307 = vst [vmem:[%s3 + $0x30] sm:$0xff] %v291
    %308 = vst [vmem:[%s3 + $0x38] sm:$0xff] %v292
    %309 = vst [vmem:[%s3 + $0x40] sm:$0xff] %v293
    %310 = vst [vmem:[%s3 + $0x48] sm:$0xff] %v294
    %311 = vst [vmem:[%s3 + $0x50] sm:$0xff] %v295
    %312 = vst [vmem:[%s3 + $0x58] sm:$0xff] %v296
    %313 = vst [vmem:[%s3 + $0x60] sm:$0xff] %v297
    %314 = vst [vmem:[%s3 + $0x68] sm:$0xff] %v298
    %315 = vst [vmem:[%s3 + $0x70] sm:$0xff] %v299
    %316 = vst [vmem:[%s3 + $0x78] sm:$0xff] %v300
  $region21: #{discriminator_forward.9} parent=0 // pred_fallthru
    _
  // Predicated region
  $region22: #{discriminator_forward.9} parent=0 // pred_check
    _
  $region23: #{discriminator_forward.9} parent=0 // pred_check_branch
    %318 = sbr.rel (0) target = $region25
  $region24: #{discriminator_forward.9} parent=0 // pred_region
    _
  $region25: #{discriminator_forward.9} parent=0 // pred_fallthru
    _
  // Predicated region
  $region26: #{discriminator_forward.9} parent=0 // pred_check
    _
  $region27: #{discriminator_forward.9} parent=0 // pred_check_branch
    %320 = sbr.rel (0) target = $region29
  $region28: #{discriminator_forward.9} parent=0 // pred_region
    _
  $region29: #{discriminator_forward.9} parent=0 // pred_fallthru
    _

// kernel: discriminator_forward.10
$region0: #{discriminator_forward.10}
  #allocation0 [shape = 'u32[]', space=smem, size = 0x4, offset = 0x4, fixed_abs, tag = 'smem constant byte address 0x4 - core index']
  #allocation1 [shape = 'u32[144,128]{1,0:T(1,128)}', space=vmem, size = 0x12000, scoped, tag = 'internal scratch']
  %s0 = inlined_call_operand.vmem [shape: f32[2,64,128], index: 0, kind: input, shape index: {}]
  %s1 = inlined_call_operand.vmem [shape: f32[2,64,128], index: 1, kind: output, shape index: {}]
  %s2 = sld [smem:[#allocation0]]
  $region37: #{discriminator_forward.10} parent=0
    _
  %s4 = ssub.s32 1, %s2
  %s5 = scalar_select 0, %s4, %s2
  loop: start=0, step=1, limit=4
  $region2: #{discriminator_forward.10} parent=0 // loop_pre_header
    _
  $region3: #{discriminator_forward.10} parent=0 // loop_header
    %s7 = sphi 0, %s11
    %p8 = scmp.ge.s32.totalorder %s7, 4
    %s14 = sphi 0, %s26
    %s15 = sphi 0, %s22
    %s16 = sphi 0, %s14
    %s17 = sphi 0, %s15
    %s18 = sphi 0, %s16
    %s19 = sphi 0, %s17
    %s31 = sphi 0, %s33
    %s34 = sphi 0, %s31
    %s35 = sphi 0, %s34
    %s51 = sphi 0, %s35
    %s59 = sphi 0, %s61
    %s62 = sphi 0, %s59
    %s63 = sphi 0, %s62
    %s79 = sphi 0, %s63
  $region4: #{discriminator_forward.10} parent=0 // loop_header_branch
    %10 = sbr.rel (%p8) target = $region8
  $region5: #{discriminator_forward.10} parent=0 // loop_body
    %s12 = ssub.s32 %s7, 1
    %s13 = ssub.s32 %s7, 2
    %s20 = sadd.s32 1, %s15
    %p21 = scmp.ge.s32.totalorder %s20, 1
    %s22 = scalar_select %p21, 0, %s20
    %s23 = sadd.s32 1, %s14
    %s24 = scalar_select %p21, %s23, %s14
    %p25 = scmp.ge.s32.totalorder %s24, 2
    %s26 = scalar_select %p25, 0, %s24
    %s27 = ssub.s32 %s14, %s26
    %s28 = ssub.s32 %s15, %s22
    %s29 = sor.u32 %s27, %s28
    %p30 = scmp.eq.s32.totalorder %s29, 0
    %s32 = sadd.s32 %s31, 1
    %s33 = scalar_select %p30, %s31, %s32
    %p36 = pneg %p30
    %p37 = scmp.eq.s32.totalorder %s7, 1
    %p38 = por %p36, %p37
    %p39 = scmp.ne.s32.totalorder %s31, %s34
    %p40 = scmp.eq.s32.totalorder %s7, 0
    %p41 = por %p39, %p40
    %p42 = scmp.ne.s32.totalorder %s31, %s34
    %p43 = scmp.eq.s32.totalorder %s12, 1
    %p44 = por %p42, %p43
    %p45 = scmp.ne.s32.totalorder %s34, %s35
    %p46 = scmp.eq.s32.totalorder %s12, 0
    %p47 = por %p45, %p46
    %p48 = scmp.ne.s32.totalorder %s34, %s35
    %p49 = scmp.eq.s32.totalorder %s13, 1
    %p50 = por %p48, %p49
    %p52 = scmp.ne.s32.totalorder %s35, %s51
    %p53 = scmp.eq.s32.totalorder %s13, 0
    %p54 = por %p52, %p53
    %s55 = ssub.s32 %s14, %s26
    %s56 = ssub.s32 %s15, %s22
    %s57 = sor.u32 %s55, %s56
    %p58 = scmp.eq.s32.totalorder %s57, 0
    %s60 = sadd.s32 %s59, 1
    %s61 = scalar_select %p58, %s59, %s60
    %p64 = pneg %p58
    %p65 = scmp.eq.s32.totalorder %s7, 1
    %p66 = por %p64, %p65
    %p67 = scmp.ne.s32.totalorder %s59, %s62
    %p68 = scmp.eq.s32.totalorder %s7, 0
    %p69 = por %p67, %p68
    %p70 = scmp.ne.s32.totalorder %s59, %s62
    %p71 = scmp.eq.s32.totalorder %s12, 1
    %p72 = por %p70, %p71
    %p73 = scmp.ne.s32.totalorder %s62, %s63
    %p74 = scmp.eq.s32.totalorder %s12, 0
    %p75 = por %p73, %p74
    %p76 = scmp.ne.s32.totalorder %s62, %s63
    %p77 = scmp.eq.s32.totalorder %s13, 1
    %p78 = por %p76, %p77
    %p80 = scmp.ne.s32.totalorder %s63, %s79
    %p81 = scmp.eq.s32.totalorder %s13, 0
    %p82 = por %p80, %p81
    %p83 = scmp.le.s32.totalorder 1, %s7
    %p84 = scmp.lt.s32.totalorder %s7, 3
    %p85 = pnand %p83, %p84
    %p86 = pneg %p85
    // Predicated region
    $region9: #{discriminator_forward.10} parent=5 // pred_check
      _
    $region10: #{discriminator_forward.10} parent=5 // pred_check_branch
      %88 = sbr.rel (%p85) target = $region12
    $region11: #{discriminator_forward.10} parent=5 // pred_region
      %s89 = ssub.s32 %s7, 1
    $region12: #{discriminator_forward.10} parent=5 // pred_fallthru
      _
    %p90 = scmp.lt.s32.totalorder %s7, 2
    // Predicated region
    $region13: #{discriminator_forward.10} parent=5 // pred_check
      %p91 = pneg %p90
    $region14: #{discriminator_forward.10} parent=5 // pred_check_branch
      %93 = sbr.rel (%p91) target = $region16
    $region15: #{discriminator_forward.10} parent=5 // pred_region
      // Predicated region
      $region17: #{discriminator_forward.10} parent=15 // pred_check
        %p94 = pneg %p41
      $region18: #{discriminator_forward.10} parent=15 // pred_check_branch
        %96 = sbr.rel (%p94) target = $region20
      $region19: #{discriminator_forward.10} parent=15 // pred_region
        %p97 = scmp.lt.s32.totalorder %s14, 1
        %s98 = scalar_select %p97, %s14, 1
        %p99 = scmp.lt.s32.totalorder %s15, 0
        %s100 = scalar_select %p99, %s15, 0
        %s101 = smul.addr %s98, 8
        %s102 = sadd.s32 %s100, %s101
        %s103 = smul.addr %s102, 8
        %s104 = scalar_lea.vmem %s0, %s103
      $region20: #{discriminator_forward.10} parent=15 // pred_fallthru
        _
    $region16: #{discriminator_forward.10} parent=5 // pred_fallthru
      _
    %p105 = scmp.le.s32.totalorder 1, %s7
    %p106 = scmp.lt.s32.totalorder %s7, 3
    %p107 = pnand %p105, %p106
    %p108 = pneg %p107
    // Predicated region
    $region21: #{discriminator_forward.10} parent=5 // pred_check
      _
    $region22: #{discriminator_forward.10} parent=5 // pred_check_branch
      %110 = sbr.rel (%p107) target = $region24
    $region23: #{discriminator_forward.10} parent=5 // pred_region
      %s111 = ssub.s32 %s7, 1
      %p112 = scmp.lt.s32.totalorder %s16, 1
      %s113 = scalar_select %p112, %s16, 1
      %p114 = scmp.lt.s32.totalorder %s17, 0
      %s115 = scalar_select %p114, %s17, 0
      %s116 = smul.addr %s113, 8
      %s117 = sadd.s32 %s115, %s116
      %s118 = smul.addr %s117, 8
      %s119 = scalar_lea.vmem %s0, %s118
      %p120 = pneg %p47
      %p121 = pneg %p44
      %p122 = pneg %p75
      %p123 = pneg %p72
      %p124 = scmp.lt.s32.totalorder %s16, 1
      %s125 = scalar_select %p124, %s16, 1
      %p126 = scmp.lt.s32.totalorder %s17, 0
      %s127 = scalar_select %p126, %s17, 0
      %s128 = smul.addr %s125, 8
      %s129 = sadd.s32 %s127, %s128
      %s130 = smul.addr %s129, 8
      %s131 = scalar_lea.vmem %s1, %s130
      %p132 = scmp.lt.s32.totalorder %s16, 1
      %s133 = scalar_select %p132, %s16, 1
      %p134 = scmp.lt.s32.totalorder %s17, 0
      %s135 = scalar_select %p134, %s17, 0
      %s136 = smul.addr %s133, 8
      %s137 = sadd.s32 %s135, %s136
      %s138 = smul.addr %s137, 8
      %s139 = scalar_lea.vmem %s0, %s138
      %p140 = scmp.lt.s32.totalorder %s16, 1
      %s141 = scalar_select %p140, %s16, 1
      %p142 = scmp.lt.s32.totalorder %s17, 0
      %s143 = scalar_select %p142, %s17, 0
      %s144 = smul.addr %s141, 8
      %s145 = sadd.s32 %s143, %s144
      %s146 = smul.addr %s145, 8
      %s147 = scalar_lea.vmem %s1, %s146
      %v148 = vld [vmem:[%s139] sm:$0xff]
      %v149 = vld [vmem:[%s139 + $0x8] sm:$0xff]
      %v150 = vld [vmem:[%s139 + $0x10] sm:$0xff]
      %v151 = vld [vmem:[%s139 + $0x18] sm:$0xff]
      %v152 = vld [vmem:[%s139 + $0x20] sm:$0xff]
      %v153 = vld [vmem:[%s139 + $0x28] sm:$0xff]
      %v154 = vld [vmem:[%s139 + $0x30] sm:$0xff]
      %v155 = vld [vmem:[%s139 + $0x38] sm:$0xff]
      %v156 = vadd.f32 %v148, %v149
      %v157 = vadd.f32 %v156, %v150
      %v158 = vadd.f32 %v157, %v151
      %v159 = vadd.f32 %v158, %v152
      %v160 = vadd.f32 %v159, %v153
      %v161 = vadd.f32 %v160, %v154
      %v162 = vadd.f32 %v161, %v155
      %v163 = vrot.slane %v162, 4
      %v164 = vadd.f32 %v162, %v163
      %v165 = vrot.slane %v164, 2
      %v166 = vadd.f32 %v164, %v165
      %v167 = vrot.slane %v166, 1
      %v168 = vadd.f32 %v166, %v167
      %v169 = vrcp.pop 64.0
      %v170 = vmul.f32 %v168, %v169
      %v171 = vsub.f32 %v148, %v170
      %v172 = vsub.f32 %v149, %v170
      %v173 = vsub.f32 %v150, %v170
      %v174 = vsub.f32 %v151, %v170
      %v175 = vsub.f32 %v152, %v170
      %v176 = vsub.f32 %v153, %v170
      %v177 = vsub.f32 %v154, %v170
      %v178 = vsub.f32 %v155, %v170
      %v179 = vmul.f32 %v171, %v171
      %v180 = vmul.f32 %v172, %v172
      %v181 = vmul.f32 %v173, %v173
      %v182 = vmul.f32 %v174, %v174
      %v183 = vmul.f32 %v175, %v175
      %v184 = vmul.f32 %v176, %v176
      %v185 = vmul.f32 %v177, %v177
      %v186 = vmul.f32 %v178, %v178
      %v187 = vadd.f32 %v179, %v180
      %v188 = vadd.f32 %v187, %v181
      %v189 = vadd.f32 %v188, %v182
      %v190 = vadd.f32 %v189, %v183
      %v191 = vadd.f32 %v190, %v184
      %v192 = vadd.f32 %v191, %v185
      %v193 = vadd.f32 %v192, %v186
      %v194 = vrot.slane %v193, 4
      %v195 = vadd.f32 %v193, %v194
      %v196 = vrot.slane %v195, 2
      %v197 = vadd.f32 %v195, %v196
      %v198 = vrot.slane %v197, 1
      %v199 = vadd.f32 %v197, %v198
      %v200 = vmul.f32 %v199, %v169
      %v201 = vadd.f32 %v200, 1e-05
      %v202 = vrsqrt.pop %v201
      %v203 = vmul.f32 %v171, %v202
      %v204 = vmul.f32 %v172, %v202
      %v205 = vmul.f32 %v173, %v202
      %v206 = vmul.f32 %v174, %v202
      %v207 = vmul.f32 %v175, %v202
      %v208 = vmul.f32 %v176, %v202
      %v209 = vmul.f32 %v177, %v202
      %v210 = vmul.f32 %v178, %v202
      %vm211 = vcmp.ge.f32.partialorder %v203, 0.0
      %vm212 = vcmp.ge.f32.partialorder %v204, 0.0
      %vm213 = vcmp.ge.f32.partialorder %v205, 0.0
      %vm214 = vcmp.ge.f32.partialorder %v206, 0.0
      %vm215 = vcmp.ge.f32.partialorder %v207, 0.0
      %vm216 = vcmp.ge.f32.partialorder %v208, 0.0
      %vm217 = vcmp.ge.f32.partialorder %v209, 0.0
      %vm218 = vcmp.ge.f32.partialorder %v210, 0.0
      %v219 = vmul.f32 %v203, 0.2
      %v220 = vmul.f32 %v204, 0.2
      %v221 = vmul.f32 %v205, 0.2
      %v222 = vmul.f32 %v206, 0.2
      %v223 = vmul.f32 %v207, 0.2
      %v224 = vmul.f32 %v208, 0.2
      %v225 = vmul.f32 %v209, 0.2
      %v226 = vmul.f32 %v210, 0.2
      %v227 = vsel %vm211, %v203, %v219
      %v228 = vsel %vm212, %v204, %v220
      %v229 = vsel %vm213, %v205, %v221
      %v230 = vsel %vm214, %v206, %v222
      %v231 = vsel %vm215, %v207, %v223
      %v232 = vsel %vm216, %v208, %v224
      %v233 = vsel %vm217, %v209, %v225
      %v234 = vsel %vm218, %v210, %v226
      %235 = vst [vmem:[%s147] sm:$0xff] %v227
      %236 = vst [vmem:[%s147 + $0x8] sm:$0xff] %v228
      %237 = vst [vmem:[%s147 + $0x10] sm:$0xff] %v229
      %238 = vst [vmem:[%s147 + $0x18] sm:$0xff] %v230
      %239 = vst [vmem:[%s147 + $0x20] sm:$0xff] %v231
      %240 = vst [vmem:[%s147 + $0x28] sm:$0xff] %v232
      %241 = vst [vmem:[%s147 + $0x30] sm:$0xff] %v233
      %242 = vst [vmem:[%s147 + $0x38] sm:$0xff] %v234
      %p243 = scmp.lt.s32.totalorder %s16, 1
      %s244 = scalar_select %p243, %s16, 1
      %p245 = scmp.lt.s32.totalorder %s17, 0
      %s246 = scalar_select %p245, %s17, 0
      %s247 = smul.addr %s244, 8
      %s248 = sadd.s32 %s246, %s247
      %s249 = smul.addr %s248, 8
      %s250 = scalar_lea.vmem %s1, %s249
      // Predicated region
      $region25: #{discriminator_forward.10} parent=23 // pred_check
        %p251 = pneg %p72
      $region26: #{discriminator_forward.10} parent=23 // pred_check_branch
        %253 = sbr.rel (%p251) target = $region28
      $region27: #{discriminator_forward.10} parent=23 // pred_region
        _
      $region28: #{discriminator_forward.10} parent=23 // pred_fallthru
        _
    $region24: #{discriminator_forward.10} parent=5 // pred_fallthru
      _
    %p254 = scmp.le.s32.totalorder 2, %s7
    // Predicated region
    $region29: #{discriminator_forward.10} parent=5 // pred_check
      %p255 = pneg %p254
    $region30: #{discriminator_forward.10} parent=5 // pred_check_branch
      %257 = sbr.rel (%p255) target = $region32
    $region31: #{discriminator_forward.10} parent=5 // pred_region
      %s258 = ssub.s32 %s7, 2
      // Predicated region
      $region33: #{discriminator_forward.10} parent=31 // pred_check
        %p259 = pneg %p78
      $region34: #{discriminator_forward.10} parent=31 // pred_check_branch
        %261 = sbr.rel (%p259) target = $region36
      $region35: #{discriminator_forward.10} parent=31 // pred_region
        %p262 = scmp.lt.s32.totalorder %s18, 1
        %s263 = scalar_select %p262, %s18, 1
        %p264 = scmp.lt.s32.totalorder %s19, 0
        %s265 = scalar_select %p264, %s19, 0
        %s266 = smul.addr %s263, 8
        %s267 = sadd.s32 %s265, %s266
        %s268 = smul.addr %s267, 8
        %s269 = scalar_lea.vmem %s1, %s268
      $region36: #{discriminator_forward.10} parent=31 // pred_fallthru
        _
    $region32: #{discriminator_forward.10} parent=5 // pred_fallthru
      _
  $region6: #{discriminator_forward.10} parent=0 // loop_footer
    %s11 = sadd.s32 1, %s7
  $region7: #{discriminator_forward.10} parent=0 // loop_footer_branch
    %6 = sbr.rel target = $region3
  $region8: #{discriminator_forward.10} parent=0 // loop_exit
    _

// kernel: discriminator_forward.12
$region0: #{discriminator_forward.12}
  #allocation0 [shape = 'u32[]', space=smem, size = 0x4, offset = 0x4, fixed_abs, tag = 'smem constant byte address 0x4 - core index']
  #allocation1 [shape = 'u32[144,128]{1,0:T(1,128)}', space=vmem, size = 0x12000, scoped, tag = 'internal scratch']
  %s0 = inlined_call_operand.vmem [shape: f32[2,16,128], index: 0, kind: input, shape index: {}]
  %s1 = inlined_call_operand.vmem [shape: f32[2,16,128], index: 1, kind: output, shape index: {}]
  %s2 = sld [smem:[#allocation0]]
  $region37: #{discriminator_forward.12} parent=0
    _
  %s4 = ssub.s32 1, %s2
  %s5 = scalar_select 0, %s4, %s2
  loop: start=0, step=1, limit=4
  $region2: #{discriminator_forward.12} parent=0 // loop_pre_header
    _
  $region3: #{discriminator_forward.12} parent=0 // loop_header
    %s7 = sphi 0, %s11
    %p8 = scmp.ge.s32.totalorder %s7, 4
    %s14 = sphi 0, %s26
    %s15 = sphi 0, %s22
    %s16 = sphi 0, %s14
    %s17 = sphi 0, %s15
    %s18 = sphi 0, %s16
    %s19 = sphi 0, %s17
    %s31 = sphi 0, %s33
    %s34 = sphi 0, %s31
    %s35 = sphi 0, %s34
    %s51 = sphi 0, %s35
    %s59 = sphi 0, %s61
    %s62 = sphi 0, %s59
    %s63 = sphi 0, %s62
    %s79 = sphi 0, %s63
  $region4: #{discriminator_forward.12} parent=0 // loop_header_branch
    %10 = sbr.rel (%p8) target = $region8
  $region5: #{discriminator_forward.12} parent=0 // loop_body
    %s12 = ssub.s32 %s7, 1
    %s13 = ssub.s32 %s7, 2
    %s20 = sadd.s32 1, %s15
    %p21 = scmp.ge.s32.totalorder %s20, 1
    %s22 = scalar_select %p21, 0, %s20
    %s23 = sadd.s32 1, %s14
    %s24 = scalar_select %p21, %s23, %s14
    %p25 = scmp.ge.s32.totalorder %s24, 2
    %s26 = scalar_select %p25, 0, %s24
    %s27 = ssub.s32 %s14, %s26
    %s28 = ssub.s32 %s15, %s22
    %s29 = sor.u32 %s27, %s28
    %p30 = scmp.eq.s32.totalorder %s29, 0
    %s32 = sadd.s32 %s31, 1
    %s33 = scalar_select %p30, %s31, %s32
    %p36 = pneg %p30
    %p37 = scmp.eq.s32.totalorder %s7, 1
    %p38 = por %p36, %p37
    %p39 = scmp.ne.s32.totalorder %s31, %s34
    %p40 = scmp.eq.s32.totalorder %s7, 0
    %p41 = por %p39, %p40
    %p42 = scmp.ne.s32.totalorder %s31, %s34
    %p43 = scmp.eq.s32.totalorder %s12, 1
    %p44 = por %p42, %p43
    %p45 = scmp.ne.s32.totalorder %s34, %s35
    %p46 = scmp.eq.s32.totalorder %s12, 0
    %p47 = por %p45, %p46
    %p48 = scmp.ne.s32.totalorder %s34, %s35
    %p49 = scmp.eq.s32.totalorder %s13, 1
    %p50 = por %p48, %p49
    %p52 = scmp.ne.s32.totalorder %s35, %s51
    %p53 = scmp.eq.s32.totalorder %s13, 0
    %p54 = por %p52, %p53
    %s55 = ssub.s32 %s14, %s26
    %s56 = ssub.s32 %s15, %s22
    %s57 = sor.u32 %s55, %s56
    %p58 = scmp.eq.s32.totalorder %s57, 0
    %s60 = sadd.s32 %s59, 1
    %s61 = scalar_select %p58, %s59, %s60
    %p64 = pneg %p58
    %p65 = scmp.eq.s32.totalorder %s7, 1
    %p66 = por %p64, %p65
    %p67 = scmp.ne.s32.totalorder %s59, %s62
    %p68 = scmp.eq.s32.totalorder %s7, 0
    %p69 = por %p67, %p68
    %p70 = scmp.ne.s32.totalorder %s59, %s62
    %p71 = scmp.eq.s32.totalorder %s12, 1
    %p72 = por %p70, %p71
    %p73 = scmp.ne.s32.totalorder %s62, %s63
    %p74 = scmp.eq.s32.totalorder %s12, 0
    %p75 = por %p73, %p74
    %p76 = scmp.ne.s32.totalorder %s62, %s63
    %p77 = scmp.eq.s32.totalorder %s13, 1
    %p78 = por %p76, %p77
    %p80 = scmp.ne.s32.totalorder %s63, %s79
    %p81 = scmp.eq.s32.totalorder %s13, 0
    %p82 = por %p80, %p81
    %p83 = scmp.le.s32.totalorder 1, %s7
    %p84 = scmp.lt.s32.totalorder %s7, 3
    %p85 = pnand %p83, %p84
    %p86 = pneg %p85
    // Predicated region
    $region9: #{discriminator_forward.12} parent=5 // pred_check
      _
    $region10: #{discriminator_forward.12} parent=5 // pred_check_branch
      %88 = sbr.rel (%p85) target = $region12
    $region11: #{discriminator_forward.12} parent=5 // pred_region
      %s89 = ssub.s32 %s7, 1
    $region12: #{discriminator_forward.12} parent=5 // pred_fallthru
      _
    %p90 = scmp.lt.s32.totalorder %s7, 2
    // Predicated region
    $region13: #{discriminator_forward.12} parent=5 // pred_check
      %p91 = pneg %p90
    $region14: #{discriminator_forward.12} parent=5 // pred_check_branch
      %93 = sbr.rel (%p91) target = $region16
    $region15: #{discriminator_forward.12} parent=5 // pred_region
      // Predicated region
      $region17: #{discriminator_forward.12} parent=15 // pred_check
        %p94 = pneg %p41
      $region18: #{discriminator_forward.12} parent=15 // pred_check_branch
        %96 = sbr.rel (%p94) target = $region20
      $region19: #{discriminator_forward.12} parent=15 // pred_region
        %p97 = scmp.lt.s32.totalorder %s14, 1
        %s98 = scalar_select %p97, %s14, 1
        %p99 = scmp.lt.s32.totalorder %s15, 0
        %s100 = scalar_select %p99, %s15, 0
        %s101 = smul.addr %s98, 2
        %s102 = sadd.s32 %s100, %s101
        %s103 = smul.addr %s102, 8
        %s104 = scalar_lea.vmem %s0, %s103
      $region20: #{discriminator_forward.12} parent=15 // pred_fallthru
        _
    $region16: #{discriminator_forward.12} parent=5 // pred_fallthru
      _
    %p105 = scmp.le.s32.totalorder 1, %s7
    %p106 = scmp.lt.s32.totalorder %s7, 3
    %p107 = pnand %p105, %p106
    %p108 = pneg %p107
    // Predicated region
    $region21: #{discriminator_forward.12} parent=5 // pred_check
      _
    $region22: #{discriminator_forward.12} parent=5 // pred_check_branch
      %110 = sbr.rel (%p107) target = $region24
    $region23: #{discriminator_forward.12} parent=5 // pred_region
      %s111 = ssub.s32 %s7, 1
      %p112 = scmp.lt.s32.totalorder %s16, 1
      %s113 = scalar_select %p112, %s16, 1
      %p114 = scmp.lt.s32.totalorder %s17, 0
      %s115 = scalar_select %p114, %s17, 0
      %s116 = smul.addr %s113, 2
      %s117 = sadd.s32 %s115, %s116
      %s118 = smul.addr %s117, 8
      %s119 = scalar_lea.vmem %s0, %s118
      %p120 = pneg %p47
      %p121 = pneg %p44
      %p122 = pneg %p75
      %p123 = pneg %p72
      %p124 = scmp.lt.s32.totalorder %s16, 1
      %s125 = scalar_select %p124, %s16, 1
      %p126 = scmp.lt.s32.totalorder %s17, 0
      %s127 = scalar_select %p126, %s17, 0
      %s128 = smul.addr %s125, 2
      %s129 = sadd.s32 %s127, %s128
      %s130 = smul.addr %s129, 8
      %s131 = scalar_lea.vmem %s1, %s130
      %p132 = scmp.lt.s32.totalorder %s16, 1
      %s133 = scalar_select %p132, %s16, 1
      %p134 = scmp.lt.s32.totalorder %s17, 0
      %s135 = scalar_select %p134, %s17, 0
      %s136 = smul.addr %s133, 2
      %s137 = sadd.s32 %s135, %s136
      %s138 = smul.addr %s137, 8
      %s139 = scalar_lea.vmem %s0, %s138
      %p140 = scmp.lt.s32.totalorder %s16, 1
      %s141 = scalar_select %p140, %s16, 1
      %p142 = scmp.lt.s32.totalorder %s17, 0
      %s143 = scalar_select %p142, %s17, 0
      %s144 = smul.addr %s141, 2
      %s145 = sadd.s32 %s143, %s144
      %s146 = smul.addr %s145, 8
      %s147 = scalar_lea.vmem %s1, %s146
      %v148 = vld [vmem:[%s139] sm:$0xff]
      %v149 = vld [vmem:[%s139 + $0x8] sm:$0xff]
      %v150 = vadd.f32 %v148, %v149
      %v151 = vrot.slane %v150, 4
      %v152 = vadd.f32 %v150, %v151
      %v153 = vrot.slane %v152, 2
      %v154 = vadd.f32 %v152, %v153
      %v155 = vrot.slane %v154, 1
      %v156 = vadd.f32 %v154, %v155
      %v157 = vrcp.pop 16.0
      %v158 = vmul.f32 %v156, %v157
      %v159 = vsub.f32 %v148, %v158
      %v160 = vsub.f32 %v149, %v158
      %v161 = vmul.f32 %v159, %v159
      %v162 = vmul.f32 %v160, %v160
      %v163 = vadd.f32 %v161, %v162
      %v164 = vrot.slane %v163, 4
      %v165 = vadd.f32 %v163, %v164
      %v166 = vrot.slane %v165, 2
      %v167 = vadd.f32 %v165, %v166
      %v168 = vrot.slane %v167, 1
      %v169 = vadd.f32 %v167, %v168
      %v170 = vmul.f32 %v169, %v157
      %v171 = vadd.f32 %v170, 1e-05
      %v172 = vrsqrt.pop %v171
      %v173 = vmul.f32 %v159, %v172
      %v174 = vmul.f32 %v160, %v172
      %vm175 = vcmp.ge.f32.partialorder %v173, 0.0
      %vm176 = vcmp.ge.f32.partialorder %v174, 0.0
      %v177 = vmul.f32 %v173, 0.2
      %v178 = vmul.f32 %v174, 0.2
      %v179 = vsel %vm175, %v173, %v177
      %v180 = vsel %vm176, %v174, %v178
      %181 = vst [vmem:[%s147] sm:$0xff] %v179
      %182 = vst [vmem:[%s147 + $0x8] sm:$0xff] %v180
      %p183 = scmp.lt.s32.totalorder %s16, 1
      %s184 = scalar_select %p183, %s16, 1
      %p185 = scmp.lt.s32.totalorder %s17, 0
      %s186 = scalar_select %p185, %s17, 0
      %s187 = smul.addr %s184, 2
      %s188 = sadd.s32 %s186, %s187
      %s189 = smul.addr %s188, 8
      %s190 = scalar_lea.vmem %s1, %s189
      // Predicated region
      $region25: #{discriminator_forward.12} parent=23 // pred_check
        %p191 = pneg %p72
      $region26: #{discriminator_forward.12} parent=23 // pred_check_branch
        %193 = sbr.rel (%p191) target = $region28
      $region27: #{discriminator_forward.12} parent=23 // pred_region
        _
      $region28: #{discriminator_forward.12} parent=23 // pred_fallthru
        _
    $region24: #{discriminator_forward.12} parent=5 // pred_fallthru
      _
    %p194 = scmp.le.s32.totalorder 2, %s7
    // Predicated region
    $region29: #{discriminator_forward.12} parent=5 // pred_check
      %p195 = pneg %p194
    $region30: #{discriminator_forward.12} parent=5 // pred_check_branch
      %197 = sbr.rel (%p195) target = $region32
    $region31: #{discriminator_forward.12} parent=5 // pred_region
      %s198 = ssub.s32 %s7, 2
      // Predicated region
      $region33: #{discriminator_forward.12} parent=31 // pred_check
        %p199 = pneg %p78
      $region34: #{discriminator_forward.12} parent=31 // pred_check_branch
        %201 = sbr.rel (%p199) target = $region36
      $region35: #{discriminator_forward.12} parent=31 // pred_region
        %p202 = scmp.lt.s32.totalorder %s18, 1
        %s203 = scalar_select %p202, %s18, 1
        %p204 = scmp.lt.s32.totalorder %s19, 0
        %s205 = scalar_select %p204, %s19, 0
        %s206 = smul.addr %s203, 2
        %s207 = sadd.s32 %s205, %s206
        %s208 = smul.addr %s207, 8
        %s209 = scalar_lea.vmem %s1, %s208
      $region36: #{discriminator_forward.12} parent=31 // pred_fallthru
        _
    $region32: #{discriminator_forward.12} parent=5 // pred_fallthru
      _
  $region6: #{discriminator_forward.12} parent=0 // loop_footer
    %s11 = sadd.s32 1, %s7
  $region7: #{discriminator_forward.12} parent=0 // loop_footer_branch
    %6 = sbr.rel target = $region3
  $region8: #{discriminator_forward.12} parent=0 // loop_exit
    _

// kernel: discriminator_forward.11
$region0: #{discriminator_forward.11}
  #allocation0 [shape = 'u32[]', space=smem, size = 0x4, offset = 0x4, fixed_abs, tag = 'smem constant byte address 0x4 - core index']
  #allocation1 [shape = 'u32[144,128]{1,0:T(1,128)}', space=vmem, size = 0x12000, scoped, tag = 'internal scratch']
  #allocation2 [shape = 'f32[32,128]{1,0:T(8,128)}', space=vmem, size = 0x4000, scoped, tag = 'scratch operand']
  %s0 = inlined_call_operand.vmem [shape: f32[32,256], index: 0, kind: input, shape index: {}]
  %s1 = inlined_call_operand.vmem [shape: f32[256,128], index: 1, kind: input, shape index: {}]
  %s2 = inlined_call_operand.vmem [shape: f32[1,128], index: 2, kind: input, shape index: {}]
  %s3 = inlined_call_operand.vmem [shape: f32[32,128], index: 3, kind: output, shape index: {}]
  %s4 = sld [smem:[#allocation0]]
  $region30: #{discriminator_forward.11} parent=0
    _
  %s6 = ssub.s32 1, %s4
  %s7 = scalar_select 0, %s6, %s4
  // Predicated region
  $region2: #{discriminator_forward.11} parent=0 // pred_check
    _
  $region3: #{discriminator_forward.11} parent=0 // pred_check_branch
    %9 = sbr.rel (0) target = $region5
  $region4: #{discriminator_forward.11} parent=0 // pred_region
    _
  $region5: #{discriminator_forward.11} parent=0 // pred_fallthru
    _
  // Predicated region
  $region6: #{discriminator_forward.11} parent=0 // pred_check
    _
  $region7: #{discriminator_forward.11} parent=0 // pred_check_branch
    %11 = sbr.rel (0) target = $region9
  $region8: #{discriminator_forward.11} parent=0 // pred_region
    _
  $region9: #{discriminator_forward.11} parent=0 // pred_fallthru
    _
  // Predicated region
  $region10: #{discriminator_forward.11} parent=0 // pred_check
    _
  $region11: #{discriminator_forward.11} parent=0 // pred_check_branch
    %13 = sbr.rel (0) target = $region13
  $region12: #{discriminator_forward.11} parent=0 // pred_region
    _
  $region13: #{discriminator_forward.11} parent=0 // pred_fallthru
    _
  %p14 = scmp.eq.s32.totalorder 0, 0
  // Predicated region
  $region14: #{discriminator_forward.11} parent=0 // pred_check
    %p15 = pneg %p14
  $region15: #{discriminator_forward.11} parent=0 // pred_check_branch
    %17 = sbr.rel (%p15) target = $region17
  $region16: #{discriminator_forward.11} parent=0 // pred_region
    %18 = vst [vmem:[#allocation2] sm:$0xff] 0.0
    %19 = vst [vmem:[#allocation2 + $0x8] sm:$0xff] 0.0
    %20 = vst [vmem:[#allocation2 + $0x10] sm:$0xff] 0.0
    %21 = vst [vmem:[#allocation2 + $0x18] sm:$0xff] 0.0
  $region17: #{discriminator_forward.11} parent=0 // pred_fallthru
    _
  %v22 = vld [vmem:[#allocation2] sm:$0xff]
  %v23 = vld [vmem:[#allocation2 + $0x8] sm:$0xff]
  %v24 = vld [vmem:[#allocation2 + $0x10] sm:$0xff]
  %v25 = vld [vmem:[#allocation2 + $0x18] sm:$0xff]
  %v26 = vld [vmem:[%s0] sm:$0xff]
  %v27 = vld [vmem:[%s0 + $0x8] sm:$0xff]
  %v28 = vld [vmem:[%s0 + $0x10] sm:$0xff]
  %v29 = vld [vmem:[%s0 + $0x18] sm:$0xff]
  %v30 = vld [vmem:[%s0 + $0x20] sm:$0xff]
  %v31 = vld [vmem:[%s0 + $0x28] sm:$0xff]
  %v32 = vld [vmem:[%s0 + $0x30] sm:$0xff]
  %v33 = vld [vmem:[%s0 + $0x38] sm:$0xff]
  %v34 = vld [vmem:[%s1] sm:$0xff]
  %v35 = vld [vmem:[%s1 + $0x8] sm:$0xff]
  %v36 = vld [vmem:[%s1 + $0x10] sm:$0xff]
  %v37 = vld [vmem:[%s1 + $0x18] sm:$0xff]
  %v38 = vld [vmem:[%s1 + $0x20] sm:$0xff]
  %v39 = vld [vmem:[%s1 + $0x28] sm:$0xff]
  %v40 = vld [vmem:[%s1 + $0x30] sm:$0xff]
  %v41 = vld [vmem:[%s1 + $0x38] sm:$0xff]
  %v42 = vld [vmem:[%s1 + $0x40] sm:$0xff]
  %v43 = vld [vmem:[%s1 + $0x48] sm:$0xff]
  %v44 = vld [vmem:[%s1 + $0x50] sm:$0xff]
  %v45 = vld [vmem:[%s1 + $0x58] sm:$0xff]
  %v46 = vld [vmem:[%s1 + $0x60] sm:$0xff]
  %v47 = vld [vmem:[%s1 + $0x68] sm:$0xff]
  %v48 = vld [vmem:[%s1 + $0x70] sm:$0xff]
  %v49 = vld [vmem:[%s1 + $0x78] sm:$0xff]
  %v50 = vld [vmem:[%s1 + $0x80] sm:$0xff]
  %v51 = vld [vmem:[%s1 + $0x88] sm:$0xff]
  %v52 = vld [vmem:[%s1 + $0x90] sm:$0xff]
  %v53 = vld [vmem:[%s1 + $0x98] sm:$0xff]
  %v54 = vld [vmem:[%s1 + $0xa0] sm:$0xff]
  %v55 = vld [vmem:[%s1 + $0xa8] sm:$0xff]
  %v56 = vld [vmem:[%s1 + $0xb0] sm:$0xff]
  %v57 = vld [vmem:[%s1 + $0xb8] sm:$0xff]
  %v58 = vld [vmem:[%s1 + $0xc0] sm:$0xff]
  %v59 = vld [vmem:[%s1 + $0xc8] sm:$0xff]
  %v60 = vld [vmem:[%s1 + $0xd0] sm:$0xff]
  %v61 = vld [vmem:[%s1 + $0xd8] sm:$0xff]
  %v62 = vld [vmem:[%s1 + $0xe0] sm:$0xff]
  %v63 = vld [vmem:[%s1 + $0xe8] sm:$0xff]
  %v64 = vld [vmem:[%s1 + $0xf0] sm:$0xff]
  %v65 = vld [vmem:[%s1 + $0xf8] sm:$0xff]
  %66 = vmatprep.subr.mxu0 0.0
  %67 = vmatpush1.msra.mxu0 %v49
  %68 = vmatprep.subr.mxu0 0.0
  %69 = vmatpush1.msra.mxu0 %v48
  %70 = vmatprep.subr.mxu0 0.0
  %71 = vmatpush1.msra.mxu0 %v47
  %72 = vmatprep.subr.mxu0 0.0
  %73 = vmatpush1.msra.mxu0 %v46
  %74 = vmatprep.subr.mxu0 0.0
  %75 = vmatpush1.msra.mxu0 %v45
  %76 = vmatprep.subr.mxu0 0.0
  %77 = vmatpush1.msra.mxu0 %v44
  %78 = vmatprep.subr.mxu0 0.0
  %79 = vmatpush1.msra.mxu0 %v43
  %80 = vmatprep.subr.mxu0 0.0
  %81 = vmatpush1.msra.mxu0 %v42
  %82 = vmatprep.subr.mxu0 0.0
  %83 = vmatpush1.msra.mxu0 %v41
  %84 = vmatprep.subr.mxu0 0.0
  %85 = vmatpush1.msra.mxu0 %v40
  %86 = vmatprep.subr.mxu0 0.0
  %87 = vmatpush1.msra.mxu0 %v39
  %88 = vmatprep.subr.mxu0 0.0
  %89 = vmatpush1.msra.mxu0 %v38
  %90 = vmatprep.subr.mxu0 0.0
  %91 = vmatpush1.msra.mxu0 %v37
  %92 = vmatprep.subr.mxu0 0.0
  %93 = vmatpush1.msra.mxu0 %v36
  %94 = vmatprep.subr.mxu0 0.0
  %95 = vmatpush1.msra.mxu0 %v35
  %96 = vmatprep.subr.mxu0 0.0
  %97 = vmatpush1.msra.mxu0 %v34
  %98 = vmatprep.subr.mxu0 0.0
  %99 = vmatpush2.msra.mxu0 %v65
  %100 = vmatprep.subr.mxu0 0.0
  %101 = vmatpush2.msra.mxu0 %v64
  %102 = vmatprep.subr.mxu0 0.0
  %103 = vmatpush2.msra.mxu0 %v63
  %104 = vmatprep.subr.mxu0 0.0
  %105 = vmatpush2.msra.mxu0 %v62
  %106 = vmatprep.subr.mxu0 0.0
  %107 = vmatpush2.msra.mxu0 %v61
  %108 = vmatprep.subr.mxu0 0.0
  %109 = vmatpush2.msra.mxu0 %v60
  %110 = vmatprep.subr.mxu0 0.0
  %111 = vmatpush2.msra.mxu0 %v59
  %112 = vmatprep.subr.mxu0 0.0
  %113 = vmatpush2.msra.mxu0 %v58
  %114 = vmatprep.subr.mxu0 0.0
  %115 = vmatpush2.msra.mxu0 %v57
  %116 = vmatprep.subr.mxu0 0.0
  %117 = vmatpush2.msra.mxu0 %v56
  %118 = vmatprep.subr.mxu0 0.0
  %119 = vmatpush2.msra.mxu0 %v55
  %120 = vmatprep.subr.mxu0 0.0
  %121 = vmatpush2.msra.mxu0 %v54
  %122 = vmatprep.subr.mxu0 0.0
  %123 = vmatpush2.msra.mxu0 %v53
  %124 = vmatprep.subr.mxu0 0.0
  %125 = vmatpush2.msra.mxu0 %v52
  %126 = vmatprep.subr.mxu0 0.0
  %127 = vmatpush2.msra.mxu0 %v51
  %128 = vmatprep.subr.mxu0 0.0
  %129 = vmatpush2.msra.mxu0 %v50
  %130 = vmatprep.mubr.f32.mxu0 %v27
  %131 = vmatmul.mubr.f32.gmra.mxu0 %v26
  %v132 = vpop.f32.mrf.mxu0
  %v133 = vadd.f32 0.0, %v132
  %v134 = vpop.f32.mrf.mxu0
  %135 = vmatprep.mubr.f32.mxu0 %v29
  %136 = vmatmul.mubr.f32.gmra.mxu0 %v28
  %v137 = vpop.f32.mrf.mxu0
  %v138 = vadd.f32 0.0, %v137
  %v139 = vpop.f32.mrf.mxu0
  %140 = vmatprep.mubr.f32.mxu0 %v31
  %141 = vmatmul.mubr.f32.gmra.mxu0 %v30
  %v142 = vpop.f32.mrf.mxu0
  %v143 = vadd.f32 0.0, %v142
  %v144 = vpop.f32.mrf.mxu0
  %145 = vmatprep.mubr.f32.mxu0 %v33
  %146 = vmatmul.mubr.f32.gmra.mxu0 %v32
  %v147 = vpop.f32.mrf.mxu0
  %v148 = vadd.f32 0.0, %v147
  %v149 = vpop.f32.mrf.mxu0
  %150 = vdwg.mxu0
  %v151 = vadd.f32 %v22, %v133
  %v152 = vadd.f32 %v23, %v138
  %v153 = vadd.f32 %v24, %v143
  %v154 = vadd.f32 %v25, %v148
  %155 = vst [vmem:[#allocation2] sm:$0xff] %v151
  %156 = vst [vmem:[#allocation2 + $0x8] sm:$0xff] %v152
  %157 = vst [vmem:[#allocation2 + $0x10] sm:$0xff] %v153
  %158 = vst [vmem:[#allocation2 + $0x18] sm:$0xff] %v154
  // Predicated region
  $region18: #{discriminator_forward.11} parent=0 // pred_check
    %p159 = pneg %p14
  $region19: #{discriminator_forward.11} parent=0 // pred_check_branch
    %161 = sbr.rel (%p159) target = $region21
  $region20: #{discriminator_forward.11} parent=0 // pred_region
    %v162 = vld [vmem:[#allocation2] sm:$0xff]
    %v163 = vld [vmem:[#allocation2 + $0x8] sm:$0xff]
    %v164 = vld [vmem:[#allocation2 + $0x10] sm:$0xff]
    %v165 = vld [vmem:[#allocation2 + $0x18] sm:$0xff]
    %v166 = vld [vmem:[%s2] sm:$0x1]
    %v168 = vlaneseq
    %v169 = vshrl.u32 %v168, 7
    %v170 = vsub.s32 0, %v169
    %v171 = vrot.slane %v166, %v170
    %v173 = vadd.f32 %v162, %v171
    %v174 = vadd.f32 %v163, %v171
    %v175 = vadd.f32 %v164, %v171
    %v176 = vadd.f32 %v165, %v171
    %177 = vst [vmem:[%s3] sm:$0xff] %v173
    %178 = vst [vmem:[%s3 + $0x8] sm:$0xff] %v174
    %179 = vst [vmem:[%s3 + $0x10] sm:$0xff] %v175
    %180 = vst [vmem:[%s3 + $0x18] sm:$0xff] %v176
  $region21: #{discriminator_forward.11} parent=0 // pred_fallthru
    _
  // Predicated region
  $region22: #{discriminator_forward.11} parent=0 // pred_check
    _
  $region23: #{discriminator_forward.11} parent=0 // pred_check_branch
    %182 = sbr.rel (0) target = $region25
  $region24: #{discriminator_forward.11} parent=0 // pred_region
    _
  $region25: #{discriminator_forward.11} parent=0 // pred_fallthru
    _
  // Predicated region
  $region26: #{discriminator_forward.11} parent=0 // pred_check
    _
  $region27: #{discriminator_forward.11} parent=0 // pred_check_branch
    %184 = sbr.rel (0) target = $region29
  $region28: #{discriminator_forward.11} parent=0 // pred_region
    _
  $region29: #{discriminator_forward.11} parent=0 // pred_fallthru
    _

// kernel: discriminator_forward.13
$region0: #{discriminator_forward.13}
  #allocation0 [shape = 'u32[]', space=smem, size = 0x4, offset = 0x4, fixed_abs, tag = 'smem constant byte address 0x4 - core index']
  #allocation1 [shape = 'u32[144,128]{1,0:T(1,128)}', space=vmem, size = 0x12000, scoped, tag = 'internal scratch']
  #allocation2 [shape = 'f32[24,128]{1,0:T(8,128)}', space=vmem, size = 0x3000, scoped, tag = 'scratch operand']
  %s0 = inlined_call_operand.vmem [shape: f32[24,512], index: 0, kind: input, shape index: {}]
  %s1 = inlined_call_operand.vmem [shape: f32[512,128], index: 1, kind: input, shape index: {}]
  %s2 = inlined_call_operand.vmem [shape: f32[1,128], index: 2, kind: input, shape index: {}]
  %s3 = inlined_call_operand.vmem [shape: f32[24,128], index: 3, kind: output, shape index: {}]
  %s4 = sld [smem:[#allocation0]]
  $region30: #{discriminator_forward.13} parent=0
    _
  %s6 = ssub.s32 1, %s4
  %s7 = scalar_select 0, %s6, %s4
  // Predicated region
  $region2: #{discriminator_forward.13} parent=0 // pred_check
    _
  $region3: #{discriminator_forward.13} parent=0 // pred_check_branch
    %9 = sbr.rel (0) target = $region5
  $region4: #{discriminator_forward.13} parent=0 // pred_region
    _
  $region5: #{discriminator_forward.13} parent=0 // pred_fallthru
    _
  // Predicated region
  $region6: #{discriminator_forward.13} parent=0 // pred_check
    _
  $region7: #{discriminator_forward.13} parent=0 // pred_check_branch
    %11 = sbr.rel (0) target = $region9
  $region8: #{discriminator_forward.13} parent=0 // pred_region
    _
  $region9: #{discriminator_forward.13} parent=0 // pred_fallthru
    _
  // Predicated region
  $region10: #{discriminator_forward.13} parent=0 // pred_check
    _
  $region11: #{discriminator_forward.13} parent=0 // pred_check_branch
    %13 = sbr.rel (0) target = $region13
  $region12: #{discriminator_forward.13} parent=0 // pred_region
    _
  $region13: #{discriminator_forward.13} parent=0 // pred_fallthru
    _
  %p14 = scmp.eq.s32.totalorder 0, 0
  // Predicated region
  $region14: #{discriminator_forward.13} parent=0 // pred_check
    %p15 = pneg %p14
  $region15: #{discriminator_forward.13} parent=0 // pred_check_branch
    %17 = sbr.rel (%p15) target = $region17
  $region16: #{discriminator_forward.13} parent=0 // pred_region
    %18 = vst [vmem:[#allocation2] sm:$0xff] 0.0
    %19 = vst [vmem:[#allocation2 + $0x8] sm:$0xff] 0.0
    %20 = vst [vmem:[#allocation2 + $0x10] sm:$0xff] 0.0
  $region17: #{discriminator_forward.13} parent=0 // pred_fallthru
    _
  %v21 = vld [vmem:[#allocation2] sm:$0xff]
  %v22 = vld [vmem:[#allocation2 + $0x8] sm:$0xff]
  %v23 = vld [vmem:[#allocation2 + $0x10] sm:$0xff]
  %v24 = vld [vmem:[%s0] sm:$0xff]
  %v25 = vld [vmem:[%s0 + $0x8] sm:$0xff]
  %v26 = vld [vmem:[%s0 + $0x10] sm:$0xff]
  %v27 = vld [vmem:[%s0 + $0x18] sm:$0xff]
  %v28 = vld [vmem:[%s0 + $0x20] sm:$0xff]
  %v29 = vld [vmem:[%s0 + $0x28] sm:$0xff]
  %v30 = vld [vmem:[%s0 + $0x30] sm:$0xff]
  %v31 = vld [vmem:[%s0 + $0x38] sm:$0xff]
  %v32 = vld [vmem:[%s0 + $0x40] sm:$0xff]
  %v33 = vld [vmem:[%s0 + $0x48] sm:$0xff]
  %v34 = vld [vmem:[%s0 + $0x50] sm:$0xff]
  %v35 = vld [vmem:[%s0 + $0x58] sm:$0xff]
  %v36 = vld [vmem:[%s1] sm:$0xff]
  %v37 = vld [vmem:[%s1 + $0x8] sm:$0xff]
  %v38 = vld [vmem:[%s1 + $0x10] sm:$0xff]
  %v39 = vld [vmem:[%s1 + $0x18] sm:$0xff]
  %v40 = vld [vmem:[%s1 + $0x20] sm:$0xff]
  %v41 = vld [vmem:[%s1 + $0x28] sm:$0xff]
  %v42 = vld [vmem:[%s1 + $0x30] sm:$0xff]
  %v43 = vld [vmem:[%s1 + $0x38] sm:$0xff]
  %v44 = vld [vmem:[%s1 + $0x40] sm:$0xff]
  %v45 = vld [vmem:[%s1 + $0x48] sm:$0xff]
  %v46 = vld [vmem:[%s1 + $0x50] sm:$0xff]
  %v47 = vld [vmem:[%s1 + $0x58] sm:$0xff]
  %v48 = vld [vmem:[%s1 + $0x60] sm:$0xff]
  %v49 = vld [vmem:[%s1 + $0x68] sm:$0xff]
  %v50 = vld [vmem:[%s1 + $0x70] sm:$0xff]
  %v51 = vld [vmem:[%s1 + $0x78] sm:$0xff]
  %v52 = vld [vmem:[%s1 + $0x80] sm:$0xff]
  %v53 = vld [vmem:[%s1 + $0x88] sm:$0xff]
  %v54 = vld [vmem:[%s1 + $0x90] sm:$0xff]
  %v55 = vld [vmem:[%s1 + $0x98] sm:$0xff]
  %v56 = vld [vmem:[%s1 + $0xa0] sm:$0xff]
  %v57 = vld [vmem:[%s1 + $0xa8] sm:$0xff]
  %v58 = vld [vmem:[%s1 + $0xb0] sm:$0xff]
  %v59 = vld [vmem:[%s1 + $0xb8] sm:$0xff]
  %v60 = vld [vmem:[%s1 + $0xc0] sm:$0xff]
  %v61 = vld [vmem:[%s1 + $0xc8] sm:$0xff]
  %v62 = vld [vmem:[%s1 + $0xd0] sm:$0xff]
  %v63 = vld [vmem:[%s1 + $0xd8] sm:$0xff]
  %v64 = vld [vmem:[%s1 + $0xe0] sm:$0xff]
  %v65 = vld [vmem:[%s1 + $0xe8] sm:$0xff]
  %v66 = vld [vmem:[%s1 + $0xf0] sm:$0xff]
  %v67 = vld [vmem:[%s1 + $0xf8] sm:$0xff]
  %v68 = vld [vmem:[%s1 + $0x100] sm:$0xff]
  %v69 = vld [vmem:[%s1 + $0x108] sm:$0xff]
  %v70 = vld [vmem:[%s1 + $0x110] sm:$0xff]
  %v71 = vld [vmem:[%s1 + $0x118] sm:$0xff]
  %v72 = vld [vmem:[%s1 + $0x120] sm:$0xff]
  %v73 = vld [vmem:[%s1 + $0x128] sm:$0xff]
  %v74 = vld [vmem:[%s1 + $0x130] sm:$0xff]
  %v75 = vld [vmem:[%s1 + $0x138] sm:$0xff]
  %v76 = vld [vmem:[%s1 + $0x140] sm:$0xff]
  %v77 = vld [vmem:[%s1 + $0x148] sm:$0xff]
  %v78 = vld [vmem:[%s1 + $0x150] sm:$0xff]
  %v79 = vld [vmem:[%s1 + $0x158] sm:$0xff]
  %v80 = vld [vmem:[%s1 + $0x160] sm:$0xff]
  %v81 = vld [vmem:[%s1 + $0x168] sm:$0xff]
  %v82 = vld [vmem:[%s1 + $0x170] sm:$0xff]
  %v83 = vld [vmem:[%s1 + $0x178] sm:$0xff]
  %v84 = vld [vmem:[%s1 + $0x180] sm:$0xff]
  %v85 = vld [vmem:[%s1 + $0x188] sm:$0xff]
  %v86 = vld [vmem:[%s1 + $0x190] sm:$0xff]
  %v87 = vld [vmem:[%s1 + $0x198] sm:$0xff]
  %v88 = vld [vmem:[%s1 + $0x1a0] sm:$0xff]
  %v89 = vld [vmem:[%s1 + $0x1a8] sm:$0xff]
  %v90 = vld [vmem:[%s1 + $0x1b0] sm:$0xff]
  %v91 = vld [vmem:[%s1 + $0x1b8] sm:$0xff]
  %v92 = vld [vmem:[%s1 + $0x1c0] sm:$0xff]
  %v93 = vld [vmem:[%s1 + $0x1c8] sm:$0xff]
  %v94 = vld [vmem:[%s1 + $0x1d0] sm:$0xff]
  %v95 = vld [vmem:[%s1 + $0x1d8] sm:$0xff]
  %v96 = vld [vmem:[%s1 + $0x1e0] sm:$0xff]
  %v97 = vld [vmem:[%s1 + $0x1e8] sm:$0xff]
  %v98 = vld [vmem:[%s1 + $0x1f0] sm:$0xff]
  %v99 = vld [vmem:[%s1 + $0x1f8] sm:$0xff]
  %100 = vmatprep.subr.mxu0 0.0
  %101 = vmatpush1.msra.mxu0 %v51
  %102 = vmatprep.subr.mxu0 0.0
  %103 = vmatpush1.msra.mxu0 %v50
  %104 = vmatprep.subr.mxu0 0.0
  %105 = vmatpush1.msra.mxu0 %v49
  %106 = vmatprep.subr.mxu0 0.0
  %107 = vmatpush1.msra.mxu0 %v48
  %108 = vmatprep.subr.mxu0 0.0
  %109 = vmatpush1.msra.mxu0 %v47
  %110 = vmatprep.subr.mxu0 0.0
  %111 = vmatpush1.msra.mxu0 %v46
  %112 = vmatprep.subr.mxu0 0.0
  %113 = vmatpush1.msra.mxu0 %v45
  %114 = vmatprep.subr.mxu0 0.0
  %115 = vmatpush1.msra.mxu0 %v44
  %116 = vmatprep.subr.mxu0 0.0
  %117 = vmatpush1.msra.mxu0 %v43
  %118 = vmatprep.subr.mxu0 0.0
  %119 = vmatpush1.msra.mxu0 %v42
  %120 = vmatprep.subr.mxu0 0.0
  %121 = vmatpush1.msra.mxu0 %v41
  %122 = vmatprep.subr.mxu0 0.0
  %123 = vmatpush1.msra.mxu0 %v40
  %124 = vmatprep.subr.mxu0 0.0
  %125 = vmatpush1.msra.mxu0 %v39
  %126 = vmatprep.subr.mxu0 0.0
  %127 = vmatpush1.msra.mxu0 %v38
  %128 = vmatprep.subr.mxu0 0.0
  %129 = vmatpush1.msra.mxu0 %v37
  %130 = vmatprep.subr.mxu0 0.0
  %131 = vmatpush1.msra.mxu0 %v36
  %132 = vmatprep.subr.mxu0 0.0
  %133 = vmatpush2.msra.mxu0 %v67
  %134 = vmatprep.subr.mxu0 0.0
  %135 = vmatpush2.msra.mxu0 %v66
  %136 = vmatprep.subr.mxu0 0.0
  %137 = vmatpush2.msra.mxu0 %v65
  %138 = vmatprep.subr.mxu0 0.0
  %139 = vmatpush2.msra.mxu0 %v64
  %140 = vmatprep.subr.mxu0 0.0
  %141 = vmatpush2.msra.mxu0 %v63
  %142 = vmatprep.subr.mxu0 0.0
  %143 = vmatpush2.msra.mxu0 %v62
  %144 = vmatprep.subr.mxu0 0.0
  %145 = vmatpush2.msra.mxu0 %v61
  %146 = vmatprep.subr.mxu0 0.0
  %147 = vmatpush2.msra.mxu0 %v60
  %148 = vmatprep.subr.mxu0 0.0
  %149 = vmatpush2.msra.mxu0 %v59
  %150 = vmatprep.subr.mxu0 0.0
  %151 = vmatpush2.msra.mxu0 %v58
  %152 = vmatprep.subr.mxu0 0.0
  %153 = vmatpush2.msra.mxu0 %v57
  %154 = vmatprep.subr.mxu0 0.0
  %155 = vmatpush2.msra.mxu0 %v56
  %156 = vmatprep.subr.mxu0 0.0
  %157 = vmatpush2.msra.mxu0 %v55
  %158 = vmatprep.subr.mxu0 0.0
  %159 = vmatpush2.msra.mxu0 %v54
  %160 = vmatprep.subr.mxu0 0.0
  %161 = vmatpush2.msra.mxu0 %v53
  %162 = vmatprep.subr.mxu0 0.0
  %163 = vmatpush2.msra.mxu0 %v52
  %164 = vmatprep.mubr.f32.mxu0 %v25
  %165 = vmatmul.mubr.f32.gmra.mxu0 %v24
  %v166 = vpop.f32.mrf.mxu0
  %v167 = vadd.f32 0.0, %v166
  %v168 = vpop.f32.mrf.mxu0
  %169 = vmatprep.mubr.f32.mxu0 %v29
  %170 = vmatmul.mubr.f32.gmra.mxu0 %v28
  %v171 = vpop.f32.mrf.mxu0
  %v172 = vadd.f32 0.0, %v171
  %v173 = vpop.f32.mrf.mxu0
  %174 = vmatprep.mubr.f32.mxu0 %v33
  %175 = vmatmul.mubr.f32.gmra.mxu0 %v32
  %v176 = vpop.f32.mrf.mxu0
  %v177 = vadd.f32 0.0, %v176
  %v178 = vpop.f32.mrf.mxu0
  %179 = vdwg.mxu0
  %180 = vmatprep.subr.mxu0 0.0
  %181 = vmatpush1.msra.mxu0 %v83
  %182 = vmatprep.subr.mxu0 0.0
  %183 = vmatpush1.msra.mxu0 %v82
  %184 = vmatprep.subr.mxu0 0.0
  %185 = vmatpush1.msra.mxu0 %v81
  %186 = vmatprep.subr.mxu0 0.0
  %187 = vmatpush1.msra.mxu0 %v80
  %188 = vmatprep.subr.mxu0 0.0
  %189 = vmatpush1.msra.mxu0 %v79
  %190 = vmatprep.subr.mxu0 0.0
  %191 = vmatpush1.msra.mxu0 %v78
  %192 = vmatprep.subr.mxu0 0.0
  %193 = vmatpush1.msra.mxu0 %v77
  %194 = vmatprep.subr.mxu0 0.0
  %195 = vmatpush1.msra.mxu0 %v76
  %196 = vmatprep.subr.mxu0 0.0
  %197 = vmatpush1.msra.mxu0 %v75
  %198 = vmatprep.subr.mxu0 0.0
  %199 = vmatpush1.msra.mxu0 %v74
  %200 = vmatprep.subr.mxu0 0.0
  %201 = vmatpush1.msra.mxu0 %v73
  %202 = vmatprep.subr.mxu0 0.0
  %203 = vmatpush1.msra.mxu0 %v72
  %204 = vmatprep.subr.mxu0 0.0
  %205 = vmatpush1.msra.mxu0 %v71
  %206 = vmatprep.subr.mxu0 0.0
  %207 = vmatpush1.msra.mxu0 %v70
  %208 = vmatprep.subr.mxu0 0.0
  %209 = vmatpush1.msra.mxu0 %v69
  %210 = vmatprep.subr.mxu0 0.0
  %211 = vmatpush1.msra.mxu0 %v68
  %212 = vmatprep.subr.mxu0 0.0
  %213 = vmatpush2.msra.mxu0 %v99
  %214 = vmatprep.subr.mxu0 0.0
  %215 = vmatpush2.msra.mxu0 %v98
  %216 = vmatprep.subr.mxu0 0.0
  %217 = vmatpush2.msra.mxu0 %v97
  %218 = vmatprep.subr.mxu0 0.0
  %219 = vmatpush2.msra.mxu0 %v96
  %220 = vmatprep.subr.mxu0 0.0
  %221 = vmatpush2.msra.mxu0 %v95
  %222 = vmatprep.subr.mxu0 0.0
  %223 = vmatpush2.msra.mxu0 %v94
  %224 = vmatprep.subr.mxu0 0.0
  %225 = vmatpush2.msra.mxu0 %v93
  %226 = vmatprep.subr.mxu0 0.0
  %227 = vmatpush2.msra.mxu0 %v92
  %228 = vmatprep.subr.mxu0 0.0
  %229 = vmatpush2.msra.mxu0 %v91
  %230 = vmatprep.subr.mxu0 0.0
  %231 = vmatpush2.msra.mxu0 %v90
  %232 = vmatprep.subr.mxu0 0.0
  %233 = vmatpush2.msra.mxu0 %v89
  %234 = vmatprep.subr.mxu0 0.0
  %235 = vmatpush2.msra.mxu0 %v88
  %236 = vmatprep.subr.mxu0 0.0
  %237 = vmatpush2.msra.mxu0 %v87
  %238 = vmatprep.subr.mxu0 0.0
  %239 = vmatpush2.msra.mxu0 %v86
  %240 = vmatprep.subr.mxu0 0.0
  %241 = vmatpush2.msra.mxu0 %v85
  %242 = vmatprep.subr.mxu0 0.0
  %243 = vmatpush2.msra.mxu0 %v84
  %244 = vmatprep.mubr.f32.mxu0 %v27
  %245 = vmatmul.mubr.f32.gmra.mxu0 %v26
  %v246 = vpop.f32.mrf.mxu0
  %v247 = vadd.f32 %v167, %v246
  %v248 = vpop.f32.mrf.mxu0
  %249 = vmatprep.mubr.f32.mxu0 %v31
  %250 = vmatmul.mubr.f32.gmra.mxu0 %v30
  %v251 = vpop.f32.mrf.mxu0
  %v252 = vadd.f32 %v172, %v251
  %v253 = vpop.f32.mrf.mxu0
  %254 = vmatprep.mubr.f32.mxu0 %v35
  %255 = vmatmul.mubr.f32.gmra.mxu0 %v34
  %v256 = vpop.f32.mrf.mxu0
  %v257 = vadd.f32 %v177, %v256
  %v258 = vpop.f32.mrf.mxu0
  %259 = vdwg.mxu0
  %v260 = vadd.f32 %v21, %v247
  %v261 = vadd.f32 %v22, %v252
  %v262 = vadd.f32 %v23, %v257
  %263 = vst [vmem:[#allocation2] sm:$0xff] %v260
  %264 = vst [vmem:[#allocation2 + $0x8] sm:$0xff] %v261
  %265 = vst [vmem:[#allocation2 + $0x10] sm:$0xff] %v262
  // Predicated region
  $region18: #{discriminator_forward.13} parent=0 // pred_check
    %p266 = pneg %p14
  $region19: #{discriminator_forward.13} parent=0 // pred_check_branch
    %268 = sbr.rel (%p266) target = $region21
  $region20: #{discriminator_forward.13} parent=0 // pred_region
    %v269 = vld [vmem:[#allocation2] sm:$0xff]
    %v270 = vld [vmem:[#allocation2 + $0x8] sm:$0xff]
    %v271 = vld [vmem:[#allocation2 + $0x10] sm:$0xff]
    %v272 = vld [vmem:[%s2] sm:$0x1]
    %v274 = vlaneseq
    %v275 = vshrl.u32 %v274, 7
    %v276 = vsub.s32 0, %v275
    %v277 = vrot.slane %v272, %v276
    %v279 = vadd.f32 %v269, %v277
    %v280 = vadd.f32 %v270, %v277
    %v281 = vadd.f32 %v271, %v277
    %282 = vst [vmem:[%s3] sm:$0xff] %v279
    %283 = vst [vmem:[%s3 + $0x8] sm:$0xff] %v280
    %284 = vst [vmem:[%s3 + $0x10] sm:$0xff] %v281
  $region21: #{discriminator_forward.13} parent=0 // pred_fallthru
    _
  // Predicated region
  $region22: #{discriminator_forward.13} parent=0 // pred_check
    _
  $region23: #{discriminator_forward.13} parent=0 // pred_check_branch
    %286 = sbr.rel (0) target = $region25
  $region24: #{discriminator_forward.13} parent=0 // pred_region
    _
  $region25: #{discriminator_forward.13} parent=0 // pred_fallthru
    _
  // Predicated region
  $region26: #{discriminator_forward.13} parent=0 // pred_check
    _
  $region27: #{discriminator_forward.13} parent=0 // pred_check_branch
    %288 = sbr.rel (0) target = $region29
  $region28: #{discriminator_forward.13} parent=0 // pred_region
    _
  $region29: #{discriminator_forward.13} parent=0 // pred_fallthru
    _

// kernel: discriminator_forward.14
$region0: #{discriminator_forward.14}
  #allocation0 [shape = 'u32[]', space=smem, size = 0x4, offset = 0x4, fixed_abs, tag = 'smem constant byte address 0x4 - core index']
  #allocation1 [shape = 'u32[144,128]{1,0:T(1,128)}', space=vmem, size = 0x12000, scoped, tag = 'internal scratch']
  %s0 = inlined_call_operand.vmem [shape: f32[2,9,128], index: 0, kind: input, shape index: {}]
  %s1 = inlined_call_operand.vmem [shape: f32[2,9,128], index: 1, kind: output, shape index: {}]
  %s2 = sld [smem:[#allocation0]]
  $region37: #{discriminator_forward.14} parent=0
    _
  %s4 = ssub.s32 1, %s2
  %s5 = scalar_select 0, %s4, %s2
  loop: start=0, step=1, limit=4
  $region2: #{discriminator_forward.14} parent=0 // loop_pre_header
    _
  $region3: #{discriminator_forward.14} parent=0 // loop_header
    %s7 = sphi 0, %s11
    %p8 = scmp.ge.s32.totalorder %s7, 4
    %s14 = sphi 0, %s26
    %s15 = sphi 0, %s22
    %s16 = sphi 0, %s14
    %s17 = sphi 0, %s15
    %s18 = sphi 0, %s16
    %s19 = sphi 0, %s17
    %s31 = sphi 0, %s33
    %s34 = sphi 0, %s31
    %s35 = sphi 0, %s34
    %s51 = sphi 0, %s35
    %s59 = sphi 0, %s61
    %s62 = sphi 0, %s59
    %s63 = sphi 0, %s62
    %s79 = sphi 0, %s63
  $region4: #{discriminator_forward.14} parent=0 // loop_header_branch
    %10 = sbr.rel (%p8) target = $region8
  $region5: #{discriminator_forward.14} parent=0 // loop_body
    %s12 = ssub.s32 %s7, 1
    %s13 = ssub.s32 %s7, 2
    %s20 = sadd.s32 1, %s15
    %p21 = scmp.ge.s32.totalorder %s20, 1
    %s22 = scalar_select %p21, 0, %s20
    %s23 = sadd.s32 1, %s14
    %s24 = scalar_select %p21, %s23, %s14
    %p25 = scmp.ge.s32.totalorder %s24, 2
    %s26 = scalar_select %p25, 0, %s24
    %s27 = ssub.s32 %s14, %s26
    %s28 = ssub.s32 %s15, %s22
    %s29 = sor.u32 %s27, %s28
    %p30 = scmp.eq.s32.totalorder %s29, 0
    %s32 = sadd.s32 %s31, 1
    %s33 = scalar_select %p30, %s31, %s32
    %p36 = pneg %p30
    %p37 = scmp.eq.s32.totalorder %s7, 1
    %p38 = por %p36, %p37
    %p39 = scmp.ne.s32.totalorder %s31, %s34
    %p40 = scmp.eq.s32.totalorder %s7, 0
    %p41 = por %p39, %p40
    %p42 = scmp.ne.s32.totalorder %s31, %s34
    %p43 = scmp.eq.s32.totalorder %s12, 1
    %p44 = por %p42, %p43
    %p45 = scmp.ne.s32.totalorder %s34, %s35
    %p46 = scmp.eq.s32.totalorder %s12, 0
    %p47 = por %p45, %p46
    %p48 = scmp.ne.s32.totalorder %s34, %s35
    %p49 = scmp.eq.s32.totalorder %s13, 1
    %p50 = por %p48, %p49
    %p52 = scmp.ne.s32.totalorder %s35, %s51
    %p53 = scmp.eq.s32.totalorder %s13, 0
    %p54 = por %p52, %p53
    %s55 = ssub.s32 %s14, %s26
    %s56 = ssub.s32 %s15, %s22
    %s57 = sor.u32 %s55, %s56
    %p58 = scmp.eq.s32.totalorder %s57, 0
    %s60 = sadd.s32 %s59, 1
    %s61 = scalar_select %p58, %s59, %s60
    %p64 = pneg %p58
    %p65 = scmp.eq.s32.totalorder %s7, 1
    %p66 = por %p64, %p65
    %p67 = scmp.ne.s32.totalorder %s59, %s62
    %p68 = scmp.eq.s32.totalorder %s7, 0
    %p69 = por %p67, %p68
    %p70 = scmp.ne.s32.totalorder %s59, %s62
    %p71 = scmp.eq.s32.totalorder %s12, 1
    %p72 = por %p70, %p71
    %p73 = scmp.ne.s32.totalorder %s62, %s63
    %p74 = scmp.eq.s32.totalorder %s12, 0
    %p75 = por %p73, %p74
    %p76 = scmp.ne.s32.totalorder %s62, %s63
    %p77 = scmp.eq.s32.totalorder %s13, 1
    %p78 = por %p76, %p77
    %p80 = scmp.ne.s32.totalorder %s63, %s79
    %p81 = scmp.eq.s32.totalorder %s13, 0
    %p82 = por %p80, %p81
    %p83 = scmp.le.s32.totalorder 1, %s7
    %p84 = scmp.lt.s32.totalorder %s7, 3
    %p85 = pnand %p83, %p84
    %p86 = pneg %p85
    // Predicated region
    $region9: #{discriminator_forward.14} parent=5 // pred_check
      _
    $region10: #{discriminator_forward.14} parent=5 // pred_check_branch
      %88 = sbr.rel (%p85) target = $region12
    $region11: #{discriminator_forward.14} parent=5 // pred_region
      %s89 = ssub.s32 %s7, 1
    $region12: #{discriminator_forward.14} parent=5 // pred_fallthru
      _
    %p90 = scmp.lt.s32.totalorder %s7, 2
    // Predicated region
    $region13: #{discriminator_forward.14} parent=5 // pred_check
      %p91 = pneg %p90
    $region14: #{discriminator_forward.14} parent=5 // pred_check_branch
      %93 = sbr.rel (%p91) target = $region16
    $region15: #{discriminator_forward.14} parent=5 // pred_region
      // Predicated region
      $region17: #{discriminator_forward.14} parent=15 // pred_check
        %p94 = pneg %p41
      $region18: #{discriminator_forward.14} parent=15 // pred_check_branch
        %96 = sbr.rel (%p94) target = $region20
      $region19: #{discriminator_forward.14} parent=15 // pred_region
        %p97 = scmp.lt.s32.totalorder %s14, 1
        %s98 = scalar_select %p97, %s14, 1
        %p99 = scmp.lt.s32.totalorder %s15, 0
        %s100 = scalar_select %p99, %s15, 0
        %s101 = smul.addr %s98, 2
        %s102 = sadd.s32 %s100, %s101
        %s103 = smul.addr %s102, 8
        %s104 = scalar_lea.vmem %s0, %s103
      $region20: #{discriminator_forward.14} parent=15 // pred_fallthru
        _
    $region16: #{discriminator_forward.14} parent=5 // pred_fallthru
      _
    %p105 = scmp.le.s32.totalorder 1, %s7
    %p106 = scmp.lt.s32.totalorder %s7, 3
    %p107 = pnand %p105, %p106
    %p108 = pneg %p107
    // Predicated region
    $region21: #{discriminator_forward.14} parent=5 // pred_check
      _
    $region22: #{discriminator_forward.14} parent=5 // pred_check_branch
      %110 = sbr.rel (%p107) target = $region24
    $region23: #{discriminator_forward.14} parent=5 // pred_region
      %s111 = ssub.s32 %s7, 1
      %p112 = scmp.lt.s32.totalorder %s16, 1
      %s113 = scalar_select %p112, %s16, 1
      %p114 = scmp.lt.s32.totalorder %s17, 0
      %s115 = scalar_select %p114, %s17, 0
      %s116 = smul.addr %s113, 2
      %s117 = sadd.s32 %s115, %s116
      %s118 = smul.addr %s117, 8
      %s119 = scalar_lea.vmem %s0, %s118
      %p120 = pneg %p47
      %p121 = pneg %p44
      %p122 = pneg %p75
      %p123 = pneg %p72
      %p124 = scmp.lt.s32.totalorder %s16, 1
      %s125 = scalar_select %p124, %s16, 1
      %p126 = scmp.lt.s32.totalorder %s17, 0
      %s127 = scalar_select %p126, %s17, 0
      %s128 = smul.addr %s125, 2
      %s129 = sadd.s32 %s127, %s128
      %s130 = smul.addr %s129, 8
      %s131 = scalar_lea.vmem %s1, %s130
      %p132 = scmp.lt.s32.totalorder %s16, 1
      %s133 = scalar_select %p132, %s16, 1
      %p134 = scmp.lt.s32.totalorder %s17, 0
      %s135 = scalar_select %p134, %s17, 0
      %s136 = smul.addr %s133, 2
      %s137 = sadd.s32 %s135, %s136
      %s138 = smul.addr %s137, 8
      %s139 = scalar_lea.vmem %s0, %s138
      %p140 = scmp.lt.s32.totalorder %s16, 1
      %s141 = scalar_select %p140, %s16, 1
      %p142 = scmp.lt.s32.totalorder %s17, 0
      %s143 = scalar_select %p142, %s17, 0
      %s144 = smul.addr %s141, 2
      %s145 = sadd.s32 %s143, %s144
      %s146 = smul.addr %s145, 8
      %s147 = scalar_lea.vmem %s1, %s146
      %v148 = vld [vmem:[%s139] sm:$0xff]
      %v149 = vld [vmem:[%s139 + $0x8] sm:$0x1]
      %vm150 = vcmask 1040384
      %v151 = vsel %vm150, %v149, 0.0
      %v152 = vadd.f32 %v148, %v151
      %v153 = vrot.slane %v152, 4
      %v154 = vadd.f32 %v152, %v153
      %v155 = vrot.slane %v154, 2
      %v156 = vadd.f32 %v154, %v155
      %v157 = vrot.slane %v156, 1
      %v158 = vadd.f32 %v156, %v157
      %v159 = vrcp.pop 9.0
      %v160 = vmul.f32 %v158, %v159
      %v161 = vsub.f32 %v148, %v160
      %v162 = vsub.f32 %v149, %v160
      %v163 = vmul.f32 %v161, %v161
      %v164 = vmul.f32 %v162, %v162
      %v165 = vsel %vm150, %v164, 0.0
      %v166 = vadd.f32 %v163, %v165
      %v167 = vrot.slane %v166, 4
      %v168 = vadd.f32 %v166, %v167
      %v169 = vrot.slane %v168, 2
      %v170 = vadd.f32 %v168, %v169
      %v171 = vrot.slane %v170, 1
      %v172 = vadd.f32 %v170, %v171
      %v173 = vmul.f32 %v172, %v159
      %v174 = vadd.f32 %v173, 1e-05
      %v175 = vrsqrt.pop %v174
      %v176 = vmul.f32 %v161, %v175
      %v177 = vmul.f32 %v162, %v175
      %vm178 = vcmp.ge.f32.partialorder %v176, 0.0
      %vm179 = vcmp.ge.f32.partialorder %v177, 0.0
      %v180 = vmul.f32 %v176, 0.2
      %v181 = vmul.f32 %v177, 0.2
      %v182 = vsel %vm178, %v176, %v180
      %v183 = vsel %vm179, %v177, %v181
      %184 = vst [vmem:[%s147] sm:$0xff] %v182
      %185 = vst [vmem:[%s147 + $0x8] sm:$0x1] %v183
      %p186 = scmp.lt.s32.totalorder %s16, 1
      %s187 = scalar_select %p186, %s16, 1
      %p188 = scmp.lt.s32.totalorder %s17, 0
      %s189 = scalar_select %p188, %s17, 0
      %s190 = smul.addr %s187, 2
      %s191 = sadd.s32 %s189, %s190
      %s192 = smul.addr %s191, 8
      %s193 = scalar_lea.vmem %s1, %s192
      // Predicated region
      $region25: #{discriminator_forward.14} parent=23 // pred_check
        %p194 = pneg %p72
      $region26: #{discriminator_forward.14} parent=23 // pred_check_branch
        %196 = sbr.rel (%p194) target = $region28
      $region27: #{discriminator_forward.14} parent=23 // pred_region
        _
      $region28: #{discriminator_forward.14} parent=23 // pred_fallthru
        _
    $region24: #{discriminator_forward.14} parent=5 // pred_fallthru
      _
    %p197 = scmp.le.s32.totalorder 2, %s7
    // Predicated region
    $region29: #{discriminator_forward.14} parent=5 // pred_check
      %p198 = pneg %p197
    $region30: #{discriminator_forward.14} parent=5 // pred_check_branch
      %200 = sbr.rel (%p198) target = $region32
    $region31: #{discriminator_forward.14} parent=5 // pred_region
      %s201 = ssub.s32 %s7, 2
      // Predicated region
      $region33: #{discriminator_forward.14} parent=31 // pred_check
        %p202 = pneg %p78
      $region34: #{discriminator_forward.14} parent=31 // pred_check_branch
        %204 = sbr.rel (%p202) target = $region36
      $region35: #{discriminator_forward.14} parent=31 // pred_region
        %p205 = scmp.lt.s32.totalorder %s18, 1
        %s206 = scalar_select %p205, %s18, 1
        %p207 = scmp.lt.s32.totalorder %s19, 0
        %s208 = scalar_select %p207, %s19, 0
        %s209 = smul.addr %s206, 2
        %s210 = sadd.s32 %s208, %s209
        %s211 = smul.addr %s210, 8
        %s212 = scalar_lea.vmem %s1, %s211
      $region36: #{discriminator_forward.14} parent=31 // pred_fallthru
        _
    $region32: #{discriminator_forward.14} parent=5 // pred_fallthru
      _
  $region6: #{discriminator_forward.14} parent=0 // loop_footer
    %s11 = sadd.s32 1, %s7
  $region7: #{discriminator_forward.14} parent=0 // loop_footer_branch
    %6 = sbr.rel target = $region3
  $region8: #{discriminator_forward.14} parent=0 // loop_exit
    _

// kernel: discriminator_forward.15
$region0: #{discriminator_forward.15}
  #allocation0 [shape = 'u32[]', space=smem, size = 0x4, offset = 0x4, fixed_abs, tag = 'smem constant byte address 0x4 - core index']
  #allocation1 [shape = 'u32[144,128]{1,0:T(1,128)}', space=vmem, size = 0x12000, scoped, tag = 'internal scratch']
  #allocation2 [shape = 'f32[8,128]{1,0:T(8,128)}', space=vmem, size = 0x1000, scoped, tag = 'scratch operand']
  %s0 = inlined_call_operand.vmem [shape: f32[8,1024], index: 0, kind: input, shape index: {}]
  %s1 = inlined_call_operand.vmem [shape: f32[1024,128], index: 1, kind: input, shape index: {}]
  %s2 = inlined_call_operand.vmem [shape: f32[1,128], index: 2, kind: input, shape index: {}]
  %s3 = inlined_call_operand.vmem [shape: f32[8,128], index: 3, kind: output, shape index: {}]
  %s4 = sld [smem:[#allocation0]]
  $region53: #{discriminator_forward.15} parent=0
    _
  %s6 = ssub.s32 1, %s4
  %s7 = scalar_select 0, %s6, %s4
  loop: start=0, step=1, limit=4
  $region2: #{discriminator_forward.15} parent=0 // loop_pre_header
    _
  $region3: #{discriminator_forward.15} parent=0 // loop_header
    %s9 = sphi 0, %s13
    %p10 = scmp.ge.s32.totalorder %s9, 4
    %s16 = sphi 0, %s35
    %s17 = sphi 0, %s31
    %s18 = sphi 0, %s27
    %s19 = sphi 0, %s16
    %s20 = sphi 0, %s17
    %s21 = sphi 0, %s18
    %s22 = sphi 0, %s19
    %s23 = sphi 0, %s20
    %s24 = sphi 0, %s21
    %s40 = sphi 0, %s42
    %s43 = sphi 0, %s40
    %s44 = sphi 0, %s43
    %s60 = sphi 0, %s44
    %s68 = sphi 0, %s70
    %s71 = sphi 0, %s68
    %s72 = sphi 0, %s71
    %s88 = sphi 0, %s72
    %s94 = sphi 0, %s96
    %s97 = sphi 0, %s94
    %s98 = sphi 0, %s97
    %s114 = sphi 0, %s98
    %s122 = sphi 0, %s124
    %s125 = sphi 0, %s122
    %s126 = sphi 0, %s125
    %s142 = sphi 0, %s126
  $region4: #{discriminator_forward.15} parent=0 // loop_header_branch
    %12 = sbr.rel (%p10) target = $region8
  $region5: #{discriminator_forward.15} parent=0 // loop_body
    %s14 = ssub.s32 %s9, 1
    %s15 = ssub.s32 %s9, 2
    %s25 = sadd.s32 1, %s18
    %p26 = scmp.ge.s32.totalorder %s25, 2
    %s27 = scalar_select %p26, 0, %s25
    %s28 = sadd.s32 1, %s17
    %s29 = scalar_select %p26, %s28, %s17
    %p30 = scmp.ge.s32.totalorder %s29, 1
    %s31 = scalar_select %p30, 0, %s29
    %s32 = sadd.s32 1, %s16
    %s33 = scalar_select %p30, %s32, %s16
    %p34 = scmp.ge.s32.totalorder %s33, 1
    %s35 = scalar_select %p34, 0, %s33
    %s36 = ssub.s32 %s16, %s35
    %s37 = ssub.s32 %s18, %s27
    %s38 = sor.u32 %s36, %s37
    %p39 = scmp.eq.s32.totalorder %s38, 0
    %s41 = sadd.s32 %s40, 1
    %s42 = scalar_select %p39, %s40, %s41
    %p45 = pneg %p39
    %p46 = scmp.eq.s32.totalorder %s9, 1
    %p47 = por %p45, %p46
    %p48 = scmp.ne.s32.totalorder %s40, %s43
    %p49 = scmp.eq.s32.totalorder %s9, 0
    %p50 = por %p48, %p49
    %p51 = scmp.ne.s32.totalorder %s40, %s43
    %p52 = scmp.eq.s32.totalorder %s14, 1
    %p53 = por %p51, %p52
    %p54 = scmp.ne.s32.totalorder %s43, %s44
    %p55 = scmp.eq.s32.totalorder %s14, 0
    %p56 = por %p54, %p55
    %p57 = scmp.ne.s32.totalorder %s43, %s44
    %p58 = scmp.eq.s32.totalorder %s15, 1
    %p59 = por %p57, %p58
    %p61 = scmp.ne.s32.totalorder %s44, %s60
    %p62 = scmp.eq.s32.totalorder %s15, 0
    %p63 = por %p61, %p62
    %s64 = ssub.s32 %s18, %s27
    %s65 = ssub.s32 %s17, %s31
    %s66 = sor.u32 %s64, %s65
    %p67 = scmp.eq.s32.totalorder %s66, 0
    %s69 = sadd.s32 %s68, 1
    %s70 = scalar_select %p67, %s68, %s69
    %p73 = pneg %p67
    %p74 = scmp.eq.s32.totalorder %s9, 1
    %p75 = por %p73, %p74
    %p76 = scmp.ne.s32.totalorder %s68, %s71
    %p77 = scmp.eq.s32.totalorder %s9, 0
    %p78 = por %p76, %p77
    %p79 = scmp.ne.s32.totalorder %s68, %s71
    %p80 = scmp.eq.s32.totalorder %s14, 1
    %p81 = por %p79, %p80
    %p82 = scmp.ne.s32.totalorder %s71, %s72
    %p83 = scmp.eq.s32.totalorder %s14, 0
    %p84 = por %p82, %p83
    %p85 = scmp.ne.s32.totalorder %s71, %s72
    %p86 = scmp.eq.s32.totalorder %s15, 1
    %p87 = por %p85, %p86
    %p89 = scmp.ne.s32.totalorder %s72, %s88
    %p90 = scmp.eq.s32.totalorder %s15, 0
    %p91 = por %p89, %p90
    %s92 = ssub.s32 %s17, %s31
    %p93 = scmp.eq.s32.totalorder %s92, 0
    %s95 = sadd.s32 %s94, 1
    %s96 = scalar_select %p93, %s94, %s95
    %p99 = pneg %p93
    %p100 = scmp.eq.s32.totalorder %s9, 1
    %p101 = por %p99, %p100
    %p102 = scmp.ne.s32.totalorder %s94, %s97
    %p103 = scmp.eq.s32.totalorder %s9, 0
    %p104 = por %p102, %p103
    %p105 = scmp.ne.s32.totalorder %s94, %s97
    %p106 = scmp.eq.s32.totalorder %s14, 1
    %p107 = por %p105, %p106
    %p108 = scmp.ne.s32.totalorder %s97, %s98
    %p109 = scmp.eq.s32.totalorder %s14, 0
    %p110 = por %p108, %p109
    %p111 = scmp.ne.s32.totalorder %s97, %s98
    %p112 = scmp.eq.s32.totalorder %s15, 1
    %p113 = por %p111, %p112
    %p115 = scmp.ne.s32.totalorder %s98, %s114
    %p116 = scmp.eq.s32.totalorder %s15, 0
    %p117 = por %p115, %p116
    %s118 = ssub.s32 %s16, %s35
    %s119 = ssub.s32 %s17, %s31
    %s120 = sor.u32 %s118, %s119
    %p121 = scmp.eq.s32.totalorder %s120, 0
    %s123 = sadd.s32 %s122, 1
    %s124 = scalar_select %p121, %s122, %s123
    %p127 = pneg %p121
    %p128 = scmp.eq.s32.totalorder %s9, 1
    %p129 = por %p127, %p128
    %p130 = scmp.ne.s32.totalorder %s122, %s125
    %p131 = scmp.eq.s32.totalorder %s9, 0
    %p132 = por %p130, %p131
    %p133 = scmp.ne.s32.totalorder %s122, %s125
    %p134 = scmp.eq.s32.totalorder %s14, 1
    %p135 = por %p133, %p134
    %p136 = scmp.ne.s32.totalorder %s125, %s126
    %p137 = scmp.eq.s32.totalorder %s14, 0
    %p138 = por %p136, %p137
    %p139 = scmp.ne.s32.totalorder %s125, %s126
    %p140 = scmp.eq.s32.totalorder %s15, 1
    %p141 = por %p139, %p140
    %p143 = scmp.ne.s32.totalorder %s126, %s142
    %p144 = scmp.eq.s32.totalorder %s15, 0
    %p145 = por %p143, %p144
    %p146 = scmp.le.s32.totalorder 1, %s9
    %p147 = scmp.lt.s32.totalorder %s9, 3
    %p148 = pnand %p146, %p147
    %p149 = pneg %p148
    // Predicated region
    $region9: #{discriminator_forward.15} parent=5 // pred_check
      _
    $region10: #{discriminator_forward.15} parent=5 // pred_check_branch
      %151 = sbr.rel (%p148) target = $region12
    $region11: #{discriminator_forward.15} parent=5 // pred_region
      %s152 = ssub.s32 %s9, 1
      // Predicated region
      $region13: #{discriminator_forward.15} parent=11 // pred_check
        %p153 = pneg %p110
      $region14: #{discriminator_forward.15} parent=11 // pred_check_branch
        %155 = sbr.rel (%p153) target = $region16
      $region15: #{discriminator_forward.15} parent=11 // pred_region
        %p156 = scmp.lt.s32.totalorder %s20, 0
        %s157 = scalar_select %p156, %s20, 0
        %s158 = scalar_lea.vmem %s2, %s157
      $region16: #{discriminator_forward.15} parent=11 // pred_fallthru
        _
    $region12: #{discriminator_forward.15} parent=5 // pred_fallthru
      _
    %p159 = scmp.lt.s32.totalorder %s9, 2
    // Predicated region
    $region17: #{discriminator_forward.15} parent=5 // pred_check
      %p160 = pneg %p159
    $region18: #{discriminator_forward.15} parent=5 // pred_check_branch
      %162 = sbr.rel (%p160) target = $region20
    $region19: #{discriminator_forward.15} parent=5 // pred_region
      // Predicated region
      $region21: #{discriminator_forward.15} parent=19 // pred_check
        %p163 = pneg %p50
      $region22: #{discriminator_forward.15} parent=19 // pred_check_branch
        %165 = sbr.rel (%p163) target = $region24
      $region23: #{discriminator_forward.15} parent=19 // pred_region
        %s166 = smul.u32 4, %s18
        %p167 = scmp.lt.s32.totalorder %s16, 0
        %s168 = scalar_select %p167, %s16, 0
        %p169 = scmp.lt.s32.totalorder %s166, 7
        %s170 = scalar_select %p169, %s166, 7
        %s171 = smul.addr %s168, 8
        %s172 = sadd.s32 %s170, %s171
        %s173 = smul.addr %s172, 8
        %s174 = scalar_lea.vmem %s0, %s173
        %s175 = smul.u32 4, %s18
      $region24: #{discriminator_forward.15} parent=19 // pred_fallthru
        _
      // Predicated region
      $region25: #{discriminator_forward.15} parent=19 // pred_check
        %p176 = pneg %p78
      $region26: #{discriminator_forward.15} parent=19 // pred_check_branch
        %178 = sbr.rel (%p176) target = $region28
      $region27: #{discriminator_forward.15} parent=19 // pred_region
        %s179 = smul.u32 64, %s18
        %p180 = scmp.lt.s32.totalorder %s179, 127
        %s181 = scalar_select %p180, %s179, 127
        %p182 = scmp.lt.s32.totalorder %s17, 0
        %s183 = scalar_select %p182, %s17, 0
        %s184 = sadd.s32 %s183, %s181
        %s185 = smul.addr %s184, 8
        %s186 = scalar_lea.vmem %s1, %s185
        %s187 = smul.u32 64, %s18
      $region28: #{discriminator_forward.15} parent=19 // pred_fallthru
        _
    $region20: #{discriminator_forward.15} parent=5 // pred_fallthru
      _
    %p188 = scmp.le.s32.totalorder 1, %s9
    %p189 = scmp.lt.s32.totalorder %s9, 3
    %p190 = pnand %p188, %p189
    %p191 = pneg %p190
    // Predicated region
    $region29: #{discriminator_forward.15} parent=5 // pred_check
      _
    $region30: #{discriminator_forward.15} parent=5 // pred_check_branch
      %193 = sbr.rel (%p190) target = $region32
    $region31: #{discriminator_forward.15} parent=5 // pred_region
      %s194 = ssub.s32 %s9, 1
      %s195 = smul.u32 4, %s21
      %p196 = scmp.lt.s32.totalorder %s19, 0
      %s197 = scalar_select %p196, %s19, 0
      %p198 = scmp.lt.s32.totalorder %s195, 7
      %s199 = scalar_select %p198, %s195, 7
      %s200 = smul.addr %s197, 8
      %s201 = sadd.s32 %s199, %s200
      %s202 = smul.addr %s201, 8
      %s203 = scalar_lea.vmem %s0, %s202
      %p204 = pneg %p56
      %p205 = pneg %p53
      %s206 = smul.u32 64, %s21
      %p207 = scmp.lt.s32.totalorder %s206, 127
      %s208 = scalar_select %p207, %s206, 127
      %p209 = scmp.lt.s32.totalorder %s20, 0
      %s210 = scalar_select %p209, %s20, 0
      %s211 = sadd.s32 %s210, %s208
      %s212 = smul.addr %s211, 8
      %s213 = scalar_lea.vmem %s1, %s212
      %p214 = pneg %p84
      %p215 = pneg %p81
      %p216 = scmp.lt.s32.totalorder %s20, 0
      %s217 = scalar_select %p216, %s20, 0
      %s218 = scalar_lea.vmem %s2, %s217
      %p219 = pneg %p110
      %p220 = pneg %p107
      %p221 = pneg %p138
      %p222 = pneg %p135
      %p223 = scmp.lt.s32.totalorder %s19, 0
      %s224 = scalar_select %p223, %s19, 0
      %p225 = scmp.lt.s32.totalorder %s20, 0
      %s226 = scalar_select %p225, %s20, 0
      %s227 = sadd.s32 %s226, %s224
      %s228 = smul.addr %s227, 8
      %s229 = scalar_lea.vmem %s3, %s228
      %s230 = smul.u32 4, %s21
      %p231 = scmp.lt.s32.totalorder %s19, 0
      %s232 = scalar_select %p231, %s19, 0
      %p233 = scmp.lt.s32.totalorder %s230, 7
      %s234 = scalar_select %p233, %s230, 7
      %s235 = smul.addr %s232, 8
      %s236 = sadd.s32 %s234, %s235
      %s237 = smul.addr %s236, 8
      %s238 = scalar_lea.vmem %s0, %s237
      %s239 = smul.u32 4, %s21
      %s240 = smul.u32 64, %s21
      %p241 = scmp.lt.s32.totalorder %s240, 127
      %s242 = scalar_select %p241, %s240, 127
      %p243 = scmp.lt.s32.totalorder %s20, 0
      %s244 = scalar_select %p243, %s20, 0
      %s245 = sadd.s32 %s244, %s242
      %s246 = smul.addr %s245, 8
      %s247 = scalar_lea.vmem %s1, %s246
      %s248 = smul.u32 64, %s21
      %p249 = scmp.lt.s32.totalorder %s20, 0
      %s250 = scalar_select %p249, %s20, 0
      %s251 = scalar_lea.vmem %s2, %s250
      %p252 = scmp.lt.s32.totalorder %s19, 0
      %s253 = scalar_select %p252, %s19, 0
      %p254 = scmp.lt.s32.totalorder %s20, 0
      %s255 = scalar_select %p254, %s20, 0
      %s256 = sadd.s32 %s255, %s253
      %s257 = smul.addr %s256, 8
      %s258 = scalar_lea.vmem %s3, %s257
      %p259 = scmp.eq.s32.totalorder %s21, 0
      // Predicated region
      $region33: #{discriminator_forward.15} parent=31 // pred_check
        %p260 = pneg %p259
      $region34: #{discriminator_forward.15} parent=31 // pred_check_branch
        %262 = sbr.rel (%p260) target = $region36
      $region35: #{discriminator_forward.15} parent=31 // pred_region
        %263 = vst [vmem:[#allocation2] sm:$0xff] 0.0
      $region36: #{discriminator_forward.15} parent=31 // pred_fallthru
        _
      %v264 = vld [vmem:[#allocation2] sm:$0xff]
      %v265 = vld [vmem:[%s238] sm:$0xff]
      %v266 = vld [vmem:[%s238 + $0x8] sm:$0xff]
      %v267 = vld [vmem:[%s238 + $0x10] sm:$0xff]
      %v268 = vld [vmem:[%s238 + $0x18] sm:$0xff]
      %v269 = vld [vmem:[%s247] sm:$0xff]
      %v270 = vld [vmem:[%s247 + $0x8] sm:$0xff]
      %v271 = vld [vmem:[%s247 + $0x10] sm:$0xff]
      %v272 = vld [vmem:[%s247 + $0x18] sm:$0xff]
      %v273 = vld [vmem:[%s247 + $0x20] sm:$0xff]
      %v274 = vld [vmem:[%s247 + $0x28] sm:$0xff]
      %v275 = vld [vmem:[%s247 + $0x30] sm:$0xff]
      %v276 = vld [vmem:[%s247 + $0x38] sm:$0xff]
      %v277 = vld [vmem:[%s247 + $0x40] sm:$0xff]
      %v278 = vld [vmem:[%s247 + $0x48] sm:$0xff]
      %v279 = vld [vmem:[%s247 + $0x50] sm:$0xff]
      %v280 = vld [vmem:[%s247 + $0x58] sm:$0xff]
      %v281 = vld [vmem:[%s247 + $0x60] sm:$0xff]
      %v282 = vld [vmem:[%s247 + $0x68] sm:$0xff]
      %v283 = vld [vmem:[%s247 + $0x70] sm:$0xff]
      %v284 = vld [vmem:[%s247 + $0x78] sm:$0xff]
      %v285 = vld [vmem:[%s247 + $0x80] sm:$0xff]
      %v286 = vld [vmem:[%s247 + $0x88] sm:$0xff]
      %v287 = vld [vmem:[%s247 + $0x90] sm:$0xff]
      %v288 = vld [vmem:[%s247 + $0x98] sm:$0xff]
      %v289 = vld [vmem:[%s247 + $0xa0] sm:$0xff]
      %v290 = vld [vmem:[%s247 + $0xa8] sm:$0xff]
      %v291 = vld [vmem:[%s247 + $0xb0] sm:$0xff]
      %v292 = vld [vmem:[%s247 + $0xb8] sm:$0xff]
      %v293 = vld [vmem:[%s247 + $0xc0] sm:$0xff]
      %v294 = vld [vmem:[%s247 + $0xc8] sm:$0xff]
      %v295 = vld [vmem:[%s247 + $0xd0] sm:$0xff]
      %v296 = vld [vmem:[%s247 + $0xd8] sm:$0xff]
      %v297 = vld [vmem:[%s247 + $0xe0] sm:$0xff]
      %v298 = vld [vmem:[%s247 + $0xe8] sm:$0xff]
      %v299 = vld [vmem:[%s247 + $0xf0] sm:$0xff]
      %v300 = vld [vmem:[%s247 + $0xf8] sm:$0xff]
      %v301 = vld [vmem:[%s247 + $0x100] sm:$0xff]
      %v302 = vld [vmem:[%s247 + $0x108] sm:$0xff]
      %v303 = vld [vmem:[%s247 + $0x110] sm:$0xff]
      %v304 = vld [vmem:[%s247 + $0x118] sm:$0xff]
      %v305 = vld [vmem:[%s247 + $0x120] sm:$0xff]
      %v306 = vld [vmem:[%s247 + $0x128] sm:$0xff]
      %v307 = vld [vmem:[%s247 + $0x130] sm:$0xff]
      %v308 = vld [vmem:[%s247 + $0x138] sm:$0xff]
      %v309 = vld [vmem:[%s247 + $0x140] sm:$0xff]
      %v310 = vld [vmem:[%s247 + $0x148] sm:$0xff]
      %v311 = vld [vmem:[%s247 + $0x150] sm:$0xff]
      %v312 = vld [vmem:[%s247 + $0x158] sm:$0xff]
      %v313 = vld [vmem:[%s247 + $0x160] sm:$0xff]
      %v314 = vld [vmem:[%s247 + $0x168] sm:$0xff]
      %v315 = vld [vmem:[%s247 + $0x170] sm:$0xff]
      %v316 = vld [vmem:[%s247 + $0x178] sm:$0xff]
      %v317 = vld [vmem:[%s247 + $0x180] sm:$0xff]
      %v318 = vld [vmem:[%s247 + $0x188] sm:$0xff]
      %v319 = vld [vmem:[%s247 + $0x190] sm:$0xff]
      %v320 = vld [vmem:[%s247 + $0x198] sm:$0xff]
      %v321 = vld [vmem:[%s247 + $0x1a0] sm:$0xff]
      %v322 = vld [vmem:[%s247 + $0x1a8] sm:$0xff]
      %v323 = vld [vmem:[%s247 + $0x1b0] sm:$0xff]
      %v324 = vld [vmem:[%s247 + $0x1b8] sm:$0xff]
      %v325 = vld [vmem:[%s247 + $0x1c0] sm:$0xff]
      %v326 = vld [vmem:[%s247 + $0x1c8] sm:$0xff]
      %v327 = vld [vmem:[%s247 + $0x1d0] sm:$0xff]
      %v328 = vld [vmem:[%s247 + $0x1d8] sm:$0xff]
      %v329 = vld [vmem:[%s247 + $0x1e0] sm:$0xff]
      %v330 = vld [vmem:[%s247 + $0x1e8] sm:$0xff]
      %v331 = vld [vmem:[%s247 + $0x1f0] sm:$0xff]
      %v332 = vld [vmem:[%s247 + $0x1f8] sm:$0xff]
      %333 = vmatprep.subr.mxu0 0.0
      %334 = vmatpush1.msra.mxu0 %v284
      %335 = vmatprep.subr.mxu0 0.0
      %336 = vmatpush1.msra.mxu0 %v283
      %337 = vmatprep.subr.mxu0 0.0
      %338 = vmatpush1.msra.mxu0 %v282
      %339 = vmatprep.subr.mxu0 0.0
      %340 = vmatpush1.msra.mxu0 %v281
      %341 = vmatprep.subr.mxu0 0.0
      %342 = vmatpush1.msra.mxu0 %v280
      %343 = vmatprep.subr.mxu0 0.0
      %344 = vmatpush1.msra.mxu0 %v279
      %345 = vmatprep.subr.mxu0 0.0
      %346 = vmatpush1.msra.mxu0 %v278
      %347 = vmatprep.subr.mxu0 0.0
      %348 = vmatpush1.msra.mxu0 %v277
      %349 = vmatprep.subr.mxu0 0.0
      %350 = vmatpush1.msra.mxu0 %v276
      %351 = vmatprep.subr.mxu0 0.0
      %352 = vmatpush1.msra.mxu0 %v275
      %353 = vmatprep.subr.mxu0 0.0
      %354 = vmatpush1.msra.mxu0 %v274
      %355 = vmatprep.subr.mxu0 0.0
      %356 = vmatpush1.msra.mxu0 %v273
      %357 = vmatprep.subr.mxu0 0.0
      %358 = vmatpush1.msra.mxu0 %v272
      %359 = vmatprep.subr.mxu0 0.0
      %360 = vmatpush1.msra.mxu0 %v271
      %361 = vmatprep.subr.mxu0 0.0
      %362 = vmatpush1.msra.mxu0 %v270
      %363 = vmatprep.subr.mxu0 0.0
      %364 = vmatpush1.msra.mxu0 %v269
      %365 = vmatprep.subr.mxu0 0.0
      %366 = vmatpush2.msra.mxu0 %v300
      %367 = vmatprep.subr.mxu0 0.0
      %368 = vmatpush2.msra.mxu0 %v299
      %369 = vmatprep.subr.mxu0 0.0
      %370 = vmatpush2.msra.mxu0 %v298
      %371 = vmatprep.subr.mxu0 0.0
      %372 = vmatpush2.msra.mxu0 %v297
      %373 = vmatprep.subr.mxu0 0.0
      %374 = vmatpush2.msra.mxu0 %v296
      %375 = vmatprep.subr.mxu0 0.0
      %376 = vmatpush2.msra.mxu0 %v295
      %377 = vmatprep.subr.mxu0 0.0
      %378 = vmatpush2.msra.mxu0 %v294
      %379 = vmatprep.subr.mxu0 0.0
      %380 = vmatpush2.msra.mxu0 %v293
      %381 = vmatprep.subr.mxu0 0.0
      %382 = vmatpush2.msra.mxu0 %v292
      %383 = vmatprep.subr.mxu0 0.0
      %384 = vmatpush2.msra.mxu0 %v291
      %385 = vmatprep.subr.mxu0 0.0
      %386 = vmatpush2.msra.mxu0 %v290
      %387 = vmatprep.subr.mxu0 0.0
      %388 = vmatpush2.msra.mxu0 %v289
      %389 = vmatprep.subr.mxu0 0.0
      %390 = vmatpush2.msra.mxu0 %v288
      %391 = vmatprep.subr.mxu0 0.0
      %392 = vmatpush2.msra.mxu0 %v287
      %393 = vmatprep.subr.mxu0 0.0
      %394 = vmatpush2.msra.mxu0 %v286
      %395 = vmatprep.subr.mxu0 0.0
      %396 = vmatpush2.msra.mxu0 %v285
      %397 = vmatprep.mubr.f32.mxu0 %v266
      %398 = vmatmul.mubr.f32.gmra.mxu0 %v265
      %v399 = vpop.f32.mrf.mxu0
      %v400 = vadd.f32 0.0, %v399
      %v401 = vpop.f32.mrf.mxu0
      %402 = vdwg.mxu0
      %403 = vmatprep.subr.mxu0 0.0
      %404 = vmatpush1.msra.mxu0 %v316
      %405 = vmatprep.subr.mxu0 0.0
      %406 = vmatpush1.msra.mxu0 %v315
      %407 = vmatprep.subr.mxu0 0.0
      %408 = vmatpush1.msra.mxu0 %v314
      %409 = vmatprep.subr.mxu0 0.0
      %410 = vmatpush1.msra.mxu0 %v313
      %411 = vmatprep.subr.mxu0 0.0
      %412 = vmatpush1.msra.mxu0 %v312
      %413 = vmatprep.subr.mxu0 0.0
      %414 = vmatpush1.msra.mxu0 %v311
      %415 = vmatprep.subr.mxu0 0.0
      %416 = vmatpush1.msra.mxu0 %v310
      %417 = vmatprep.subr.mxu0 0.0
      %418 = vmatpush1.msra.mxu0 %v309
      %419 = vmatprep.subr.mxu0 0.0
      %420 = vmatpush1.msra.mxu0 %v308
      %421 = vmatprep.subr.mxu0 0.0
      %422 = vmatpush1.msra.mxu0 %v307
      %423 = vmatprep.subr.mxu0 0.0
      %424 = vmatpush1.msra.mxu0 %v306
      %425 = vmatprep.subr.mxu0 0.0
      %426 = vmatpush1.msra.mxu0 %v305
      %427 = vmatprep.subr.mxu0 0.0
      %428 = vmatpush1.msra.mxu0 %v304
      %429 = vmatprep.subr.mxu0 0.0
      %430 = vmatpush1.msra.mxu0 %v303
      %431 = vmatprep.subr.mxu0 0.0
      %432 = vmatpush1.msra.mxu0 %v302
      %433 = vmatprep.subr.mxu0 0.0
      %434 = vmatpush1.msra.mxu0 %v301
      %435 = vmatprep.subr.mxu0 0.0
      %436 = vmatpush2.msra.mxu0 %v332
      %437 = vmatprep.subr.mxu0 0.0
      %438 = vmatpush2.msra.mxu0 %v331
      %439 = vmatprep.subr.mxu0 0.0
      %440 = vmatpush2.msra.mxu0 %v330
      %441 = vmatprep.subr.mxu0 0.0
      %442 = vmatpush2.msra.mxu0 %v329
      %443 = vmatprep.subr.mxu0 0.0
      %444 = vmatpush2.msra.mxu0 %v328
      %445 = vmatprep.subr.mxu0 0.0
      %446 = vmatpush2.msra.mxu0 %v327
      %447 = vmatprep.subr.mxu0 0.0
      %448 = vmatpush2.msra.mxu0 %v326
      %449 = vmatprep.subr.mxu0 0.0
      %450 = vmatpush2.msra.mxu0 %v325
      %451 = vmatprep.subr.mxu0 0.0
      %452 = vmatpush2.msra.mxu0 %v324
      %453 = vmatprep.subr.mxu0 0.0
      %454 = vmatpush2.msra.mxu0 %v323
      %455 = vmatprep.subr.mxu0 0.0
      %456 = vmatpush2.msra.mxu0 %v322
      %457 = vmatprep.subr.mxu0 0.0
      %458 = vmatpush2.msra.mxu0 %v321
      %459 = vmatprep.subr.mxu0 0.0
      %460 = vmatpush2.msra.mxu0 %v320
      %461 = vmatprep.subr.mxu0 0.0
      %462 = vmatpush2.msra.mxu0 %v319
      %463 = vmatprep.subr.mxu0 0.0
      %464 = vmatpush2.msra.mxu0 %v318
      %465 = vmatprep.subr.mxu0 0.0
      %466 = vmatpush2.msra.mxu0 %v317
      %467 = vmatprep.mubr.f32.mxu0 %v268
      %468 = vmatmul.mubr.f32.gmra.mxu0 %v267
      %v469 = vpop.f32.mrf.mxu0
      %v470 = vadd.f32 %v400, %v469
      %v471 = vpop.f32.mrf.mxu0
      %472 = vdwg.mxu0
      %v473 = vadd.f32 %v264, %v470
      %474 = vst [vmem:[#allocation2] sm:$0xff] %v473
      %p475 = scmp.eq.s32.totalorder %s21, 1
      // Predicated region
      $region37: #{discriminator_forward.15} parent=31 // pred_check
        %p476 = pneg %p475
      $region38: #{discriminator_forward.15} parent=31 // pred_check_branch
        %478 = sbr.rel (%p476) target = $region40
      $region39: #{discriminator_forward.15} parent=31 // pred_region
        %v479 = vld [vmem:[#allocation2] sm:$0xff]
        %v480 = vld [vmem:[%s251] sm:$0x1]
        %v482 = vlaneseq
        %v483 = vshrl.u32 %v482, 7
        %v484 = vsub.s32 0, %v483
        %v485 = vrot.slane %v480, %v484
        %v487 = vadd.f32 %v479, %v485
        %488 = vst [vmem:[%s258] sm:$0xff] %v487
      $region40: #{discriminator_forward.15} parent=31 // pred_fallthru
        _
      %p489 = scmp.lt.s32.totalorder %s19, 0
      %s490 = scalar_select %p489, %s19, 0
      %p491 = scmp.lt.s32.totalorder %s20, 0
      %s492 = scalar_select %p491, %s20, 0
      %s493 = sadd.s32 %s492, %s490
      %s494 = smul.addr %s493, 8
      %s495 = scalar_lea.vmem %s3, %s494
      // Predicated region
      $region41: #{discriminator_forward.15} parent=31 // pred_check
        %p496 = pneg %p135
      $region42: #{discriminator_forward.15} parent=31 // pred_check_branch
        %498 = sbr.rel (%p496) target = $region44
      $region43: #{discriminator_forward.15} parent=31 // pred_region
        _
      $region44: #{discriminator_forward.15} parent=31 // pred_fallthru
        _
      // Predicated region
      $region45: #{discriminator_forward.15} parent=31 // pred_check
        %p499 = pneg %p135
      $region46: #{discriminator_forward.15} parent=31 // pred_check_branch
        %501 = sbr.rel (%p499) target = $region48
      $region47: #{discriminator_forward.15} parent=31 // pred_region
        %p502 = scmp.lt.s32.totalorder %s19, 0
        %s503 = scalar_select %p502, %s19, 0
        %p504 = scmp.lt.s32.totalorder %s20, 0
        %s505 = scalar_select %p504, %s20, 0
        %s506 = sadd.s32 %s505, %s503
        %s507 = smul.addr %s506, 8
        %s508 = scalar_lea.vmem %s3, %s507
      $region48: #{discriminator_forward.15} parent=31 // pred_fallthru
        _
    $region32: #{discriminator_forward.15} parent=5 // pred_fallthru
      _
    %p509 = scmp.le.s32.totalorder 2, %s9
    // Predicated region
    $region49: #{discriminator_forward.15} parent=5 // pred_check
      %p510 = pneg %p509
    $region50: #{discriminator_forward.15} parent=5 // pred_check_branch
      %512 = sbr.rel (%p510) target = $region52
    $region51: #{discriminator_forward.15} parent=5 // pred_region
      %s513 = ssub.s32 %s9, 2
    $region52: #{discriminator_forward.15} parent=5 // pred_fallthru
      _
  $region6: #{discriminator_forward.15} parent=0 // loop_footer
    %s13 = sadd.s32 1, %s9
  $region7: #{discriminator_forward.15} parent=0 // loop_footer_branch
    %8 = sbr.rel target = $region3
  $region8: #{discriminator_forward.15} parent=0 // loop_exit
    _

</llo_original>
